<compile_context>
chip_gen: v7x
topology: tpu7x:2x2x1
jax: 0.10.0
libtpu: 0.0.40
codegen_flags: <defaults>
</compile_context>

<pallas_src>
import jax
import jax.numpy as jnp
from jax.experimental import pallas as pl
from jax.experimental.pallas import tpu as pltpu

BN_EPS = 1e-5
NEG_SLOPE = 0.2


def _round_up(x, m):
    return (x + m - 1) // m * m


def _vmem_budget_bytes():
    # Scoped VMEM request: well under physical capacity on every generation
    # (v7x: 64 MiB/TC -> ~48 MiB; v5e/v6e: 128 MiB -> ~96 MiB).
    try:
        cap = pltpu.get_tpu_info().vmem_capacity_bytes
    except Exception:
        cap = 64 * 1024 * 1024
    return int(min(cap * 3 // 4, 112 * 1024 * 1024))


def cnn_block_forward(x_nchw, w_oihw, gamma, beta, stride=2, pad=1):
    """Forward pass equivalent to the PyTorch CNNBlock (training-mode BN). NCHW in/out."""
    N, Cin, H, W = x_nchw.shape
    Cout, Cin_w, KH, KW = w_oihw.shape
    assert Cin == Cin_w
    assert stride == 2 and pad == 1 and KH == 4 and KW == 4
    # TODO(synk): odd spatial sizes need unequal per-phase extents.
    assert H % 2 == 0 and W % 2 == 0

    Hout = (H + 2 * pad - KH) // stride + 1
    Wout = (W + 2 * pad - KW) // stride + 1
    Hq, Wq = Hout + 1, Wout + 1           # stride-2 phase-grid extents
    Mgrid = N * Hq * Wq                    # rows on the (slightly padded) output grid
    M_true = N * Hout * Wout               # true number of output pixels (for BN stats)
    Coutp = _round_up(Cout, 128)           # lane-dense output channels

    vmem_budget = _vmem_budget_bytes()

    # Row tiling (powers of two so the halo tile divides the main tile).
    HB = max(8, pl.next_power_of_2(Wq + 1))          # halo rows (max tap offset = Wq+1)
    tm_target = 1024 if vmem_budget >= (96 << 20) else 512
    TM = max(HB, min(tm_target, pl.next_power_of_2(max(Mgrid, 8))))

    def _ws(tm):  # crude double-buffered working-set estimate for pass 1
        return (2 * 4 * tm * Cin * 2 + 2 * 4 * HB * Cin * 2
                + 2 * KH * KW * Cin * Coutp * 2 + 2 * tm * Coutp * 2 + tm * Coutp * 4)

    while TM > HB and _ws(TM) > (vmem_budget * 6) // 10:
        TM //= 2
    Mp = _round_up(Mgrid, TM)
    MT = Mp // TM

    # ---------------- host-side layout glue (no im2col materialization) ----------------
    x = jnp.transpose(x_nchw, (0, 2, 3, 1)).astype(jnp.bfloat16)                    # NHWC bf16
    xp = jnp.pad(x, ((0, 0), (pad, pad), (pad, pad), (0, 0)), mode="reflect")       # reflect pad
    # Phase split: phase p = 2*(kh%2)+(kw%2) holds xp[:, (kh%2)::2, (kw%2)::2, :].
    phases = jnp.stack([xp[:, ph::2, pw::2, :] for ph in (0, 1) for pw in (0, 1)], axis=0)
    phase_flat = phases.reshape(4, Mgrid, Cin)
    phase_flat = jnp.pad(phase_flat, ((0, 0), (0, Mp + TM - Mgrid), (0, 0)))        # zero tail

    # Weights: (Cout,Cin,KH,KW) -> (KH*KW, Cin, Coutp) bf16, tap index t = kh*KW + kw.
    wt = jnp.transpose(w_oihw, (2, 3, 1, 0)).reshape(KH * KW, Cin, Cout).astype(jnp.bfloat16)
    wt = jnp.pad(wt, ((0, 0), (0, 0), (0, Coutp - Cout)))

    # Validity mask on the padded output grid (rows with h<Hout, w<Wout and inside Mgrid).
    rows = jnp.arange(Mp)
    valid_rows = (rows < Mgrid) & ((rows % Wq) < Wout) & (((rows // Wq) % Hq) < Hout)
    vmask = valid_rows.astype(jnp.float32).reshape(Mp, 1)

    cparams = pltpu.CompilerParams(
        dimension_semantics=("parallel",),      # independent M tiles (megacore-friendly)
        vmem_limit_bytes=vmem_budget,
    )

    # ---------------- pass 1: fused im2col conv (16 tap matmuls) + BN partials ----------------
    def conv_stats_kernel(xm_ref, xh_ref, w_ref, vm_ref, conv_ref, s_ref, m2_ref):
        # Concatenate main tile + halo once per phase: rows [i*TM, i*TM + TM + HB).
        xcat = [jnp.concatenate([xm_ref[p], xh_ref[p]], axis=0) for p in range(4)]
        acc = jnp.zeros((TM, Coutp), jnp.float32)
        for kh in range(KH):
            for kw in range(KW):
                p = 2 * (kh % 2) + (kw % 2)
                off = (kh // 2) * Wq + (kw // 2)          # static row shift in {0,1,Wq,Wq+1}
                t = kh * KW + kw
                xt = xcat[p][off:off + TM, :]             # (TM, Cin) bf16
                acc += jnp.dot(xt, w_ref[t], preferred_element_type=jnp.float32)
        conv_ref[...] = acc.astype(conv_ref.dtype)        # bf16 intermediate (halved HBM traffic)

        # Masked per-tile *centered* statistics (merged on host; no sumsq cancellation).
        valid = vm_ref[...]                               # (TM, 1) f32 {0,1}
        n_t = jnp.sum(valid, axis=0, keepdims=True)       # (1, 1)
        s = jnp.sum(acc * valid, axis=0, keepdims=True)   # (1, Coutp)
        mean_t = s / jnp.maximum(n_t, 1.0)
        cen = (acc - mean_t) * valid
        m2 = jnp.sum(cen * cen, axis=0, keepdims=True)    # (1, Coutp)
        # Broadcast across 8 sublanes so the stats stores are full, unmasked tiles.
        s_ref[...] = jnp.broadcast_to(s, s_ref.shape)
        m2_ref[...] = jnp.broadcast_to(m2, m2_ref.shape)

    conv, psum, pm2 = pl.pallas_call(
        conv_stats_kernel,
        grid=(MT,),
        out_shape=(
            jax.ShapeDtypeStruct((Mp, Coutp), jnp.bfloat16),      # conv intermediate (bf16)
            jax.ShapeDtypeStruct((MT * 8, Coutp), jnp.float32),   # per-tile sums
            jax.ShapeDtypeStruct((MT * 8, Coutp), jnp.float32),   # per-tile centered M2
        ),
        in_specs=[
            pl.BlockSpec((4, TM, Cin), lambda i: (0, i, 0)),                       # phase main
            pl.BlockSpec((4, HB, Cin), lambda i: (0, (i + 1) * (TM // HB), 0)),    # phase halo
            pl.BlockSpec((KH * KW, Cin, Coutp), lambda i: (0, 0, 0)),              # weights
            pl.BlockSpec((TM, 1), lambda i: (i, 0)),                               # row mask
        ],
        out_specs=(
            pl.BlockSpec((TM, Coutp), lambda i: (i, 0)),
            pl.BlockSpec((8, Coutp), lambda i: (i, 0)),
            pl.BlockSpec((8, Coutp), lambda i: (i, 0)),
        ),
        compiler_params=cparams,
    )(phase_flat, phase_flat, wt, vmask)

    # ---------------- fold BN (batch stats, biased var) into scale/shift ----------------
    n_t = valid_rows.reshape(MT, TM).sum(axis=1).astype(jnp.float32)      # (MT,)
    sum_t = psum.reshape(MT, 8, Coutp)[:, 0, :]                           # (MT, Coutp)
    m2_t = pm2.reshape(MT, 8, Coutp)[:, 0, :]
    mean_t = sum_t / jnp.maximum(n_t, 1.0)[:, None]
    mean = jnp.sum(sum_t, axis=0) / M_true
    m2 = jnp.sum(m2_t, axis=0) + jnp.sum(n_t[:, None] * (mean_t - mean[None, :]) ** 2, axis=0)
    var = m2 / M_true                                                     # biased (PyTorch BN train)
    inv_std = jax.lax.rsqrt(var + BN_EPS)
    gamma_p = jnp.pad(gamma.astype(jnp.float32), (0, Coutp - Cout))
    beta_p = jnp.pad(beta.astype(jnp.float32), (0, Coutp - Cout))
    scale = (gamma_p * inv_std).reshape(1, Coutp)
    shift = (beta_p - mean * gamma_p * inv_std).reshape(1, Coutp)

    # ---------------- pass 2: normalize + LeakyReLU (own, larger row tile) ----------------
    g = 8
    while MT % g:
        g //= 2
    TM2 = TM * g
    while TM2 > TM and 2 * TM2 * Coutp * 6 > vmem_budget:
        TM2 //= 2

    def bn_lrelu_kernel(conv_ref, scale_ref, shift_ref, out_ref):
        y = conv_ref[...].astype(jnp.float32) * scale_ref[...] + shift_ref[...]
        out_ref[...] = jnp.where(y >= 0, y, NEG_SLOPE * y)

    out_pad = pl.pallas_call(
        bn_lrelu_kernel,
        grid=(Mp // TM2,),
        out_shape=jax.ShapeDtypeStruct((Mp, Coutp), jnp.float32),
        in_specs=[
            pl.BlockSpec((TM2, Coutp), lambda i: (i, 0)),
            pl.BlockSpec((1, Coutp), lambda i: (0, 0)),
            pl.BlockSpec((1, Coutp), lambda i: (0, 0)),
        ],
        out_specs=pl.BlockSpec((TM2, Coutp), lambda i: (i, 0)),
        compiler_params=cparams,
    )(conv, scale, shift)

    # Slice padded grid rows/channels, back to module-facing NCHW.
    out = out_pad[:Mgrid].reshape(N, Hq, Wq, Coutp)[:, :Hout, :Wout, :Cout]
    return jnp.transpose(out, (0, 3, 1, 2))


if __name__ == "__main__":
    key = jax.random.PRNGKey(0)
    k_x, k_w, k_g, k_b = jax.random.split(key, 4)

    # Small shapes consistent with the module: N=2, Cin=4, H=W=16, Cout=8.
    N, Cin, H, W = 2, 4, 16, 16
    Cout, KH, KW, stride = 8, 4, 4, 2

    x = jax.random.normal(k_x, (N, Cin, H, W), dtype=jnp.float32)

    fan_in = Cin * KH * KW
    bound = 1.0 / (fan_in ** 0.5)
    w = jax.random.uniform(k_w, (Cout, Cin, KH, KW), dtype=jnp.float32,
                           minval=-bound, maxval=bound)
    gamma = 1.0 + 0.1 * jax.random.normal(k_g, (Cout,), dtype=jnp.float32)
    beta = 0.1 * jax.random.normal(k_b, (Cout,), dtype=jnp.float32)

    y = cnn_block_forward(x, w, gamma, beta, stride=stride)
    jax.block_until_ready(y)
    assert y.shape == (N, Cout, H // 2, W // 2), y.shape
    assert bool(jnp.all(jnp.isfinite(y)))
    print("KERNEL_OK")
</pallas_src>

<mosaic_0001>
module attributes {stable_mosaic.version = 11 : i64} {
  func.func @conv_stats_kernel(%arg0: i32, %arg1: memref<4x256x4xbf16, #tpu.memory_space<vmem>>, %arg2: memref<4x16x4xbf16, #tpu.memory_space<vmem>>, %arg3: memref<16x4x128xbf16, #tpu.memory_space<vmem>>, %arg4: memref<256x1xf32, #tpu.memory_space<vmem>>, %arg5: memref<256x128xbf16, #tpu.memory_space<vmem>>, %arg6: memref<8x128xf32, #tpu.memory_space<vmem>>, %arg7: memref<8x128xf32, #tpu.memory_space<vmem>>) attributes {dimension_semantics = [#tpu.dimension_semantics<parallel>], iteration_bounds = array<i64: 1>, scalar_prefetch = 0 : i64, scratch_operands = 0 : i64, tpu.core_type = #tpu.core_type<tc>, window_params = [{transform_indices = @transform_0, window_bounds = array<i64: 4, 256, 4>}, {transform_indices = @transform_1, window_bounds = array<i64: 4, 16, 4>}, {pipeline_mode = #tpu.pipeline_mode<synchronous>, transform_indices = @transform_2, window_bounds = array<i64: 16, 4, 128>}, {transform_indices = @transform_3, window_bounds = array<i64: 256, 1>}, {transform_indices = @transform_4, window_bounds = array<i64: 256, 128>}, {transform_indices = @transform_5, window_bounds = array<i64: 8, 128>}, {transform_indices = @transform_6, window_bounds = array<i64: 8, 128>}]} {
    %c0 = arith.constant 0 : index
    %c0_0 = arith.constant 0 : index
    %c0_1 = arith.constant 0 : index
    %0 = vector.load %arg1[%c0, %c0_0, %c0_1] : memref<4x256x4xbf16, #tpu.memory_space<vmem>>, vector<1x256x4xbf16>
    %1 = vector.shape_cast %0 : vector<1x256x4xbf16> to vector<256x4xbf16>
    %c0_2 = arith.constant 0 : index
    %c0_3 = arith.constant 0 : index
    %c0_4 = arith.constant 0 : index
    %2 = vector.load %arg2[%c0_2, %c0_3, %c0_4] : memref<4x16x4xbf16, #tpu.memory_space<vmem>>, vector<1x16x4xbf16>
    %3 = vector.shape_cast %2 : vector<1x16x4xbf16> to vector<16x4xbf16>
    %4 = tpu.concatenate %1, %3 in 0 : vector<256x4xbf16>, vector<16x4xbf16> -> vector<272x4xbf16>
    %c1 = arith.constant 1 : index
    %c0_5 = arith.constant 0 : index
    %c0_6 = arith.constant 0 : index
    %5 = vector.load %arg1[%c1, %c0_5, %c0_6] : memref<4x256x4xbf16, #tpu.memory_space<vmem>>, vector<1x256x4xbf16>
    %6 = vector.shape_cast %5 : vector<1x256x4xbf16> to vector<256x4xbf16>
    %c1_7 = arith.constant 1 : index
    %c0_8 = arith.constant 0 : index
    %c0_9 = arith.constant 0 : index
    %7 = vector.load %arg2[%c1_7, %c0_8, %c0_9] : memref<4x16x4xbf16, #tpu.memory_space<vmem>>, vector<1x16x4xbf16>
    %8 = vector.shape_cast %7 : vector<1x16x4xbf16> to vector<16x4xbf16>
    %9 = tpu.concatenate %6, %8 in 0 : vector<256x4xbf16>, vector<16x4xbf16> -> vector<272x4xbf16>
    %c2 = arith.constant 2 : index
    %c0_10 = arith.constant 0 : index
    %c0_11 = arith.constant 0 : index
    %10 = vector.load %arg1[%c2, %c0_10, %c0_11] : memref<4x256x4xbf16, #tpu.memory_space<vmem>>, vector<1x256x4xbf16>
    %11 = vector.shape_cast %10 : vector<1x256x4xbf16> to vector<256x4xbf16>
    %c2_12 = arith.constant 2 : index
    %c0_13 = arith.constant 0 : index
    %c0_14 = arith.constant 0 : index
    %12 = vector.load %arg2[%c2_12, %c0_13, %c0_14] : memref<4x16x4xbf16, #tpu.memory_space<vmem>>, vector<1x16x4xbf16>
    %13 = vector.shape_cast %12 : vector<1x16x4xbf16> to vector<16x4xbf16>
    %14 = tpu.concatenate %11, %13 in 0 : vector<256x4xbf16>, vector<16x4xbf16> -> vector<272x4xbf16>
    %c3 = arith.constant 3 : index
    %c0_15 = arith.constant 0 : index
    %c0_16 = arith.constant 0 : index
    %15 = vector.load %arg1[%c3, %c0_15, %c0_16] : memref<4x256x4xbf16, #tpu.memory_space<vmem>>, vector<1x256x4xbf16>
    %16 = vector.shape_cast %15 : vector<1x256x4xbf16> to vector<256x4xbf16>
    %c3_17 = arith.constant 3 : index
    %c0_18 = arith.constant 0 : index
    %c0_19 = arith.constant 0 : index
    %17 = vector.load %arg2[%c3_17, %c0_18, %c0_19] : memref<4x16x4xbf16, #tpu.memory_space<vmem>>, vector<1x16x4xbf16>
    %18 = vector.shape_cast %17 : vector<1x16x4xbf16> to vector<16x4xbf16>
    %19 = tpu.concatenate %16, %18 in 0 : vector<256x4xbf16>, vector<16x4xbf16> -> vector<272x4xbf16>
    %cst = arith.constant 0.000000e+00 : f32
    %20 = vector.broadcast %cst : f32 to vector<256x128xf32>
    %21 = vector.extract_strided_slice %4 {offsets = [0, 0], sizes = [256, 4], strides = [1, 1]} : vector<272x4xbf16> to vector<256x4xbf16>
    %c0_20 = arith.constant 0 : index
    %c0_21 = arith.constant 0 : index
    %c0_22 = arith.constant 0 : index
    %22 = vector.load %arg3[%c0_20, %c0_21, %c0_22] : memref<16x4x128xbf16, #tpu.memory_space<vmem>>, vector<1x4x128xbf16>
    %23 = vector.shape_cast %22 : vector<1x4x128xbf16> to vector<4x128xbf16>
    %cst_23 = arith.constant dense<0.000000e+00> : vector<256x128xf32>
    %24 = tpu.matmul %21, %23, %cst_23 {dimension_numbers = #tpu.dot_dimension_numbers<[1], [0], [0], [1], [0, 0, 1, 1], [], []>} : vector<256x4xbf16>, vector<4x128xbf16>, vector<256x128xf32> -> vector<256x128xf32>
    %25 = arith.addf %20, %24 : vector<256x128xf32>
    %26 = vector.extract_strided_slice %9 {offsets = [0, 0], sizes = [256, 4], strides = [1, 1]} : vector<272x4xbf16> to vector<256x4xbf16>
    %c1_24 = arith.constant 1 : index
    %c0_25 = arith.constant 0 : index
    %c0_26 = arith.constant 0 : index
    %27 = vector.load %arg3[%c1_24, %c0_25, %c0_26] : memref<16x4x128xbf16, #tpu.memory_space<vmem>>, vector<1x4x128xbf16>
    %28 = vector.shape_cast %27 : vector<1x4x128xbf16> to vector<4x128xbf16>
    %cst_27 = arith.constant dense<0.000000e+00> : vector<256x128xf32>
    %29 = tpu.matmul %26, %28, %cst_27 {dimension_numbers = #tpu.dot_dimension_numbers<[1], [0], [0], [1], [0, 0, 1, 1], [], []>} : vector<256x4xbf16>, vector<4x128xbf16>, vector<256x128xf32> -> vector<256x128xf32>
    %30 = arith.addf %25, %29 : vector<256x128xf32>
    %31 = vector.extract_strided_slice %4 {offsets = [1, 0], sizes = [256, 4], strides = [1, 1]} : vector<272x4xbf16> to vector<256x4xbf16>
    %c2_28 = arith.constant 2 : index
    %c0_29 = arith.constant 0 : index
    %c0_30 = arith.constant 0 : index
    %32 = vector.load %arg3[%c2_28, %c0_29, %c0_30] : memref<16x4x128xbf16, #tpu.memory_space<vmem>>, vector<1x4x128xbf16>
    %33 = vector.shape_cast %32 : vector<1x4x128xbf16> to vector<4x128xbf16>
    %cst_31 = arith.constant dense<0.000000e+00> : vector<256x128xf32>
    %34 = tpu.matmul %31, %33, %cst_31 {dimension_numbers = #tpu.dot_dimension_numbers<[1], [0], [0], [1], [0, 0, 1, 1], [], []>} : vector<256x4xbf16>, vector<4x128xbf16>, vector<256x128xf32> -> vector<256x128xf32>
    %35 = arith.addf %30, %34 : vector<256x128xf32>
    %36 = vector.extract_strided_slice %9 {offsets = [1, 0], sizes = [256, 4], strides = [1, 1]} : vector<272x4xbf16> to vector<256x4xbf16>
    %c3_32 = arith.constant 3 : index
    %c0_33 = arith.constant 0 : index
    %c0_34 = arith.constant 0 : index
    %37 = vector.load %arg3[%c3_32, %c0_33, %c0_34] : memref<16x4x128xbf16, #tpu.memory_space<vmem>>, vector<1x4x128xbf16>
    %38 = vector.shape_cast %37 : vector<1x4x128xbf16> to vector<4x128xbf16>
    %cst_35 = arith.constant dense<0.000000e+00> : vector<256x128xf32>
    %39 = tpu.matmul %36, %38, %cst_35 {dimension_numbers = #tpu.dot_dimension_numbers<[1], [0], [0], [1], [0, 0, 1, 1], [], []>} : vector<256x4xbf16>, vector<4x128xbf16>, vector<256x128xf32> -> vector<256x128xf32>
    %40 = arith.addf %35, %39 : vector<256x128xf32>
    %41 = vector.extract_strided_slice %14 {offsets = [0, 0], sizes = [256, 4], strides = [1, 1]} : vector<272x4xbf16> to vector<256x4xbf16>
    %c4 = arith.constant 4 : index
    %c0_36 = arith.constant 0 : index
    %c0_37 = arith.constant 0 : index
    %42 = vector.load %arg3[%c4, %c0_36, %c0_37] : memref<16x4x128xbf16, #tpu.memory_space<vmem>>, vector<1x4x128xbf16>
    %43 = vector.shape_cast %42 : vector<1x4x128xbf16> to vector<4x128xbf16>
    %cst_38 = arith.constant dense<0.000000e+00> : vector<256x128xf32>
    %44 = tpu.matmul %41, %43, %cst_38 {dimension_numbers = #tpu.dot_dimension_numbers<[1], [0], [0], [1], [0, 0, 1, 1], [], []>} : vector<256x4xbf16>, vector<4x128xbf16>, vector<256x128xf32> -> vector<256x128xf32>
    %45 = arith.addf %40, %44 : vector<256x128xf32>
    %46 = vector.extract_strided_slice %19 {offsets = [0, 0], sizes = [256, 4], strides = [1, 1]} : vector<272x4xbf16> to vector<256x4xbf16>
    %c5 = arith.constant 5 : index
    %c0_39 = arith.constant 0 : index
    %c0_40 = arith.constant 0 : index
    %47 = vector.load %arg3[%c5, %c0_39, %c0_40] : memref<16x4x128xbf16, #tpu.memory_space<vmem>>, vector<1x4x128xbf16>
    %48 = vector.shape_cast %47 : vector<1x4x128xbf16> to vector<4x128xbf16>
    %cst_41 = arith.constant dense<0.000000e+00> : vector<256x128xf32>
    %49 = tpu.matmul %46, %48, %cst_41 {dimension_numbers = #tpu.dot_dimension_numbers<[1], [0], [0], [1], [0, 0, 1, 1], [], []>} : vector<256x4xbf16>, vector<4x128xbf16>, vector<256x128xf32> -> vector<256x128xf32>
    %50 = arith.addf %45, %49 : vector<256x128xf32>
    %51 = vector.extract_strided_slice %14 {offsets = [1, 0], sizes = [256, 4], strides = [1, 1]} : vector<272x4xbf16> to vector<256x4xbf16>
    %c6 = arith.constant 6 : index
    %c0_42 = arith.constant 0 : index
    %c0_43 = arith.constant 0 : index
    %52 = vector.load %arg3[%c6, %c0_42, %c0_43] : memref<16x4x128xbf16, #tpu.memory_space<vmem>>, vector<1x4x128xbf16>
    %53 = vector.shape_cast %52 : vector<1x4x128xbf16> to vector<4x128xbf16>
    %cst_44 = arith.constant dense<0.000000e+00> : vector<256x128xf32>
    %54 = tpu.matmul %51, %53, %cst_44 {dimension_numbers = #tpu.dot_dimension_numbers<[1], [0], [0], [1], [0, 0, 1, 1], [], []>} : vector<256x4xbf16>, vector<4x128xbf16>, vector<256x128xf32> -> vector<256x128xf32>
    %55 = arith.addf %50, %54 : vector<256x128xf32>
    %56 = vector.extract_strided_slice %19 {offsets = [1, 0], sizes = [256, 4], strides = [1, 1]} : vector<272x4xbf16> to vector<256x4xbf16>
    %c7 = arith.constant 7 : index
    %c0_45 = arith.constant 0 : index
    %c0_46 = arith.constant 0 : index
    %57 = vector.load %arg3[%c7, %c0_45, %c0_46] : memref<16x4x128xbf16, #tpu.memory_space<vmem>>, vector<1x4x128xbf16>
    %58 = vector.shape_cast %57 : vector<1x4x128xbf16> to vector<4x128xbf16>
    %cst_47 = arith.constant dense<0.000000e+00> : vector<256x128xf32>
    %59 = tpu.matmul %56, %58, %cst_47 {dimension_numbers = #tpu.dot_dimension_numbers<[1], [0], [0], [1], [0, 0, 1, 1], [], []>} : vector<256x4xbf16>, vector<4x128xbf16>, vector<256x128xf32> -> vector<256x128xf32>
    %60 = arith.addf %55, %59 : vector<256x128xf32>
    %61 = vector.extract_strided_slice %4 {offsets = [9, 0], sizes = [256, 4], strides = [1, 1]} : vector<272x4xbf16> to vector<256x4xbf16>
    %c8 = arith.constant 8 : index
    %c0_48 = arith.constant 0 : index
    %c0_49 = arith.constant 0 : index
    %62 = vector.load %arg3[%c8, %c0_48, %c0_49] : memref<16x4x128xbf16, #tpu.memory_space<vmem>>, vector<1x4x128xbf16>
    %63 = vector.shape_cast %62 : vector<1x4x128xbf16> to vector<4x128xbf16>
    %cst_50 = arith.constant dense<0.000000e+00> : vector<256x128xf32>
    %64 = tpu.matmul %61, %63, %cst_50 {dimension_numbers = #tpu.dot_dimension_numbers<[1], [0], [0], [1], [0, 0, 1, 1], [], []>} : vector<256x4xbf16>, vector<4x128xbf16>, vector<256x128xf32> -> vector<256x128xf32>
    %65 = arith.addf %60, %64 : vector<256x128xf32>
    %66 = vector.extract_strided_slice %9 {offsets = [9, 0], sizes = [256, 4], strides = [1, 1]} : vector<272x4xbf16> to vector<256x4xbf16>
    %c9 = arith.constant 9 : index
    %c0_51 = arith.constant 0 : index
    %c0_52 = arith.constant 0 : index
    %67 = vector.load %arg3[%c9, %c0_51, %c0_52] : memref<16x4x128xbf16, #tpu.memory_space<vmem>>, vector<1x4x128xbf16>
    %68 = vector.shape_cast %67 : vector<1x4x128xbf16> to vector<4x128xbf16>
    %cst_53 = arith.constant dense<0.000000e+00> : vector<256x128xf32>
    %69 = tpu.matmul %66, %68, %cst_53 {dimension_numbers = #tpu.dot_dimension_numbers<[1], [0], [0], [1], [0, 0, 1, 1], [], []>} : vector<256x4xbf16>, vector<4x128xbf16>, vector<256x128xf32> -> vector<256x128xf32>
    %70 = arith.addf %65, %69 : vector<256x128xf32>
    %71 = vector.extract_strided_slice %4 {offsets = [10, 0], sizes = [256, 4], strides = [1, 1]} : vector<272x4xbf16> to vector<256x4xbf16>
    %c10 = arith.constant 10 : index
    %c0_54 = arith.constant 0 : index
    %c0_55 = arith.constant 0 : index
    %72 = vector.load %arg3[%c10, %c0_54, %c0_55] : memref<16x4x128xbf16, #tpu.memory_space<vmem>>, vector<1x4x128xbf16>
    %73 = vector.shape_cast %72 : vector<1x4x128xbf16> to vector<4x128xbf16>
    %cst_56 = arith.constant dense<0.000000e+00> : vector<256x128xf32>
    %74 = tpu.matmul %71, %73, %cst_56 {dimension_numbers = #tpu.dot_dimension_numbers<[1], [0], [0], [1], [0, 0, 1, 1], [], []>} : vector<256x4xbf16>, vector<4x128xbf16>, vector<256x128xf32> -> vector<256x128xf32>
    %75 = arith.addf %70, %74 : vector<256x128xf32>
    %76 = vector.extract_strided_slice %9 {offsets = [10, 0], sizes = [256, 4], strides = [1, 1]} : vector<272x4xbf16> to vector<256x4xbf16>
    %c11 = arith.constant 11 : index
    %c0_57 = arith.constant 0 : index
    %c0_58 = arith.constant 0 : index
    %77 = vector.load %arg3[%c11, %c0_57, %c0_58] : memref<16x4x128xbf16, #tpu.memory_space<vmem>>, vector<1x4x128xbf16>
    %78 = vector.shape_cast %77 : vector<1x4x128xbf16> to vector<4x128xbf16>
    %cst_59 = arith.constant dense<0.000000e+00> : vector<256x128xf32>
    %79 = tpu.matmul %76, %78, %cst_59 {dimension_numbers = #tpu.dot_dimension_numbers<[1], [0], [0], [1], [0, 0, 1, 1], [], []>} : vector<256x4xbf16>, vector<4x128xbf16>, vector<256x128xf32> -> vector<256x128xf32>
    %80 = arith.addf %75, %79 : vector<256x128xf32>
    %81 = vector.extract_strided_slice %14 {offsets = [9, 0], sizes = [256, 4], strides = [1, 1]} : vector<272x4xbf16> to vector<256x4xbf16>
    %c12 = arith.constant 12 : index
    %c0_60 = arith.constant 0 : index
    %c0_61 = arith.constant 0 : index
    %82 = vector.load %arg3[%c12, %c0_60, %c0_61] : memref<16x4x128xbf16, #tpu.memory_space<vmem>>, vector<1x4x128xbf16>
    %83 = vector.shape_cast %82 : vector<1x4x128xbf16> to vector<4x128xbf16>
    %cst_62 = arith.constant dense<0.000000e+00> : vector<256x128xf32>
    %84 = tpu.matmul %81, %83, %cst_62 {dimension_numbers = #tpu.dot_dimension_numbers<[1], [0], [0], [1], [0, 0, 1, 1], [], []>} : vector<256x4xbf16>, vector<4x128xbf16>, vector<256x128xf32> -> vector<256x128xf32>
    %85 = arith.addf %80, %84 : vector<256x128xf32>
    %86 = vector.extract_strided_slice %19 {offsets = [9, 0], sizes = [256, 4], strides = [1, 1]} : vector<272x4xbf16> to vector<256x4xbf16>
    %c13 = arith.constant 13 : index
    %c0_63 = arith.constant 0 : index
    %c0_64 = arith.constant 0 : index
    %87 = vector.load %arg3[%c13, %c0_63, %c0_64] : memref<16x4x128xbf16, #tpu.memory_space<vmem>>, vector<1x4x128xbf16>
    %88 = vector.shape_cast %87 : vector<1x4x128xbf16> to vector<4x128xbf16>
    %cst_65 = arith.constant dense<0.000000e+00> : vector<256x128xf32>
    %89 = tpu.matmul %86, %88, %cst_65 {dimension_numbers = #tpu.dot_dimension_numbers<[1], [0], [0], [1], [0, 0, 1, 1], [], []>} : vector<256x4xbf16>, vector<4x128xbf16>, vector<256x128xf32> -> vector<256x128xf32>
    %90 = arith.addf %85, %89 : vector<256x128xf32>
    %91 = vector.extract_strided_slice %14 {offsets = [10, 0], sizes = [256, 4], strides = [1, 1]} : vector<272x4xbf16> to vector<256x4xbf16>
    %c14 = arith.constant 14 : index
    %c0_66 = arith.constant 0 : index
    %c0_67 = arith.constant 0 : index
    %92 = vector.load %arg3[%c14, %c0_66, %c0_67] : memref<16x4x128xbf16, #tpu.memory_space<vmem>>, vector<1x4x128xbf16>
    %93 = vector.shape_cast %92 : vector<1x4x128xbf16> to vector<4x128xbf16>
    %cst_68 = arith.constant dense<0.000000e+00> : vector<256x128xf32>
    %94 = tpu.matmul %91, %93, %cst_68 {dimension_numbers = #tpu.dot_dimension_numbers<[1], [0], [0], [1], [0, 0, 1, 1], [], []>} : vector<256x4xbf16>, vector<4x128xbf16>, vector<256x128xf32> -> vector<256x128xf32>
    %95 = arith.addf %90, %94 : vector<256x128xf32>
    %96 = vector.extract_strided_slice %19 {offsets = [10, 0], sizes = [256, 4], strides = [1, 1]} : vector<272x4xbf16> to vector<256x4xbf16>
    %c15 = arith.constant 15 : index
    %c0_69 = arith.constant 0 : index
    %c0_70 = arith.constant 0 : index
    %97 = vector.load %arg3[%c15, %c0_69, %c0_70] : memref<16x4x128xbf16, #tpu.memory_space<vmem>>, vector<1x4x128xbf16>
    %98 = vector.shape_cast %97 : vector<1x4x128xbf16> to vector<4x128xbf16>
    %cst_71 = arith.constant dense<0.000000e+00> : vector<256x128xf32>
    %99 = tpu.matmul %96, %98, %cst_71 {dimension_numbers = #tpu.dot_dimension_numbers<[1], [0], [0], [1], [0, 0, 1, 1], [], []>} : vector<256x4xbf16>, vector<4x128xbf16>, vector<256x128xf32> -> vector<256x128xf32>
    %100 = arith.addf %95, %99 : vector<256x128xf32>
    %101 = arith.truncf %100 : vector<256x128xf32> to vector<256x128xbf16>
    %c0_72 = arith.constant 0 : index
    %c0_73 = arith.constant 0 : index
    %102 = vector.load %arg5[%c0_72, %c0_73] : memref<256x128xbf16, #tpu.memory_space<vmem>>, vector<256x128xbf16>
    tpu.vector_store %arg5[%c0_72, %c0_73], %101 {strides = array<i32>} : memref<256x128xbf16, #tpu.memory_space<vmem>>, vector<256x128xbf16>,
    %c0_74 = arith.constant 0 : index
    %c0_75 = arith.constant 0 : index
    %103 = vector.load %arg4[%c0_74, %c0_75] : memref<256x1xf32, #tpu.memory_space<vmem>>, vector<256x1xf32>
    %cst_76 = arith.constant dense<0.000000e+00> : vector<1xf32>
    %104 = vector.multi_reduction <add>, %103, %cst_76 [0] : vector<256x1xf32> to vector<1xf32>
    %105 = vector.shape_cast %104 : vector<1xf32> to vector<1x1xf32>
    %106 = vector.broadcast %103 : vector<256x1xf32> to vector<256x128xf32>
    %107 = arith.mulf %100, %106 : vector<256x128xf32>
    %cst_77 = arith.constant dense<0.000000e+00> : vector<128xf32>
    %108 = vector.multi_reduction <add>, %107, %cst_77 [0] : vector<256x128xf32> to vector<128xf32>
    %109 = vector.shape_cast %108 : vector<128xf32> to vector<1x128xf32>
    %cst_78 = arith.constant 1.000000e+00 : f32
    %110 = vector.broadcast %cst_78 : f32 to vector<1x1xf32>
    %111 = arith.maximumf %105, %110 : vector<1x1xf32>
    %112 = vector.broadcast %111 : vector<1x1xf32> to vector<1x128xf32>
    %113 = arith.divf %109, %112 : vector<1x128xf32>
    %114 = vector.broadcast %113 : vector<1x128xf32> to vector<256x128xf32>
    %115 = arith.subf %100, %114 : vector<256x128xf32>
    %116 = vector.broadcast %103 : vector<256x1xf32> to vector<256x128xf32>
    %117 = arith.mulf %115, %116 : vector<256x128xf32>
    %118 = arith.mulf %117, %117 : vector<256x128xf32>
    %cst_79 = arith.constant dense<0.000000e+00> : vector<128xf32>
    %119 = vector.multi_reduction <add>, %118, %cst_79 [0] : vector<256x128xf32> to vector<128xf32>
    %120 = vector.shape_cast %119 : vector<128xf32> to vector<1x128xf32>
    %121 = vector.shape_cast %109 : vector<1x128xf32> to vector<1x128xf32>
    %122 = vector.broadcast %121 : vector<1x128xf32> to vector<8x128xf32>
    %c0_80 = arith.constant 0 : index
    %c0_81 = arith.constant 0 : index
    %123 = vector.load %arg6[%c0_80, %c0_81] : memref<8x128xf32, #tpu.memory_space<vmem>>, vector<8x128xf32>
    tpu.vector_store %arg6[%c0_80, %c0_81], %122 {strides = array<i32>} : memref<8x128xf32, #tpu.memory_space<vmem>>, vector<8x128xf32>,
    %124 = vector.shape_cast %120 : vector<1x128xf32> to vector<1x128xf32>
    %125 = vector.broadcast %124 : vector<1x128xf32> to vector<8x128xf32>
    %c0_82 = arith.constant 0 : index
    %c0_83 = arith.constant 0 : index
    %126 = vector.load %arg7[%c0_82, %c0_83] : memref<8x128xf32, #tpu.memory_space<vmem>>, vector<8x128xf32>
    tpu.vector_store %arg7[%c0_82, %c0_83], %125 {strides = array<i32>} : memref<8x128xf32, #tpu.memory_space<vmem>>, vector<8x128xf32>,
    return
  }
  func.func @transform_0(%arg0: i32) -> (i32, i32, i32) {
    %c0_i32 = arith.constant 0 : i32
    %c0_i32_0 = arith.constant 0 : i32
    %c0_i32_1 = arith.constant 0 : i32
    return %c0_i32, %arg0, %c0_i32_0 : i32, i32, i32
  }
  func.func @transform_1(%arg0: i32) -> (i32, i32, i32) {
    %c1_i32 = arith.constant 1 : i32
    %0 = arith.addi %arg0, %c1_i32 : i32
    %c16_i32 = arith.constant 16 : i32
    %1 = arith.muli %0, %c16_i32 : i32
    %c0_i32 = arith.constant 0 : i32
    %c0_i32_0 = arith.constant 0 : i32
    %c0_i32_1 = arith.constant 0 : i32
    return %c0_i32, %1, %c0_i32_0 : i32, i32, i32
  }
  func.func @transform_2(%arg0: i32) -> (i32, i32, i32) {
    %c0_i32 = arith.constant 0 : i32
    %c0_i32_0 = arith.constant 0 : i32
    %c0_i32_1 = arith.constant 0 : i32
    %c0_i32_2 = arith.constant 0 : i32
    return %c0_i32, %c0_i32_0, %c0_i32_1 : i32, i32, i32
  }
  func.func @transform_3(%arg0: i32) -> (i32, i32) {
    %c0_i32 = arith.constant 0 : i32
    %c0_i32_0 = arith.constant 0 : i32
    return %arg0, %c0_i32 : i32, i32
  }
  func.func @transform_4(%arg0: i32) -> (i32, i32) {
    %c0_i32 = arith.constant 0 : i32
    %c0_i32_0 = arith.constant 0 : i32
    return %arg0, %c0_i32 : i32, i32
  }
  func.func @transform_5(%arg0: i32) -> (i32, i32) {
    %c0_i32 = arith.constant 0 : i32
    %c0_i32_0 = arith.constant 0 : i32
    return %arg0, %c0_i32 : i32, i32
  }
  func.func @transform_6(%arg0: i32) -> (i32, i32) {
    %c0_i32 = arith.constant 0 : i32
    %c0_i32_0 = arith.constant 0 : i32
    return %arg0, %c0_i32 : i32, i32
  }
}

</mosaic_0001>

<llo_original>
// kernel: tpu_custom_call.1
$region0: #{tpu_custom_call.1}
  #allocation0 [shape = 'u32[]', space=smem, size = 0x4, offset = 0x4, fixed_abs, tag = 'smem constant byte address 0x4 - core index']
  #allocation1 [shape = 'u32[144,128]{1,0:T(1,128)}', space=vmem, size = 0x12000, scoped, tag = 'internal scratch']
  %s0 = inlined_call_operand.vmem [shape: bf16[4,512,4], index: 0, kind: input, shape index: {}]
  %s1 = inlined_call_operand.vmem [shape: bf16[4,512,4], index: 1, kind: input, shape index: {}]
  %s2 = inlined_call_operand.vmem [shape: bf16[16,4,128], index: 2, kind: input, shape index: {}]
  %s3 = inlined_call_operand.vmem [shape: f32[256,1], index: 3, kind: input, shape index: {}]
  %s4 = inlined_call_operand.hbm [shape: bf16[256,128], index: 4, kind: output, shape index: {0}]
  %s5 = inlined_call_operand.hbm [shape: f32[8,128], index: 5, kind: output, shape index: {1}]
  %s6 = inlined_call_operand.hbm [shape: f32[8,128], index: 6, kind: output, shape index: {2}]
  %7 = xla_tuple %s4, %s5, %s6
  %s8 = sld [smem:[#allocation0]]
  $region124: #{tpu_custom_call.1} parent=0
    _
  %s10 = ssub.s32 1, %s8
  %s11 = scalar_select 0, %s10, %s8
  $region1: #{tpu_custom_call.1} parent=0
    #allocation2 [shape = 'u8[262144]{0}', space=vmem, size = 0x40000, scoped, tag = 'input window, operand 0, single buffered']
    #allocation3 [shape = 'u8[16384]{0}', space=vmem, size = 0x4000, scoped, tag = 'input window, operand 1, single buffered']
    #allocation4 [shape = 'u8[65536]{0}', space=vmem, size = 0x10000, scoped, tag = 'output window, operand 0, single buffered']
    #allocation5 [shape = 's32[1]{0}', space=sflag, size = 0x4, scoped, tag = 'scoped memory for tpu_custom_call.1']
    #allocation6 [shape = 'u8[4096]{0}', space=vmem, size = 0x1000, scoped, tag = 'output window, operand 1, single buffered']
    #allocation7 [shape = 's32[1]{0}', space=sflag, size = 0x4, scoped, tag = 'scoped memory for tpu_custom_call.1']
    #allocation8 [shape = 'u8[4096]{0}', space=vmem, size = 0x1000, scoped, tag = 'output window, operand 2, single buffered']
    %12 = vsyncpa [#allocation5], 0
    %13 = vsyncpa [#allocation7], 0
    // Predicated region
    $region2: #{tpu_custom_call.1} parent=1 // pred_check
      _
    $region3: #{tpu_custom_call.1} parent=1 // pred_check_branch
      %15 = sbr.rel (0) target = $region5
    $region4: #{tpu_custom_call.1} parent=1 // pred_region
      // Predicated region
      $region6: #{tpu_custom_call.1} parent=4 // pred_check
        _
      $region7: #{tpu_custom_call.1} parent=4 // pred_check_branch
        %17 = sbr.rel (0) target = $region9
      $region8: #{tpu_custom_call.1} parent=4 // pred_region
        // Predicated region
        $region10: #{tpu_custom_call.1} parent=8 // pred_check
          _
        $region11: #{tpu_custom_call.1} parent=8 // pred_check_branch
          %19 = sbr.rel target = $region13
        $region12: #{tpu_custom_call.1} parent=8 // pred_region
          // Predicated region
          $region25: #{tpu_custom_call.1} parent=12 // pred_check
            _
          $region26: #{tpu_custom_call.1} parent=12 // pred_check_branch
            %288 = sbr.rel (0) target = $region28
          $region27: #{tpu_custom_call.1} parent=12 // pred_region
            loop: start=0, step=1, limit=1
            $region29: #{tpu_custom_call.1} parent=27 // loop_pre_header
              _
            $region30: #{tpu_custom_call.1} parent=27 // loop_header
              %s290 = sphi 0, %s294
              %p291 = scmp.ge.s32.totalorder %s290, 1
              %s295 = sphi %s0, %s0
              %s296 = sphi [#allocation2], [#allocation2]
            $region31: #{tpu_custom_call.1} parent=27 // loop_header_branch
              %293 = sbr.rel (%p291) target = $region35
            $region32: #{tpu_custom_call.1} parent=27 // loop_body
              _
            $region33: #{tpu_custom_call.1} parent=27 // loop_footer
              %s294 = sadd.s32 1, %s290
            $region34: #{tpu_custom_call.1} parent=27 // loop_footer_branch
              %289 = sbr.rel target = $region30
            $region35: #{tpu_custom_call.1} parent=27 // loop_exit
              _
            loop: start=0, step=1, limit=1
            $region36: #{tpu_custom_call.1} parent=27 // loop_pre_header
              _
            $region37: #{tpu_custom_call.1} parent=27 // loop_header
              %s299 = sphi 0, %s303
              %p300 = scmp.ge.s32.totalorder %s299, 1
              %s304 = sphi %s0, %s0
              %s305 = sphi [#allocation2], [#allocation2]
            $region38: #{tpu_custom_call.1} parent=27 // loop_header_branch
              %302 = sbr.rel (%p300) target = $region42
            $region39: #{tpu_custom_call.1} parent=27 // loop_body
              %v306 = vld [vmem:[%s304] sm:$0xf]
              %307 = vst [vmem:[%s305] sm:$0xf] %v306
              %v308 = vld [vmem:[%s304 + $0x4] sm:$0xf]
              %309 = vst [vmem:[%s305 + $0x4] sm:$0xf] %v308
              %v310 = vld [vmem:[%s304 + $0x8] sm:$0xf]
              %311 = vst [vmem:[%s305 + $0x8] sm:$0xf] %v310
              %v312 = vld [vmem:[%s304 + $0xc] sm:$0xf]
              %313 = vst [vmem:[%s305 + $0xc] sm:$0xf] %v312
              %v314 = vld [vmem:[%s304 + $0x10] sm:$0xf]
              %315 = vst [vmem:[%s305 + $0x10] sm:$0xf] %v314
              %v316 = vld [vmem:[%s304 + $0x14] sm:$0xf]
              %317 = vst [vmem:[%s305 + $0x14] sm:$0xf] %v316
              %v318 = vld [vmem:[%s304 + $0x18] sm:$0xf]
              %319 = vst [vmem:[%s305 + $0x18] sm:$0xf] %v318
              %v320 = vld [vmem:[%s304 + $0x1c] sm:$0xf]
              %321 = vst [vmem:[%s305 + $0x1c] sm:$0xf] %v320
              %v322 = vld [vmem:[%s304 + $0x20] sm:$0xf]
              %323 = vst [vmem:[%s305 + $0x20] sm:$0xf] %v322
              %v324 = vld [vmem:[%s304 + $0x24] sm:$0xf]
              %325 = vst [vmem:[%s305 + $0x24] sm:$0xf] %v324
              %v326 = vld [vmem:[%s304 + $0x28] sm:$0xf]
              %327 = vst [vmem:[%s305 + $0x28] sm:$0xf] %v326
              %v328 = vld [vmem:[%s304 + $0x2c] sm:$0xf]
              %329 = vst [vmem:[%s305 + $0x2c] sm:$0xf] %v328
              %v330 = vld [vmem:[%s304 + $0x30] sm:$0xf]
              %331 = vst [vmem:[%s305 + $0x30] sm:$0xf] %v330
              %v332 = vld [vmem:[%s304 + $0x34] sm:$0xf]
              %333 = vst [vmem:[%s305 + $0x34] sm:$0xf] %v332
              %v334 = vld [vmem:[%s304 + $0x38] sm:$0xf]
              %335 = vst [vmem:[%s305 + $0x38] sm:$0xf] %v334
              %v336 = vld [vmem:[%s304 + $0x3c] sm:$0xf]
              %337 = vst [vmem:[%s305 + $0x3c] sm:$0xf] %v336
              %v338 = vld [vmem:[%s304 + $0x40] sm:$0xf]
              %339 = vst [vmem:[%s305 + $0x40] sm:$0xf] %v338
              %v340 = vld [vmem:[%s304 + $0x44] sm:$0xf]
              %341 = vst [vmem:[%s305 + $0x44] sm:$0xf] %v340
              %v342 = vld [vmem:[%s304 + $0x48] sm:$0xf]
              %343 = vst [vmem:[%s305 + $0x48] sm:$0xf] %v342
              %v344 = vld [vmem:[%s304 + $0x4c] sm:$0xf]
              %345 = vst [vmem:[%s305 + $0x4c] sm:$0xf] %v344
              %v346 = vld [vmem:[%s304 + $0x50] sm:$0xf]
              %347 = vst [vmem:[%s305 + $0x50] sm:$0xf] %v346
              %v348 = vld [vmem:[%s304 + $0x54] sm:$0xf]
              %349 = vst [vmem:[%s305 + $0x54] sm:$0xf] %v348
              %v350 = vld [vmem:[%s304 + $0x58] sm:$0xf]
              %351 = vst [vmem:[%s305 + $0x58] sm:$0xf] %v350
              %v352 = vld [vmem:[%s304 + $0x5c] sm:$0xf]
              %353 = vst [vmem:[%s305 + $0x5c] sm:$0xf] %v352
              %v354 = vld [vmem:[%s304 + $0x60] sm:$0xf]
              %355 = vst [vmem:[%s305 + $0x60] sm:$0xf] %v354
              %v356 = vld [vmem:[%s304 + $0x64] sm:$0xf]
              %357 = vst [vmem:[%s305 + $0x64] sm:$0xf] %v356
              %v358 = vld [vmem:[%s304 + $0x68] sm:$0xf]
              %359 = vst [vmem:[%s305 + $0x68] sm:$0xf] %v358
              %v360 = vld [vmem:[%s304 + $0x6c] sm:$0xf]
              %361 = vst [vmem:[%s305 + $0x6c] sm:$0xf] %v360
              %v362 = vld [vmem:[%s304 + $0x70] sm:$0xf]
              %363 = vst [vmem:[%s305 + $0x70] sm:$0xf] %v362
              %v364 = vld [vmem:[%s304 + $0x74] sm:$0xf]
              %365 = vst [vmem:[%s305 + $0x74] sm:$0xf] %v364
              %v366 = vld [vmem:[%s304 + $0x78] sm:$0xf]
              %367 = vst [vmem:[%s305 + $0x78] sm:$0xf] %v366
              %v368 = vld [vmem:[%s304 + $0x7c] sm:$0xf]
              %369 = vst [vmem:[%s305 + $0x7c] sm:$0xf] %v368
              %v370 = vld [vmem:[%s304 + $0x100] sm:$0xf]
              %371 = vst [vmem:[%s305 + $0x80] sm:$0xf] %v370
              %v372 = vld [vmem:[%s304 + $0x104] sm:$0xf]
              %373 = vst [vmem:[%s305 + $0x84] sm:$0xf] %v372
              %v374 = vld [vmem:[%s304 + $0x108] sm:$0xf]
              %375 = vst [vmem:[%s305 + $0x88] sm:$0xf] %v374
              %v376 = vld [vmem:[%s304 + $0x10c] sm:$0xf]
              %377 = vst [vmem:[%s305 + $0x8c] sm:$0xf] %v376
              %v378 = vld [vmem:[%s304 + $0x110] sm:$0xf]
              %379 = vst [vmem:[%s305 + $0x90] sm:$0xf] %v378
              %v380 = vld [vmem:[%s304 + $0x114] sm:$0xf]
              %381 = vst [vmem:[%s305 + $0x94] sm:$0xf] %v380
              %v382 = vld [vmem:[%s304 + $0x118] sm:$0xf]
              %383 = vst [vmem:[%s305 + $0x98] sm:$0xf] %v382
              %v384 = vld [vmem:[%s304 + $0x11c] sm:$0xf]
              %385 = vst [vmem:[%s305 + $0x9c] sm:$0xf] %v384
              %v386 = vld [vmem:[%s304 + $0x120] sm:$0xf]
              %387 = vst [vmem:[%s305 + $0xa0] sm:$0xf] %v386
              %v388 = vld [vmem:[%s304 + $0x124] sm:$0xf]
              %389 = vst [vmem:[%s305 + $0xa4] sm:$0xf] %v388
              %v390 = vld [vmem:[%s304 + $0x128] sm:$0xf]
              %391 = vst [vmem:[%s305 + $0xa8] sm:$0xf] %v390
              %v392 = vld [vmem:[%s304 + $0x12c] sm:$0xf]
              %393 = vst [vmem:[%s305 + $0xac] sm:$0xf] %v392
              %v394 = vld [vmem:[%s304 + $0x130] sm:$0xf]
              %395 = vst [vmem:[%s305 + $0xb0] sm:$0xf] %v394
              %v396 = vld [vmem:[%s304 + $0x134] sm:$0xf]
              %397 = vst [vmem:[%s305 + $0xb4] sm:$0xf] %v396
              %v398 = vld [vmem:[%s304 + $0x138] sm:$0xf]
              %399 = vst [vmem:[%s305 + $0xb8] sm:$0xf] %v398
              %v400 = vld [vmem:[%s304 + $0x13c] sm:$0xf]
              %401 = vst [vmem:[%s305 + $0xbc] sm:$0xf] %v400
              %v402 = vld [vmem:[%s304 + $0x140] sm:$0xf]
              %403 = vst [vmem:[%s305 + $0xc0] sm:$0xf] %v402
              %v404 = vld [vmem:[%s304 + $0x144] sm:$0xf]
              %405 = vst [vmem:[%s305 + $0xc4] sm:$0xf] %v404
              %v406 = vld [vmem:[%s304 + $0x148] sm:$0xf]
              %407 = vst [vmem:[%s305 + $0xc8] sm:$0xf] %v406
              %v408 = vld [vmem:[%s304 + $0x14c] sm:$0xf]
              %409 = vst [vmem:[%s305 + $0xcc] sm:$0xf] %v408
              %v410 = vld [vmem:[%s304 + $0x150] sm:$0xf]
              %411 = vst [vmem:[%s305 + $0xd0] sm:$0xf] %v410
              %v412 = vld [vmem:[%s304 + $0x154] sm:$0xf]
              %413 = vst [vmem:[%s305 + $0xd4] sm:$0xf] %v412
              %v414 = vld [vmem:[%s304 + $0x158] sm:$0xf]
              %415 = vst [vmem:[%s305 + $0xd8] sm:$0xf] %v414
              %v416 = vld [vmem:[%s304 + $0x15c] sm:$0xf]
              %417 = vst [vmem:[%s305 + $0xdc] sm:$0xf] %v416
              %v418 = vld [vmem:[%s304 + $0x160] sm:$0xf]
              %419 = vst [vmem:[%s305 + $0xe0] sm:$0xf] %v418
              %v420 = vld [vmem:[%s304 + $0x164] sm:$0xf]
              %421 = vst [vmem:[%s305 + $0xe4] sm:$0xf] %v420
              %v422 = vld [vmem:[%s304 + $0x168] sm:$0xf]
              %423 = vst [vmem:[%s305 + $0xe8] sm:$0xf] %v422
              %v424 = vld [vmem:[%s304 + $0x16c] sm:$0xf]
              %425 = vst [vmem:[%s305 + $0xec] sm:$0xf] %v424
              %v426 = vld [vmem:[%s304 + $0x170] sm:$0xf]
              %427 = vst [vmem:[%s305 + $0xf0] sm:$0xf] %v426
              %v428 = vld [vmem:[%s304 + $0x174] sm:$0xf]
              %429 = vst [vmem:[%s305 + $0xf4] sm:$0xf] %v428
              %v430 = vld [vmem:[%s304 + $0x178] sm:$0xf]
              %431 = vst [vmem:[%s305 + $0xf8] sm:$0xf] %v430
              %v432 = vld [vmem:[%s304 + $0x17c] sm:$0xf]
              %433 = vst [vmem:[%s305 + $0xfc] sm:$0xf] %v432
              %v434 = vld [vmem:[%s304 + $0x200] sm:$0xf]
              %435 = vst [vmem:[%s305 + $0x100] sm:$0xf] %v434
              %v436 = vld [vmem:[%s304 + $0x204] sm:$0xf]
              %437 = vst [vmem:[%s305 + $0x104] sm:$0xf] %v436
              %v438 = vld [vmem:[%s304 + $0x208] sm:$0xf]
              %439 = vst [vmem:[%s305 + $0x108] sm:$0xf] %v438
              %v440 = vld [vmem:[%s304 + $0x20c] sm:$0xf]
              %441 = vst [vmem:[%s305 + $0x10c] sm:$0xf] %v440
              %v442 = vld [vmem:[%s304 + $0x210] sm:$0xf]
              %443 = vst [vmem:[%s305 + $0x110] sm:$0xf] %v442
              %v444 = vld [vmem:[%s304 + $0x214] sm:$0xf]
              %445 = vst [vmem:[%s305 + $0x114] sm:$0xf] %v444
              %v446 = vld [vmem:[%s304 + $0x218] sm:$0xf]
              %447 = vst [vmem:[%s305 + $0x118] sm:$0xf] %v446
              %v448 = vld [vmem:[%s304 + $0x21c] sm:$0xf]
              %449 = vst [vmem:[%s305 + $0x11c] sm:$0xf] %v448
              %v450 = vld [vmem:[%s304 + $0x220] sm:$0xf]
              %451 = vst [vmem:[%s305 + $0x120] sm:$0xf] %v450
              %v452 = vld [vmem:[%s304 + $0x224] sm:$0xf]
              %453 = vst [vmem:[%s305 + $0x124] sm:$0xf] %v452
              %v454 = vld [vmem:[%s304 + $0x228] sm:$0xf]
              %455 = vst [vmem:[%s305 + $0x128] sm:$0xf] %v454
              %v456 = vld [vmem:[%s304 + $0x22c] sm:$0xf]
              %457 = vst [vmem:[%s305 + $0x12c] sm:$0xf] %v456
              %v458 = vld [vmem:[%s304 + $0x230] sm:$0xf]
              %459 = vst [vmem:[%s305 + $0x130] sm:$0xf] %v458
              %v460 = vld [vmem:[%s304 + $0x234] sm:$0xf]
              %461 = vst [vmem:[%s305 + $0x134] sm:$0xf] %v460
              %v462 = vld [vmem:[%s304 + $0x238] sm:$0xf]
              %463 = vst [vmem:[%s305 + $0x138] sm:$0xf] %v462
              %v464 = vld [vmem:[%s304 + $0x23c] sm:$0xf]
              %465 = vst [vmem:[%s305 + $0x13c] sm:$0xf] %v464
              %v466 = vld [vmem:[%s304 + $0x240] sm:$0xf]
              %467 = vst [vmem:[%s305 + $0x140] sm:$0xf] %v466
              %v468 = vld [vmem:[%s304 + $0x244] sm:$0xf]
              %469 = vst [vmem:[%s305 + $0x144] sm:$0xf] %v468
              %v470 = vld [vmem:[%s304 + $0x248] sm:$0xf]
              %471 = vst [vmem:[%s305 + $0x148] sm:$0xf] %v470
              %v472 = vld [vmem:[%s304 + $0x24c] sm:$0xf]
              %473 = vst [vmem:[%s305 + $0x14c] sm:$0xf] %v472
              %v474 = vld [vmem:[%s304 + $0x250] sm:$0xf]
              %475 = vst [vmem:[%s305 + $0x150] sm:$0xf] %v474
              %v476 = vld [vmem:[%s304 + $0x254] sm:$0xf]
              %477 = vst [vmem:[%s305 + $0x154] sm:$0xf] %v476
              %v478 = vld [vmem:[%s304 + $0x258] sm:$0xf]
              %479 = vst [vmem:[%s305 + $0x158] sm:$0xf] %v478
              %v480 = vld [vmem:[%s304 + $0x25c] sm:$0xf]
              %481 = vst [vmem:[%s305 + $0x15c] sm:$0xf] %v480
              %v482 = vld [vmem:[%s304 + $0x260] sm:$0xf]
              %483 = vst [vmem:[%s305 + $0x160] sm:$0xf] %v482
              %v484 = vld [vmem:[%s304 + $0x264] sm:$0xf]
              %485 = vst [vmem:[%s305 + $0x164] sm:$0xf] %v484
              %v486 = vld [vmem:[%s304 + $0x268] sm:$0xf]
              %487 = vst [vmem:[%s305 + $0x168] sm:$0xf] %v486
              %v488 = vld [vmem:[%s304 + $0x26c] sm:$0xf]
              %489 = vst [vmem:[%s305 + $0x16c] sm:$0xf] %v488
              %v490 = vld [vmem:[%s304 + $0x270] sm:$0xf]
              %491 = vst [vmem:[%s305 + $0x170] sm:$0xf] %v490
              %v492 = vld [vmem:[%s304 + $0x274] sm:$0xf]
              %493 = vst [vmem:[%s305 + $0x174] sm:$0xf] %v492
              %v494 = vld [vmem:[%s304 + $0x278] sm:$0xf]
              %495 = vst [vmem:[%s305 + $0x178] sm:$0xf] %v494
              %v496 = vld [vmem:[%s304 + $0x27c] sm:$0xf]
              %497 = vst [vmem:[%s305 + $0x17c] sm:$0xf] %v496
              %v498 = vld [vmem:[%s304 + $0x300] sm:$0xf]
              %499 = vst [vmem:[%s305 + $0x180] sm:$0xf] %v498
              %v500 = vld [vmem:[%s304 + $0x304] sm:$0xf]
              %501 = vst [vmem:[%s305 + $0x184] sm:$0xf] %v500
              %v502 = vld [vmem:[%s304 + $0x308] sm:$0xf]
              %503 = vst [vmem:[%s305 + $0x188] sm:$0xf] %v502
              %v504 = vld [vmem:[%s304 + $0x30c] sm:$0xf]
              %505 = vst [vmem:[%s305 + $0x18c] sm:$0xf] %v504
              %v506 = vld [vmem:[%s304 + $0x310] sm:$0xf]
              %507 = vst [vmem:[%s305 + $0x190] sm:$0xf] %v506
              %v508 = vld [vmem:[%s304 + $0x314] sm:$0xf]
              %509 = vst [vmem:[%s305 + $0x194] sm:$0xf] %v508
              %v510 = vld [vmem:[%s304 + $0x318] sm:$0xf]
              %511 = vst [vmem:[%s305 + $0x198] sm:$0xf] %v510
              %v512 = vld [vmem:[%s304 + $0x31c] sm:$0xf]
              %513 = vst [vmem:[%s305 + $0x19c] sm:$0xf] %v512
              %v514 = vld [vmem:[%s304 + $0x320] sm:$0xf]
              %515 = vst [vmem:[%s305 + $0x1a0] sm:$0xf] %v514
              %v516 = vld [vmem:[%s304 + $0x324] sm:$0xf]
              %517 = vst [vmem:[%s305 + $0x1a4] sm:$0xf] %v516
              %v518 = vld [vmem:[%s304 + $0x328] sm:$0xf]
              %519 = vst [vmem:[%s305 + $0x1a8] sm:$0xf] %v518
              %v520 = vld [vmem:[%s304 + $0x32c] sm:$0xf]
              %521 = vst [vmem:[%s305 + $0x1ac] sm:$0xf] %v520
              %v522 = vld [vmem:[%s304 + $0x330] sm:$0xf]
              %523 = vst [vmem:[%s305 + $0x1b0] sm:$0xf] %v522
              %v524 = vld [vmem:[%s304 + $0x334] sm:$0xf]
              %525 = vst [vmem:[%s305 + $0x1b4] sm:$0xf] %v524
              %v526 = vld [vmem:[%s304 + $0x338] sm:$0xf]
              %527 = vst [vmem:[%s305 + $0x1b8] sm:$0xf] %v526
              %v528 = vld [vmem:[%s304 + $0x33c] sm:$0xf]
              %529 = vst [vmem:[%s305 + $0x1bc] sm:$0xf] %v528
              %v530 = vld [vmem:[%s304 + $0x340] sm:$0xf]
              %531 = vst [vmem:[%s305 + $0x1c0] sm:$0xf] %v530
              %v532 = vld [vmem:[%s304 + $0x344] sm:$0xf]
              %533 = vst [vmem:[%s305 + $0x1c4] sm:$0xf] %v532
              %v534 = vld [vmem:[%s304 + $0x348] sm:$0xf]
              %535 = vst [vmem:[%s305 + $0x1c8] sm:$0xf] %v534
              %v536 = vld [vmem:[%s304 + $0x34c] sm:$0xf]
              %537 = vst [vmem:[%s305 + $0x1cc] sm:$0xf] %v536
              %v538 = vld [vmem:[%s304 + $0x350] sm:$0xf]
              %539 = vst [vmem:[%s305 + $0x1d0] sm:$0xf] %v538
              %v540 = vld [vmem:[%s304 + $0x354] sm:$0xf]
              %541 = vst [vmem:[%s305 + $0x1d4] sm:$0xf] %v540
              %v542 = vld [vmem:[%s304 + $0x358] sm:$0xf]
              %543 = vst [vmem:[%s305 + $0x1d8] sm:$0xf] %v542
              %v544 = vld [vmem:[%s304 + $0x35c] sm:$0xf]
              %545 = vst [vmem:[%s305 + $0x1dc] sm:$0xf] %v544
              %v546 = vld [vmem:[%s304 + $0x360] sm:$0xf]
              %547 = vst [vmem:[%s305 + $0x1e0] sm:$0xf] %v546
              %v548 = vld [vmem:[%s304 + $0x364] sm:$0xf]
              %549 = vst [vmem:[%s305 + $0x1e4] sm:$0xf] %v548
              %v550 = vld [vmem:[%s304 + $0x368] sm:$0xf]
              %551 = vst [vmem:[%s305 + $0x1e8] sm:$0xf] %v550
              %v552 = vld [vmem:[%s304 + $0x36c] sm:$0xf]
              %553 = vst [vmem:[%s305 + $0x1ec] sm:$0xf] %v552
              %v554 = vld [vmem:[%s304 + $0x370] sm:$0xf]
              %555 = vst [vmem:[%s305 + $0x1f0] sm:$0xf] %v554
              %v556 = vld [vmem:[%s304 + $0x374] sm:$0xf]
              %557 = vst [vmem:[%s305 + $0x1f4] sm:$0xf] %v556
              %v558 = vld [vmem:[%s304 + $0x378] sm:$0xf]
              %559 = vst [vmem:[%s305 + $0x1f8] sm:$0xf] %v558
              %v560 = vld [vmem:[%s304 + $0x37c] sm:$0xf]
              %561 = vst [vmem:[%s305 + $0x1fc] sm:$0xf] %v560
            $region40: #{tpu_custom_call.1} parent=27 // loop_footer
              %s303 = sadd.s32 1, %s299
            $region41: #{tpu_custom_call.1} parent=27 // loop_footer_branch
              %298 = sbr.rel target = $region37
            $region42: #{tpu_custom_call.1} parent=27 // loop_exit
              _
          $region28: #{tpu_custom_call.1} parent=12 // pred_fallthru
            _
        $region13: #{tpu_custom_call.1} parent=8 // pred_fallthru
          _
        // Predicated region
        $region14: #{tpu_custom_call.1} parent=8 // pred_check
          _
        $region15: #{tpu_custom_call.1} parent=8 // pred_check_branch
          %21 = sbr.rel (0) target = $region17
        $region16: #{tpu_custom_call.1} parent=8 // pred_region
          loop: start=0, step=1, limit=1
          $region18: #{tpu_custom_call.1} parent=16 // loop_pre_header
            _
          $region19: #{tpu_custom_call.1} parent=16 // loop_header
            %s24 = sphi 0, %s28
            %p25 = scmp.ge.s32.totalorder %s24, 1
            %s29 = sphi %s0, %s0
            %s30 = sphi [#allocation2], [#allocation2]
          $region20: #{tpu_custom_call.1} parent=16 // loop_header_branch
            %27 = sbr.rel (%p25) target = $region24
          $region21: #{tpu_custom_call.1} parent=16 // loop_body
            %v31 = vld [vmem:[%s29] sm:$0xf]
            %32 = vst [vmem:[%s30] sm:$0xf] %v31
            %v33 = vld [vmem:[%s29 + $0x4] sm:$0xf]
            %34 = vst [vmem:[%s30 + $0x4] sm:$0xf] %v33
            %v35 = vld [vmem:[%s29 + $0x8] sm:$0xf]
            %36 = vst [vmem:[%s30 + $0x8] sm:$0xf] %v35
            %v37 = vld [vmem:[%s29 + $0xc] sm:$0xf]
            %38 = vst [vmem:[%s30 + $0xc] sm:$0xf] %v37
            %v39 = vld [vmem:[%s29 + $0x10] sm:$0xf]
            %40 = vst [vmem:[%s30 + $0x10] sm:$0xf] %v39
            %v41 = vld [vmem:[%s29 + $0x14] sm:$0xf]
            %42 = vst [vmem:[%s30 + $0x14] sm:$0xf] %v41
            %v43 = vld [vmem:[%s29 + $0x18] sm:$0xf]
            %44 = vst [vmem:[%s30 + $0x18] sm:$0xf] %v43
            %v45 = vld [vmem:[%s29 + $0x1c] sm:$0xf]
            %46 = vst [vmem:[%s30 + $0x1c] sm:$0xf] %v45
            %v47 = vld [vmem:[%s29 + $0x20] sm:$0xf]
            %48 = vst [vmem:[%s30 + $0x20] sm:$0xf] %v47
            %v49 = vld [vmem:[%s29 + $0x24] sm:$0xf]
            %50 = vst [vmem:[%s30 + $0x24] sm:$0xf] %v49
            %v51 = vld [vmem:[%s29 + $0x28] sm:$0xf]
            %52 = vst [vmem:[%s30 + $0x28] sm:$0xf] %v51
            %v53 = vld [vmem:[%s29 + $0x2c] sm:$0xf]
            %54 = vst [vmem:[%s30 + $0x2c] sm:$0xf] %v53
            %v55 = vld [vmem:[%s29 + $0x30] sm:$0xf]
            %56 = vst [vmem:[%s30 + $0x30] sm:$0xf] %v55
            %v57 = vld [vmem:[%s29 + $0x34] sm:$0xf]
            %58 = vst [vmem:[%s30 + $0x34] sm:$0xf] %v57
            %v59 = vld [vmem:[%s29 + $0x38] sm:$0xf]
            %60 = vst [vmem:[%s30 + $0x38] sm:$0xf] %v59
            %v61 = vld [vmem:[%s29 + $0x3c] sm:$0xf]
            %62 = vst [vmem:[%s30 + $0x3c] sm:$0xf] %v61
            %v63 = vld [vmem:[%s29 + $0x40] sm:$0xf]
            %64 = vst [vmem:[%s30 + $0x40] sm:$0xf] %v63
            %v65 = vld [vmem:[%s29 + $0x44] sm:$0xf]
            %66 = vst [vmem:[%s30 + $0x44] sm:$0xf] %v65
            %v67 = vld [vmem:[%s29 + $0x48] sm:$0xf]
            %68 = vst [vmem:[%s30 + $0x48] sm:$0xf] %v67
            %v69 = vld [vmem:[%s29 + $0x4c] sm:$0xf]
            %70 = vst [vmem:[%s30 + $0x4c] sm:$0xf] %v69
            %v71 = vld [vmem:[%s29 + $0x50] sm:$0xf]
            %72 = vst [vmem:[%s30 + $0x50] sm:$0xf] %v71
            %v73 = vld [vmem:[%s29 + $0x54] sm:$0xf]
            %74 = vst [vmem:[%s30 + $0x54] sm:$0xf] %v73
            %v75 = vld [vmem:[%s29 + $0x58] sm:$0xf]
            %76 = vst [vmem:[%s30 + $0x58] sm:$0xf] %v75
            %v77 = vld [vmem:[%s29 + $0x5c] sm:$0xf]
            %78 = vst [vmem:[%s30 + $0x5c] sm:$0xf] %v77
            %v79 = vld [vmem:[%s29 + $0x60] sm:$0xf]
            %80 = vst [vmem:[%s30 + $0x60] sm:$0xf] %v79
            %v81 = vld [vmem:[%s29 + $0x64] sm:$0xf]
            %82 = vst [vmem:[%s30 + $0x64] sm:$0xf] %v81
            %v83 = vld [vmem:[%s29 + $0x68] sm:$0xf]
            %84 = vst [vmem:[%s30 + $0x68] sm:$0xf] %v83
            %v85 = vld [vmem:[%s29 + $0x6c] sm:$0xf]
            %86 = vst [vmem:[%s30 + $0x6c] sm:$0xf] %v85
            %v87 = vld [vmem:[%s29 + $0x70] sm:$0xf]
            %88 = vst [vmem:[%s30 + $0x70] sm:$0xf] %v87
            %v89 = vld [vmem:[%s29 + $0x74] sm:$0xf]
            %90 = vst [vmem:[%s30 + $0x74] sm:$0xf] %v89
            %v91 = vld [vmem:[%s29 + $0x78] sm:$0xf]
            %92 = vst [vmem:[%s30 + $0x78] sm:$0xf] %v91
            %v93 = vld [vmem:[%s29 + $0x7c] sm:$0xf]
            %94 = vst [vmem:[%s30 + $0x7c] sm:$0xf] %v93
            %v95 = vld [vmem:[%s29 + $0x100] sm:$0xf]
            %96 = vst [vmem:[%s30 + $0x80] sm:$0xf] %v95
            %v97 = vld [vmem:[%s29 + $0x104] sm:$0xf]
            %98 = vst [vmem:[%s30 + $0x84] sm:$0xf] %v97
            %v99 = vld [vmem:[%s29 + $0x108] sm:$0xf]
            %100 = vst [vmem:[%s30 + $0x88] sm:$0xf] %v99
            %v101 = vld [vmem:[%s29 + $0x10c] sm:$0xf]
            %102 = vst [vmem:[%s30 + $0x8c] sm:$0xf] %v101
            %v103 = vld [vmem:[%s29 + $0x110] sm:$0xf]
            %104 = vst [vmem:[%s30 + $0x90] sm:$0xf] %v103
            %v105 = vld [vmem:[%s29 + $0x114] sm:$0xf]
            %106 = vst [vmem:[%s30 + $0x94] sm:$0xf] %v105
            %v107 = vld [vmem:[%s29 + $0x118] sm:$0xf]
            %108 = vst [vmem:[%s30 + $0x98] sm:$0xf] %v107
            %v109 = vld [vmem:[%s29 + $0x11c] sm:$0xf]
            %110 = vst [vmem:[%s30 + $0x9c] sm:$0xf] %v109
            %v111 = vld [vmem:[%s29 + $0x120] sm:$0xf]
            %112 = vst [vmem:[%s30 + $0xa0] sm:$0xf] %v111
            %v113 = vld [vmem:[%s29 + $0x124] sm:$0xf]
            %114 = vst [vmem:[%s30 + $0xa4] sm:$0xf] %v113
            %v115 = vld [vmem:[%s29 + $0x128] sm:$0xf]
            %116 = vst [vmem:[%s30 + $0xa8] sm:$0xf] %v115
            %v117 = vld [vmem:[%s29 + $0x12c] sm:$0xf]
            %118 = vst [vmem:[%s30 + $0xac] sm:$0xf] %v117
            %v119 = vld [vmem:[%s29 + $0x130] sm:$0xf]
            %120 = vst [vmem:[%s30 + $0xb0] sm:$0xf] %v119
            %v121 = vld [vmem:[%s29 + $0x134] sm:$0xf]
            %122 = vst [vmem:[%s30 + $0xb4] sm:$0xf] %v121
            %v123 = vld [vmem:[%s29 + $0x138] sm:$0xf]
            %124 = vst [vmem:[%s30 + $0xb8] sm:$0xf] %v123
            %v125 = vld [vmem:[%s29 + $0x13c] sm:$0xf]
            %126 = vst [vmem:[%s30 + $0xbc] sm:$0xf] %v125
            %v127 = vld [vmem:[%s29 + $0x140] sm:$0xf]
            %128 = vst [vmem:[%s30 + $0xc0] sm:$0xf] %v127
            %v129 = vld [vmem:[%s29 + $0x144] sm:$0xf]
            %130 = vst [vmem:[%s30 + $0xc4] sm:$0xf] %v129
            %v131 = vld [vmem:[%s29 + $0x148] sm:$0xf]
            %132 = vst [vmem:[%s30 + $0xc8] sm:$0xf] %v131
            %v133 = vld [vmem:[%s29 + $0x14c] sm:$0xf]
            %134 = vst [vmem:[%s30 + $0xcc] sm:$0xf] %v133
            %v135 = vld [vmem:[%s29 + $0x150] sm:$0xf]
            %136 = vst [vmem:[%s30 + $0xd0] sm:$0xf] %v135
            %v137 = vld [vmem:[%s29 + $0x154] sm:$0xf]
            %138 = vst [vmem:[%s30 + $0xd4] sm:$0xf] %v137
            %v139 = vld [vmem:[%s29 + $0x158] sm:$0xf]
            %140 = vst [vmem:[%s30 + $0xd8] sm:$0xf] %v139
            %v141 = vld [vmem:[%s29 + $0x15c] sm:$0xf]
            %142 = vst [vmem:[%s30 + $0xdc] sm:$0xf] %v141
            %v143 = vld [vmem:[%s29 + $0x160] sm:$0xf]
            %144 = vst [vmem:[%s30 + $0xe0] sm:$0xf] %v143
            %v145 = vld [vmem:[%s29 + $0x164] sm:$0xf]
            %146 = vst [vmem:[%s30 + $0xe4] sm:$0xf] %v145
            %v147 = vld [vmem:[%s29 + $0x168] sm:$0xf]
            %148 = vst [vmem:[%s30 + $0xe8] sm:$0xf] %v147
            %v149 = vld [vmem:[%s29 + $0x16c] sm:$0xf]
            %150 = vst [vmem:[%s30 + $0xec] sm:$0xf] %v149
            %v151 = vld [vmem:[%s29 + $0x170] sm:$0xf]
            %152 = vst [vmem:[%s30 + $0xf0] sm:$0xf] %v151
            %v153 = vld [vmem:[%s29 + $0x174] sm:$0xf]
            %154 = vst [vmem:[%s30 + $0xf4] sm:$0xf] %v153
            %v155 = vld [vmem:[%s29 + $0x178] sm:$0xf]
            %156 = vst [vmem:[%s30 + $0xf8] sm:$0xf] %v155
            %v157 = vld [vmem:[%s29 + $0x17c] sm:$0xf]
            %158 = vst [vmem:[%s30 + $0xfc] sm:$0xf] %v157
            %v159 = vld [vmem:[%s29 + $0x200] sm:$0xf]
            %160 = vst [vmem:[%s30 + $0x100] sm:$0xf] %v159
            %v161 = vld [vmem:[%s29 + $0x204] sm:$0xf]
            %162 = vst [vmem:[%s30 + $0x104] sm:$0xf] %v161
            %v163 = vld [vmem:[%s29 + $0x208] sm:$0xf]
            %164 = vst [vmem:[%s30 + $0x108] sm:$0xf] %v163
            %v165 = vld [vmem:[%s29 + $0x20c] sm:$0xf]
            %166 = vst [vmem:[%s30 + $0x10c] sm:$0xf] %v165
            %v167 = vld [vmem:[%s29 + $0x210] sm:$0xf]
            %168 = vst [vmem:[%s30 + $0x110] sm:$0xf] %v167
            %v169 = vld [vmem:[%s29 + $0x214] sm:$0xf]
            %170 = vst [vmem:[%s30 + $0x114] sm:$0xf] %v169
            %v171 = vld [vmem:[%s29 + $0x218] sm:$0xf]
            %172 = vst [vmem:[%s30 + $0x118] sm:$0xf] %v171
            %v173 = vld [vmem:[%s29 + $0x21c] sm:$0xf]
            %174 = vst [vmem:[%s30 + $0x11c] sm:$0xf] %v173
            %v175 = vld [vmem:[%s29 + $0x220] sm:$0xf]
            %176 = vst [vmem:[%s30 + $0x120] sm:$0xf] %v175
            %v177 = vld [vmem:[%s29 + $0x224] sm:$0xf]
            %178 = vst [vmem:[%s30 + $0x124] sm:$0xf] %v177
            %v179 = vld [vmem:[%s29 + $0x228] sm:$0xf]
            %180 = vst [vmem:[%s30 + $0x128] sm:$0xf] %v179
            %v181 = vld [vmem:[%s29 + $0x22c] sm:$0xf]
            %182 = vst [vmem:[%s30 + $0x12c] sm:$0xf] %v181
            %v183 = vld [vmem:[%s29 + $0x230] sm:$0xf]
            %184 = vst [vmem:[%s30 + $0x130] sm:$0xf] %v183
            %v185 = vld [vmem:[%s29 + $0x234] sm:$0xf]
            %186 = vst [vmem:[%s30 + $0x134] sm:$0xf] %v185
            %v187 = vld [vmem:[%s29 + $0x238] sm:$0xf]
            %188 = vst [vmem:[%s30 + $0x138] sm:$0xf] %v187
            %v189 = vld [vmem:[%s29 + $0x23c] sm:$0xf]
            %190 = vst [vmem:[%s30 + $0x13c] sm:$0xf] %v189
            %v191 = vld [vmem:[%s29 + $0x240] sm:$0xf]
            %192 = vst [vmem:[%s30 + $0x140] sm:$0xf] %v191
            %v193 = vld [vmem:[%s29 + $0x244] sm:$0xf]
            %194 = vst [vmem:[%s30 + $0x144] sm:$0xf] %v193
            %v195 = vld [vmem:[%s29 + $0x248] sm:$0xf]
            %196 = vst [vmem:[%s30 + $0x148] sm:$0xf] %v195
            %v197 = vld [vmem:[%s29 + $0x24c] sm:$0xf]
            %198 = vst [vmem:[%s30 + $0x14c] sm:$0xf] %v197
            %v199 = vld [vmem:[%s29 + $0x250] sm:$0xf]
            %200 = vst [vmem:[%s30 + $0x150] sm:$0xf] %v199
            %v201 = vld [vmem:[%s29 + $0x254] sm:$0xf]
            %202 = vst [vmem:[%s30 + $0x154] sm:$0xf] %v201
            %v203 = vld [vmem:[%s29 + $0x258] sm:$0xf]
            %204 = vst [vmem:[%s30 + $0x158] sm:$0xf] %v203
            %v205 = vld [vmem:[%s29 + $0x25c] sm:$0xf]
            %206 = vst [vmem:[%s30 + $0x15c] sm:$0xf] %v205
            %v207 = vld [vmem:[%s29 + $0x260] sm:$0xf]
            %208 = vst [vmem:[%s30 + $0x160] sm:$0xf] %v207
            %v209 = vld [vmem:[%s29 + $0x264] sm:$0xf]
            %210 = vst [vmem:[%s30 + $0x164] sm:$0xf] %v209
            %v211 = vld [vmem:[%s29 + $0x268] sm:$0xf]
            %212 = vst [vmem:[%s30 + $0x168] sm:$0xf] %v211
            %v213 = vld [vmem:[%s29 + $0x26c] sm:$0xf]
            %214 = vst [vmem:[%s30 + $0x16c] sm:$0xf] %v213
            %v215 = vld [vmem:[%s29 + $0x270] sm:$0xf]
            %216 = vst [vmem:[%s30 + $0x170] sm:$0xf] %v215
            %v217 = vld [vmem:[%s29 + $0x274] sm:$0xf]
            %218 = vst [vmem:[%s30 + $0x174] sm:$0xf] %v217
            %v219 = vld [vmem:[%s29 + $0x278] sm:$0xf]
            %220 = vst [vmem:[%s30 + $0x178] sm:$0xf] %v219
            %v221 = vld [vmem:[%s29 + $0x27c] sm:$0xf]
            %222 = vst [vmem:[%s30 + $0x17c] sm:$0xf] %v221
            %v223 = vld [vmem:[%s29 + $0x300] sm:$0xf]
            %224 = vst [vmem:[%s30 + $0x180] sm:$0xf] %v223
            %v225 = vld [vmem:[%s29 + $0x304] sm:$0xf]
            %226 = vst [vmem:[%s30 + $0x184] sm:$0xf] %v225
            %v227 = vld [vmem:[%s29 + $0x308] sm:$0xf]
            %228 = vst [vmem:[%s30 + $0x188] sm:$0xf] %v227
            %v229 = vld [vmem:[%s29 + $0x30c] sm:$0xf]
            %230 = vst [vmem:[%s30 + $0x18c] sm:$0xf] %v229
            %v231 = vld [vmem:[%s29 + $0x310] sm:$0xf]
            %232 = vst [vmem:[%s30 + $0x190] sm:$0xf] %v231
            %v233 = vld [vmem:[%s29 + $0x314] sm:$0xf]
            %234 = vst [vmem:[%s30 + $0x194] sm:$0xf] %v233
            %v235 = vld [vmem:[%s29 + $0x318] sm:$0xf]
            %236 = vst [vmem:[%s30 + $0x198] sm:$0xf] %v235
            %v237 = vld [vmem:[%s29 + $0x31c] sm:$0xf]
            %238 = vst [vmem:[%s30 + $0x19c] sm:$0xf] %v237
            %v239 = vld [vmem:[%s29 + $0x320] sm:$0xf]
            %240 = vst [vmem:[%s30 + $0x1a0] sm:$0xf] %v239
            %v241 = vld [vmem:[%s29 + $0x324] sm:$0xf]
            %242 = vst [vmem:[%s30 + $0x1a4] sm:$0xf] %v241
            %v243 = vld [vmem:[%s29 + $0x328] sm:$0xf]
            %244 = vst [vmem:[%s30 + $0x1a8] sm:$0xf] %v243
            %v245 = vld [vmem:[%s29 + $0x32c] sm:$0xf]
            %246 = vst [vmem:[%s30 + $0x1ac] sm:$0xf] %v245
            %v247 = vld [vmem:[%s29 + $0x330] sm:$0xf]
            %248 = vst [vmem:[%s30 + $0x1b0] sm:$0xf] %v247
            %v249 = vld [vmem:[%s29 + $0x334] sm:$0xf]
            %250 = vst [vmem:[%s30 + $0x1b4] sm:$0xf] %v249
            %v251 = vld [vmem:[%s29 + $0x338] sm:$0xf]
            %252 = vst [vmem:[%s30 + $0x1b8] sm:$0xf] %v251
            %v253 = vld [vmem:[%s29 + $0x33c] sm:$0xf]
            %254 = vst [vmem:[%s30 + $0x1bc] sm:$0xf] %v253
            %v255 = vld [vmem:[%s29 + $0x340] sm:$0xf]
            %256 = vst [vmem:[%s30 + $0x1c0] sm:$0xf] %v255
            %v257 = vld [vmem:[%s29 + $0x344] sm:$0xf]
            %258 = vst [vmem:[%s30 + $0x1c4] sm:$0xf] %v257
            %v259 = vld [vmem:[%s29 + $0x348] sm:$0xf]
            %260 = vst [vmem:[%s30 + $0x1c8] sm:$0xf] %v259
            %v261 = vld [vmem:[%s29 + $0x34c] sm:$0xf]
            %262 = vst [vmem:[%s30 + $0x1cc] sm:$0xf] %v261
            %v263 = vld [vmem:[%s29 + $0x350] sm:$0xf]
            %264 = vst [vmem:[%s30 + $0x1d0] sm:$0xf] %v263
            %v265 = vld [vmem:[%s29 + $0x354] sm:$0xf]
            %266 = vst [vmem:[%s30 + $0x1d4] sm:$0xf] %v265
            %v267 = vld [vmem:[%s29 + $0x358] sm:$0xf]
            %268 = vst [vmem:[%s30 + $0x1d8] sm:$0xf] %v267
            %v269 = vld [vmem:[%s29 + $0x35c] sm:$0xf]
            %270 = vst [vmem:[%s30 + $0x1dc] sm:$0xf] %v269
            %v271 = vld [vmem:[%s29 + $0x360] sm:$0xf]
            %272 = vst [vmem:[%s30 + $0x1e0] sm:$0xf] %v271
            %v273 = vld [vmem:[%s29 + $0x364] sm:$0xf]
            %274 = vst [vmem:[%s30 + $0x1e4] sm:$0xf] %v273
            %v275 = vld [vmem:[%s29 + $0x368] sm:$0xf]
            %276 = vst [vmem:[%s30 + $0x1e8] sm:$0xf] %v275
            %v277 = vld [vmem:[%s29 + $0x36c] sm:$0xf]
            %278 = vst [vmem:[%s30 + $0x1ec] sm:$0xf] %v277
            %v279 = vld [vmem:[%s29 + $0x370] sm:$0xf]
            %280 = vst [vmem:[%s30 + $0x1f0] sm:$0xf] %v279
            %v281 = vld [vmem:[%s29 + $0x374] sm:$0xf]
            %282 = vst [vmem:[%s30 + $0x1f4] sm:$0xf] %v281
            %v283 = vld [vmem:[%s29 + $0x378] sm:$0xf]
            %284 = vst [vmem:[%s30 + $0x1f8] sm:$0xf] %v283
            %v285 = vld [vmem:[%s29 + $0x37c] sm:$0xf]
            %286 = vst [vmem:[%s30 + $0x1fc] sm:$0xf] %v285
          $region22: #{tpu_custom_call.1} parent=16 // loop_footer
            %s28 = sadd.s32 1, %s24
          $region23: #{tpu_custom_call.1} parent=16 // loop_footer_branch
            %23 = sbr.rel target = $region19
          $region24: #{tpu_custom_call.1} parent=16 // loop_exit
            _
        $region17: #{tpu_custom_call.1} parent=8 // pred_fallthru
          _
      $region9: #{tpu_custom_call.1} parent=4 // pred_fallthru
        _
      %562 = vnop
    $region5: #{tpu_custom_call.1} parent=1 // pred_fallthru
      _
    // Predicated region
    $region43: #{tpu_custom_call.1} parent=1 // pred_check
      _
    $region44: #{tpu_custom_call.1} parent=1 // pred_check_branch
      %564 = sbr.rel (0) target = $region46
    $region45: #{tpu_custom_call.1} parent=1 // pred_region
      %s565 = sadd.s32 0, 1
      %s566 = smul.u32 %s565, 16
      %s567 = smul.u32 2, %s566
      %s568 = smul.addr %s567, 4
      %s569 = scalar_lea.vmem %s1, %s568
      // Predicated region
      $region47: #{tpu_custom_call.1} parent=45 // pred_check
        _
      $region48: #{tpu_custom_call.1} parent=45 // pred_check_branch
        %571 = sbr.rel (0) target = $region50
      $region49: #{tpu_custom_call.1} parent=45 // pred_region
        // Predicated region
        $region51: #{tpu_custom_call.1} parent=49 // pred_check
          _
        $region52: #{tpu_custom_call.1} parent=49 // pred_check_branch
          %573 = sbr.rel target = $region54
        $region53: #{tpu_custom_call.1} parent=49 // pred_region
          // Predicated region
          $region66: #{tpu_custom_call.1} parent=53 // pred_check
            _
          $region67: #{tpu_custom_call.1} parent=53 // pred_check_branch
            %602 = sbr.rel (0) target = $region69
          $region68: #{tpu_custom_call.1} parent=53 // pred_region
            loop: start=0, step=1, limit=1
            $region70: #{tpu_custom_call.1} parent=68 // loop_pre_header
              _
            $region71: #{tpu_custom_call.1} parent=68 // loop_header
              %s604 = sphi 0, %s608
              %p605 = scmp.ge.s32.totalorder %s604, 1
              %s609 = sphi %s569, %s569
              %s610 = sphi [#allocation3], [#allocation3]
            $region72: #{tpu_custom_call.1} parent=68 // loop_header_branch
              %607 = sbr.rel (%p605) target = $region76
            $region73: #{tpu_custom_call.1} parent=68 // loop_body
              _
            $region74: #{tpu_custom_call.1} parent=68 // loop_footer
              %s608 = sadd.s32 1, %s604
            $region75: #{tpu_custom_call.1} parent=68 // loop_footer_branch
              %603 = sbr.rel target = $region71
            $region76: #{tpu_custom_call.1} parent=68 // loop_exit
              _
            loop: start=0, step=1, limit=1
            $region77: #{tpu_custom_call.1} parent=68 // loop_pre_header
              _
            $region78: #{tpu_custom_call.1} parent=68 // loop_header
              %s613 = sphi 0, %s617
              %p614 = scmp.ge.s32.totalorder %s613, 1
              %s618 = sphi %s569, %s569
              %s619 = sphi [#allocation3], [#allocation3]
            $region79: #{tpu_custom_call.1} parent=68 // loop_header_branch
              %616 = sbr.rel (%p614) target = $region83
            $region80: #{tpu_custom_call.1} parent=68 // loop_body
              %v620 = vld [vmem:[%s618] sm:$0xf]
              %621 = vst [vmem:[%s619] sm:$0xf] %v620
              %v622 = vld [vmem:[%s618 + $0x4] sm:$0xf]
              %623 = vst [vmem:[%s619 + $0x4] sm:$0xf] %v622
              %v624 = vld [vmem:[%s618 + $0x100] sm:$0xf]
              %625 = vst [vmem:[%s619 + $0x8] sm:$0xf] %v624
              %v626 = vld [vmem:[%s618 + $0x104] sm:$0xf]
              %627 = vst [vmem:[%s619 + $0xc] sm:$0xf] %v626
              %v628 = vld [vmem:[%s618 + $0x200] sm:$0xf]
              %629 = vst [vmem:[%s619 + $0x10] sm:$0xf] %v628
              %v630 = vld [vmem:[%s618 + $0x204] sm:$0xf]
              %631 = vst [vmem:[%s619 + $0x14] sm:$0xf] %v630
              %v632 = vld [vmem:[%s618 + $0x300] sm:$0xf]
              %633 = vst [vmem:[%s619 + $0x18] sm:$0xf] %v632
              %v634 = vld [vmem:[%s618 + $0x304] sm:$0xf]
              %635 = vst [vmem:[%s619 + $0x1c] sm:$0xf] %v634
            $region81: #{tpu_custom_call.1} parent=68 // loop_footer
              %s617 = sadd.s32 1, %s613
            $region82: #{tpu_custom_call.1} parent=68 // loop_footer_branch
              %612 = sbr.rel target = $region78
            $region83: #{tpu_custom_call.1} parent=68 // loop_exit
              _
          $region69: #{tpu_custom_call.1} parent=53 // pred_fallthru
            _
        $region54: #{tpu_custom_call.1} parent=49 // pred_fallthru
          _
        // Predicated region
        $region55: #{tpu_custom_call.1} parent=49 // pred_check
          _
        $region56: #{tpu_custom_call.1} parent=49 // pred_check_branch
          %575 = sbr.rel (0) target = $region58
        $region57: #{tpu_custom_call.1} parent=49 // pred_region
          loop: start=0, step=1, limit=1
          $region59: #{tpu_custom_call.1} parent=57 // loop_pre_header
            _
          $region60: #{tpu_custom_call.1} parent=57 // loop_header
            %s578 = sphi 0, %s582
            %p579 = scmp.ge.s32.totalorder %s578, 1
            %s583 = sphi %s569, %s569
            %s584 = sphi [#allocation3], [#allocation3]
          $region61: #{tpu_custom_call.1} parent=57 // loop_header_branch
            %581 = sbr.rel (%p579) target = $region65
          $region62: #{tpu_custom_call.1} parent=57 // loop_body
            %v585 = vld [vmem:[%s583] sm:$0xf]
            %586 = vst [vmem:[%s584] sm:$0xf] %v585
            %v587 = vld [vmem:[%s583 + $0x4] sm:$0xf]
            %588 = vst [vmem:[%s584 + $0x4] sm:$0xf] %v587
            %v589 = vld [vmem:[%s583 + $0x100] sm:$0xf]
            %590 = vst [vmem:[%s584 + $0x8] sm:$0xf] %v589
            %v591 = vld [vmem:[%s583 + $0x104] sm:$0xf]
            %592 = vst [vmem:[%s584 + $0xc] sm:$0xf] %v591
            %v593 = vld [vmem:[%s583 + $0x200] sm:$0xf]
            %594 = vst [vmem:[%s584 + $0x10] sm:$0xf] %v593
            %v595 = vld [vmem:[%s583 + $0x204] sm:$0xf]
            %596 = vst [vmem:[%s584 + $0x14] sm:$0xf] %v595
            %v597 = vld [vmem:[%s583 + $0x300] sm:$0xf]
            %598 = vst [vmem:[%s584 + $0x18] sm:$0xf] %v597
            %v599 = vld [vmem:[%s583 + $0x304] sm:$0xf]
            %600 = vst [vmem:[%s584 + $0x1c] sm:$0xf] %v599
          $region63: #{tpu_custom_call.1} parent=57 // loop_footer
            %s582 = sadd.s32 1, %s578
          $region64: #{tpu_custom_call.1} parent=57 // loop_footer_branch
            %577 = sbr.rel target = $region60
          $region65: #{tpu_custom_call.1} parent=57 // loop_exit
            _
        $region58: #{tpu_custom_call.1} parent=49 // pred_fallthru
          _
      $region50: #{tpu_custom_call.1} parent=45 // pred_fallthru
        _
      %636 = vnop
    $region46: #{tpu_custom_call.1} parent=1 // pred_fallthru
      _
    // Predicated region
    $region84: #{tpu_custom_call.1} parent=1 // pred_check
      _
    $region85: #{tpu_custom_call.1} parent=1 // pred_check_branch
      %638 = sbr.rel (0) target = $region87
    $region86: #{tpu_custom_call.1} parent=1 // pred_region
      _
    $region87: #{tpu_custom_call.1} parent=1 // pred_fallthru
      _
    // Predicated region
    $region88: #{tpu_custom_call.1} parent=1 // pred_check
      _
    $region89: #{tpu_custom_call.1} parent=1 // pred_check_branch
      %640 = sbr.rel (0) target = $region91
    $region90: #{tpu_custom_call.1} parent=1 // pred_region
      _
    $region91: #{tpu_custom_call.1} parent=1 // pred_fallthru
      _
    // Predicated region
    $region92: #{tpu_custom_call.1} parent=1 // pred_check
      _
    $region93: #{tpu_custom_call.1} parent=1 // pred_check_branch
      %642 = sbr.rel (0) target = $region95
    $region94: #{tpu_custom_call.1} parent=1 // pred_region
      _
    $region95: #{tpu_custom_call.1} parent=1 // pred_fallthru
      _
    // Predicated region
    $region96: #{tpu_custom_call.1} parent=1 // pred_check
      _
    $region97: #{tpu_custom_call.1} parent=1 // pred_check_branch
      %644 = sbr.rel (0) target = $region99
    $region98: #{tpu_custom_call.1} parent=1 // pred_region
      _
    $region99: #{tpu_custom_call.1} parent=1 // pred_fallthru
      _
    %s645 = sadd.s32 0, 1
    %s646 = smul.u32 %s645, 16
    %s647 = smul.u32 2, %s646
    %v649 = vld [vmem:[#allocation2] sm:$0xf]
    %v650 = vld [vmem:[#allocation2 + $0x4] sm:$0xf]
    %v651 = vld [vmem:[#allocation2 + $0x8] sm:$0xf]
    %v652 = vld [vmem:[#allocation2 + $0xc] sm:$0xf]
    %v653 = vld [vmem:[#allocation2 + $0x10] sm:$0xf]
    %v654 = vld [vmem:[#allocation2 + $0x14] sm:$0xf]
    %v655 = vld [vmem:[#allocation2 + $0x18] sm:$0xf]
    %v656 = vld [vmem:[#allocation2 + $0x1c] sm:$0xf]
    %v657 = vld [vmem:[#allocation2 + $0x20] sm:$0xf]
    %v658 = vld [vmem:[#allocation2 + $0x24] sm:$0xf]
    %v659 = vld [vmem:[#allocation2 + $0x28] sm:$0xf]
    %v660 = vld [vmem:[#allocation2 + $0x2c] sm:$0xf]
    %v661 = vld [vmem:[#allocation2 + $0x30] sm:$0xf]
    %v662 = vld [vmem:[#allocation2 + $0x34] sm:$0xf]
    %v663 = vld [vmem:[#allocation2 + $0x38] sm:$0xf]
    %v664 = vld [vmem:[#allocation2 + $0x3c] sm:$0xf]
    %v665 = vld [vmem:[#allocation2 + $0x40] sm:$0xf]
    %v666 = vld [vmem:[#allocation2 + $0x44] sm:$0xf]
    %v667 = vld [vmem:[#allocation2 + $0x48] sm:$0xf]
    %v668 = vld [vmem:[#allocation2 + $0x4c] sm:$0xf]
    %v669 = vld [vmem:[#allocation2 + $0x50] sm:$0xf]
    %v670 = vld [vmem:[#allocation2 + $0x54] sm:$0xf]
    %v671 = vld [vmem:[#allocation2 + $0x58] sm:$0xf]
    %v672 = vld [vmem:[#allocation2 + $0x5c] sm:$0xf]
    %v673 = vld [vmem:[#allocation2 + $0x60] sm:$0xf]
    %v674 = vld [vmem:[#allocation2 + $0x64] sm:$0xf]
    %v675 = vld [vmem:[#allocation2 + $0x68] sm:$0xf]
    %v676 = vld [vmem:[#allocation2 + $0x6c] sm:$0xf]
    %v677 = vld [vmem:[#allocation2 + $0x70] sm:$0xf]
    %v678 = vld [vmem:[#allocation2 + $0x74] sm:$0xf]
    %v679 = vld [vmem:[#allocation2 + $0x78] sm:$0xf]
    %v680 = vld [vmem:[#allocation2 + $0x7c] sm:$0xf]
    %v681 = vld [vmem:[#allocation3] sm:$0xf]
    %v682 = vld [vmem:[#allocation3 + $0x4] sm:$0xf]
    %v715 = vunpack.c.l.b16 %v649
    %v716 = vunpack.c.l.b16 %v650
    %v717 = vunpack.c.l.b16 %v651
    %v718 = vunpack.c.l.b16 %v652
    %v719 = vunpack.c.l.b16 %v653
    %v720 = vunpack.c.l.b16 %v654
    %v721 = vunpack.c.l.b16 %v655
    %v722 = vunpack.c.l.b16 %v656
    %v723 = vunpack.c.l.b16 %v657
    %v724 = vunpack.c.l.b16 %v658
    %v725 = vunpack.c.l.b16 %v659
    %v726 = vunpack.c.l.b16 %v660
    %v727 = vunpack.c.l.b16 %v661
    %v728 = vunpack.c.l.b16 %v662
    %v729 = vunpack.c.l.b16 %v663
    %v730 = vunpack.c.l.b16 %v664
    %v731 = vunpack.c.l.b16 %v665
    %v732 = vunpack.c.l.b16 %v666
    %v733 = vunpack.c.l.b16 %v667
    %v734 = vunpack.c.l.b16 %v668
    %v735 = vunpack.c.l.b16 %v669
    %v736 = vunpack.c.l.b16 %v670
    %v737 = vunpack.c.l.b16 %v671
    %v738 = vunpack.c.l.b16 %v672
    %v739 = vunpack.c.l.b16 %v673
    %v740 = vunpack.c.l.b16 %v674
    %v741 = vunpack.c.l.b16 %v675
    %v742 = vunpack.c.l.b16 %v676
    %v743 = vunpack.c.l.b16 %v677
    %v744 = vunpack.c.l.b16 %v678
    %v745 = vunpack.c.l.b16 %v679
    %v746 = vunpack.c.l.b16 %v680
    %v747 = vpack.c.b16 %v716, %v715
    %v748 = vpack.c.b16 %v718, %v717
    %v749 = vpack.c.b16 %v720, %v719
    %v750 = vpack.c.b16 %v722, %v721
    %v751 = vpack.c.b16 %v724, %v723
    %v752 = vpack.c.b16 %v726, %v725
    %v753 = vpack.c.b16 %v728, %v727
    %v754 = vpack.c.b16 %v730, %v729
    %v755 = vpack.c.b16 %v732, %v731
    %v756 = vpack.c.b16 %v734, %v733
    %v757 = vpack.c.b16 %v736, %v735
    %v758 = vpack.c.b16 %v738, %v737
    %v759 = vpack.c.b16 %v740, %v739
    %v760 = vpack.c.b16 %v742, %v741
    %v761 = vpack.c.b16 %v744, %v743
    %v762 = vpack.c.b16 %v746, %v745
    %v765 = vunpack.c.l.b16 %v681
    %v766 = vunpack.c.l.b16 %v682
    %v767 = vpack.c.b16 %v766, %v765
    %s768 = scalar_lea.vmem [#allocation2], 128
    %v769 = vld [vmem:[%s768] sm:$0xf]
    %v770 = vld [vmem:[%s768 + $0x4] sm:$0xf]
    %v771 = vld [vmem:[%s768 + $0x8] sm:$0xf]
    %v772 = vld [vmem:[%s768 + $0xc] sm:$0xf]
    %v773 = vld [vmem:[%s768 + $0x10] sm:$0xf]
    %v774 = vld [vmem:[%s768 + $0x14] sm:$0xf]
    %v775 = vld [vmem:[%s768 + $0x18] sm:$0xf]
    %v776 = vld [vmem:[%s768 + $0x1c] sm:$0xf]
    %v777 = vld [vmem:[%s768 + $0x20] sm:$0xf]
    %v778 = vld [vmem:[%s768 + $0x24] sm:$0xf]
    %v779 = vld [vmem:[%s768 + $0x28] sm:$0xf]
    %v780 = vld [vmem:[%s768 + $0x2c] sm:$0xf]
    %v781 = vld [vmem:[%s768 + $0x30] sm:$0xf]
    %v782 = vld [vmem:[%s768 + $0x34] sm:$0xf]
    %v783 = vld [vmem:[%s768 + $0x38] sm:$0xf]
    %v784 = vld [vmem:[%s768 + $0x3c] sm:$0xf]
    %v785 = vld [vmem:[%s768 + $0x40] sm:$0xf]
    %v786 = vld [vmem:[%s768 + $0x44] sm:$0xf]
    %v787 = vld [vmem:[%s768 + $0x48] sm:$0xf]
    %v788 = vld [vmem:[%s768 + $0x4c] sm:$0xf]
    %v789 = vld [vmem:[%s768 + $0x50] sm:$0xf]
    %v790 = vld [vmem:[%s768 + $0x54] sm:$0xf]
    %v791 = vld [vmem:[%s768 + $0x58] sm:$0xf]
    %v792 = vld [vmem:[%s768 + $0x5c] sm:$0xf]
    %v793 = vld [vmem:[%s768 + $0x60] sm:$0xf]
    %v794 = vld [vmem:[%s768 + $0x64] sm:$0xf]
    %v795 = vld [vmem:[%s768 + $0x68] sm:$0xf]
    %v796 = vld [vmem:[%s768 + $0x6c] sm:$0xf]
    %v797 = vld [vmem:[%s768 + $0x70] sm:$0xf]
    %v798 = vld [vmem:[%s768 + $0x74] sm:$0xf]
    %v799 = vld [vmem:[%s768 + $0x78] sm:$0xf]
    %v800 = vld [vmem:[%s768 + $0x7c] sm:$0xf]
    %s801 = scalar_lea.vmem [#allocation3], 8
    %v802 = vld [vmem:[%s801] sm:$0xf]
    %v803 = vld [vmem:[%s801 + $0x4] sm:$0xf]
    %v836 = vunpack.c.l.b16 %v769
    %v837 = vunpack.c.l.b16 %v770
    %v838 = vunpack.c.l.b16 %v771
    %v839 = vunpack.c.l.b16 %v772
    %v840 = vunpack.c.l.b16 %v773
    %v841 = vunpack.c.l.b16 %v774
    %v842 = vunpack.c.l.b16 %v775
    %v843 = vunpack.c.l.b16 %v776
    %v844 = vunpack.c.l.b16 %v777
    %v845 = vunpack.c.l.b16 %v778
    %v846 = vunpack.c.l.b16 %v779
    %v847 = vunpack.c.l.b16 %v780
    %v848 = vunpack.c.l.b16 %v781
    %v849 = vunpack.c.l.b16 %v782
    %v850 = vunpack.c.l.b16 %v783
    %v851 = vunpack.c.l.b16 %v784
    %v852 = vunpack.c.l.b16 %v785
    %v853 = vunpack.c.l.b16 %v786
    %v854 = vunpack.c.l.b16 %v787
    %v855 = vunpack.c.l.b16 %v788
    %v856 = vunpack.c.l.b16 %v789
    %v857 = vunpack.c.l.b16 %v790
    %v858 = vunpack.c.l.b16 %v791
    %v859 = vunpack.c.l.b16 %v792
    %v860 = vunpack.c.l.b16 %v793
    %v861 = vunpack.c.l.b16 %v794
    %v862 = vunpack.c.l.b16 %v795
    %v863 = vunpack.c.l.b16 %v796
    %v864 = vunpack.c.l.b16 %v797
    %v865 = vunpack.c.l.b16 %v798
    %v866 = vunpack.c.l.b16 %v799
    %v867 = vunpack.c.l.b16 %v800
    %v868 = vpack.c.b16 %v837, %v836
    %v869 = vpack.c.b16 %v839, %v838
    %v870 = vpack.c.b16 %v841, %v840
    %v871 = vpack.c.b16 %v843, %v842
    %v872 = vpack.c.b16 %v845, %v844
    %v873 = vpack.c.b16 %v847, %v846
    %v874 = vpack.c.b16 %v849, %v848
    %v875 = vpack.c.b16 %v851, %v850
    %v876 = vpack.c.b16 %v853, %v852
    %v877 = vpack.c.b16 %v855, %v854
    %v878 = vpack.c.b16 %v857, %v856
    %v879 = vpack.c.b16 %v859, %v858
    %v880 = vpack.c.b16 %v861, %v860
    %v881 = vpack.c.b16 %v863, %v862
    %v882 = vpack.c.b16 %v865, %v864
    %v883 = vpack.c.b16 %v867, %v866
    %v886 = vunpack.c.l.b16 %v802
    %v887 = vunpack.c.l.b16 %v803
    %v888 = vpack.c.b16 %v887, %v886
    %s889 = scalar_lea.vmem [#allocation2], 256
    %v890 = vld [vmem:[%s889] sm:$0xf]
    %v891 = vld [vmem:[%s889 + $0x4] sm:$0xf]
    %v892 = vld [vmem:[%s889 + $0x8] sm:$0xf]
    %v893 = vld [vmem:[%s889 + $0xc] sm:$0xf]
    %v894 = vld [vmem:[%s889 + $0x10] sm:$0xf]
    %v895 = vld [vmem:[%s889 + $0x14] sm:$0xf]
    %v896 = vld [vmem:[%s889 + $0x18] sm:$0xf]
    %v897 = vld [vmem:[%s889 + $0x1c] sm:$0xf]
    %v898 = vld [vmem:[%s889 + $0x20] sm:$0xf]
    %v899 = vld [vmem:[%s889 + $0x24] sm:$0xf]
    %v900 = vld [vmem:[%s889 + $0x28] sm:$0xf]
    %v901 = vld [vmem:[%s889 + $0x2c] sm:$0xf]
    %v902 = vld [vmem:[%s889 + $0x30] sm:$0xf]
    %v903 = vld [vmem:[%s889 + $0x34] sm:$0xf]
    %v904 = vld [vmem:[%s889 + $0x38] sm:$0xf]
    %v905 = vld [vmem:[%s889 + $0x3c] sm:$0xf]
    %v906 = vld [vmem:[%s889 + $0x40] sm:$0xf]
    %v907 = vld [vmem:[%s889 + $0x44] sm:$0xf]
    %v908 = vld [vmem:[%s889 + $0x48] sm:$0xf]
    %v909 = vld [vmem:[%s889 + $0x4c] sm:$0xf]
    %v910 = vld [vmem:[%s889 + $0x50] sm:$0xf]
    %v911 = vld [vmem:[%s889 + $0x54] sm:$0xf]
    %v912 = vld [vmem:[%s889 + $0x58] sm:$0xf]
    %v913 = vld [vmem:[%s889 + $0x5c] sm:$0xf]
    %v914 = vld [vmem:[%s889 + $0x60] sm:$0xf]
    %v915 = vld [vmem:[%s889 + $0x64] sm:$0xf]
    %v916 = vld [vmem:[%s889 + $0x68] sm:$0xf]
    %v917 = vld [vmem:[%s889 + $0x6c] sm:$0xf]
    %v918 = vld [vmem:[%s889 + $0x70] sm:$0xf]
    %v919 = vld [vmem:[%s889 + $0x74] sm:$0xf]
    %v920 = vld [vmem:[%s889 + $0x78] sm:$0xf]
    %v921 = vld [vmem:[%s889 + $0x7c] sm:$0xf]
    %s922 = scalar_lea.vmem [#allocation3], 16
    %v923 = vld [vmem:[%s922] sm:$0xf]
    %v924 = vld [vmem:[%s922 + $0x4] sm:$0xf]
    %v957 = vunpack.c.l.b16 %v890
    %v958 = vunpack.c.l.b16 %v891
    %v959 = vunpack.c.l.b16 %v892
    %v960 = vunpack.c.l.b16 %v893
    %v961 = vunpack.c.l.b16 %v894
    %v962 = vunpack.c.l.b16 %v895
    %v963 = vunpack.c.l.b16 %v896
    %v964 = vunpack.c.l.b16 %v897
    %v965 = vunpack.c.l.b16 %v898
    %v966 = vunpack.c.l.b16 %v899
    %v967 = vunpack.c.l.b16 %v900
    %v968 = vunpack.c.l.b16 %v901
    %v969 = vunpack.c.l.b16 %v902
    %v970 = vunpack.c.l.b16 %v903
    %v971 = vunpack.c.l.b16 %v904
    %v972 = vunpack.c.l.b16 %v905
    %v973 = vunpack.c.l.b16 %v906
    %v974 = vunpack.c.l.b16 %v907
    %v975 = vunpack.c.l.b16 %v908
    %v976 = vunpack.c.l.b16 %v909
    %v977 = vunpack.c.l.b16 %v910
    %v978 = vunpack.c.l.b16 %v911
    %v979 = vunpack.c.l.b16 %v912
    %v980 = vunpack.c.l.b16 %v913
    %v981 = vunpack.c.l.b16 %v914
    %v982 = vunpack.c.l.b16 %v915
    %v983 = vunpack.c.l.b16 %v916
    %v984 = vunpack.c.l.b16 %v917
    %v985 = vunpack.c.l.b16 %v918
    %v986 = vunpack.c.l.b16 %v919
    %v987 = vunpack.c.l.b16 %v920
    %v988 = vunpack.c.l.b16 %v921
    %v989 = vpack.c.b16 %v958, %v957
    %v990 = vpack.c.b16 %v960, %v959
    %v991 = vpack.c.b16 %v962, %v961
    %v992 = vpack.c.b16 %v964, %v963
    %v993 = vpack.c.b16 %v966, %v965
    %v994 = vpack.c.b16 %v968, %v967
    %v995 = vpack.c.b16 %v970, %v969
    %v996 = vpack.c.b16 %v972, %v971
    %v997 = vpack.c.b16 %v974, %v973
    %v998 = vpack.c.b16 %v976, %v975
    %v999 = vpack.c.b16 %v978, %v977
    %v1000 = vpack.c.b16 %v980, %v979
    %v1001 = vpack.c.b16 %v982, %v981
    %v1002 = vpack.c.b16 %v984, %v983
    %v1003 = vpack.c.b16 %v986, %v985
    %v1004 = vpack.c.b16 %v988, %v987
    %v1007 = vunpack.c.l.b16 %v923
    %v1008 = vunpack.c.l.b16 %v924
    %v1009 = vpack.c.b16 %v1008, %v1007
    %s1010 = scalar_lea.vmem [#allocation2], 384
    %v1011 = vld [vmem:[%s1010] sm:$0xf]
    %v1012 = vld [vmem:[%s1010 + $0x4] sm:$0xf]
    %v1013 = vld [vmem:[%s1010 + $0x8] sm:$0xf]
    %v1014 = vld [vmem:[%s1010 + $0xc] sm:$0xf]
    %v1015 = vld [vmem:[%s1010 + $0x10] sm:$0xf]
    %v1016 = vld [vmem:[%s1010 + $0x14] sm:$0xf]
    %v1017 = vld [vmem:[%s1010 + $0x18] sm:$0xf]
    %v1018 = vld [vmem:[%s1010 + $0x1c] sm:$0xf]
    %v1019 = vld [vmem:[%s1010 + $0x20] sm:$0xf]
    %v1020 = vld [vmem:[%s1010 + $0x24] sm:$0xf]
    %v1021 = vld [vmem:[%s1010 + $0x28] sm:$0xf]
    %v1022 = vld [vmem:[%s1010 + $0x2c] sm:$0xf]
    %v1023 = vld [vmem:[%s1010 + $0x30] sm:$0xf]
    %v1024 = vld [vmem:[%s1010 + $0x34] sm:$0xf]
    %v1025 = vld [vmem:[%s1010 + $0x38] sm:$0xf]
    %v1026 = vld [vmem:[%s1010 + $0x3c] sm:$0xf]
    %v1027 = vld [vmem:[%s1010 + $0x40] sm:$0xf]
    %v1028 = vld [vmem:[%s1010 + $0x44] sm:$0xf]
    %v1029 = vld [vmem:[%s1010 + $0x48] sm:$0xf]
    %v1030 = vld [vmem:[%s1010 + $0x4c] sm:$0xf]
    %v1031 = vld [vmem:[%s1010 + $0x50] sm:$0xf]
    %v1032 = vld [vmem:[%s1010 + $0x54] sm:$0xf]
    %v1033 = vld [vmem:[%s1010 + $0x58] sm:$0xf]
    %v1034 = vld [vmem:[%s1010 + $0x5c] sm:$0xf]
    %v1035 = vld [vmem:[%s1010 + $0x60] sm:$0xf]
    %v1036 = vld [vmem:[%s1010 + $0x64] sm:$0xf]
    %v1037 = vld [vmem:[%s1010 + $0x68] sm:$0xf]
    %v1038 = vld [vmem:[%s1010 + $0x6c] sm:$0xf]
    %v1039 = vld [vmem:[%s1010 + $0x70] sm:$0xf]
    %v1040 = vld [vmem:[%s1010 + $0x74] sm:$0xf]
    %v1041 = vld [vmem:[%s1010 + $0x78] sm:$0xf]
    %v1042 = vld [vmem:[%s1010 + $0x7c] sm:$0xf]
    %s1043 = scalar_lea.vmem [#allocation3], 24
    %v1044 = vld [vmem:[%s1043] sm:$0xf]
    %v1045 = vld [vmem:[%s1043 + $0x4] sm:$0xf]
    %v1078 = vunpack.c.l.b16 %v1011
    %v1079 = vunpack.c.l.b16 %v1012
    %v1080 = vunpack.c.l.b16 %v1013
    %v1081 = vunpack.c.l.b16 %v1014
    %v1082 = vunpack.c.l.b16 %v1015
    %v1083 = vunpack.c.l.b16 %v1016
    %v1084 = vunpack.c.l.b16 %v1017
    %v1085 = vunpack.c.l.b16 %v1018
    %v1086 = vunpack.c.l.b16 %v1019
    %v1087 = vunpack.c.l.b16 %v1020
    %v1088 = vunpack.c.l.b16 %v1021
    %v1089 = vunpack.c.l.b16 %v1022
    %v1090 = vunpack.c.l.b16 %v1023
    %v1091 = vunpack.c.l.b16 %v1024
    %v1092 = vunpack.c.l.b16 %v1025
    %v1093 = vunpack.c.l.b16 %v1026
    %v1094 = vunpack.c.l.b16 %v1027
    %v1095 = vunpack.c.l.b16 %v1028
    %v1096 = vunpack.c.l.b16 %v1029
    %v1097 = vunpack.c.l.b16 %v1030
    %v1098 = vunpack.c.l.b16 %v1031
    %v1099 = vunpack.c.l.b16 %v1032
    %v1100 = vunpack.c.l.b16 %v1033
    %v1101 = vunpack.c.l.b16 %v1034
    %v1102 = vunpack.c.l.b16 %v1035
    %v1103 = vunpack.c.l.b16 %v1036
    %v1104 = vunpack.c.l.b16 %v1037
    %v1105 = vunpack.c.l.b16 %v1038
    %v1106 = vunpack.c.l.b16 %v1039
    %v1107 = vunpack.c.l.b16 %v1040
    %v1108 = vunpack.c.l.b16 %v1041
    %v1109 = vunpack.c.l.b16 %v1042
    %v1110 = vpack.c.b16 %v1079, %v1078
    %v1111 = vpack.c.b16 %v1081, %v1080
    %v1112 = vpack.c.b16 %v1083, %v1082
    %v1113 = vpack.c.b16 %v1085, %v1084
    %v1114 = vpack.c.b16 %v1087, %v1086
    %v1115 = vpack.c.b16 %v1089, %v1088
    %v1116 = vpack.c.b16 %v1091, %v1090
    %v1117 = vpack.c.b16 %v1093, %v1092
    %v1118 = vpack.c.b16 %v1095, %v1094
    %v1119 = vpack.c.b16 %v1097, %v1096
    %v1120 = vpack.c.b16 %v1099, %v1098
    %v1121 = vpack.c.b16 %v1101, %v1100
    %v1122 = vpack.c.b16 %v1103, %v1102
    %v1123 = vpack.c.b16 %v1105, %v1104
    %v1124 = vpack.c.b16 %v1107, %v1106
    %v1125 = vpack.c.b16 %v1109, %v1108
    %v1128 = vunpack.c.l.b16 %v1044
    %v1129 = vunpack.c.l.b16 %v1045
    %v1130 = vpack.c.b16 %v1129, %v1128
    %v1131 = vld [vmem:[%s2] sm:$0x3]
    %s1132 = scalar_lea.vmem %s2, 2
    %v1133 = vld [vmem:[%s1132] sm:$0x3]
    %vm1134 = vcmask 31744
    %v1136 = vsel %vm1134, %v868, 0
    %v1139 = vsel %vm1134, %v869, 0
    %v1142 = vsel %vm1134, %v870, 0
    %v1145 = vsel %vm1134, %v871, 0
    %v1148 = vsel %vm1134, %v872, 0
    %v1151 = vsel %vm1134, %v873, 0
    %v1154 = vsel %vm1134, %v874, 0
    %v1157 = vsel %vm1134, %v875, 0
    %v1160 = vsel %vm1134, %v876, 0
    %v1163 = vsel %vm1134, %v877, 0
    %v1166 = vsel %vm1134, %v878, 0
    %v1169 = vsel %vm1134, %v879, 0
    %v1172 = vsel %vm1134, %v880, 0
    %v1175 = vsel %vm1134, %v881, 0
    %v1178 = vsel %vm1134, %v882, 0
    %v1181 = vsel %vm1134, %v883, 0
    %vm1183 = vcmask 1041408
    %v1185 = vsel %vm1183, %v1133, 0
    %1187 = vmatprep.subr.bf16.mxu0 0
    %1188 = vmatpush1.bf16.msra.mxu0 %v1185
    %1189 = vmatprep.subr.bf16.mxu0 0
    %1190 = vmatpush1.bf16.msra.mxu0 0
    %1191 = vmatprep.subr.bf16.mxu0 0
    %1192 = vmatpush1.bf16.msra.mxu0 0
    %1193 = vmatprep.subr.bf16.mxu0 0
    %1194 = vmatpush1.bf16.msra.mxu0 0
    %1195 = vmatprep.subr.bf16.mxu0 0
    %1196 = vmatpush1.bf16.msra.mxu0 0
    %1197 = vmatprep.subr.bf16.mxu0 0
    %1198 = vmatpush1.bf16.msra.mxu0 0
    %1199 = vmatprep.subr.bf16.mxu0 0
    %1200 = vmatpush1.bf16.msra.mxu0 0
    %1201 = vmatprep.subr.bf16.mxu0 0
    %1202 = vmatpush1.bf16.msra.mxu0 0
    %1203 = vmatprep.subr.bf16.mxu0 0
    %1204 = vmatpush1.bf16.msra.mxu0 0
    %1205 = vmatprep.subr.bf16.mxu0 0
    %1206 = vmatpush1.bf16.msra.mxu0 0
    %1207 = vmatprep.subr.bf16.mxu0 0
    %1208 = vmatpush1.bf16.msra.mxu0 0
    %1209 = vmatprep.subr.bf16.mxu0 0
    %1210 = vmatpush1.bf16.msra.mxu0 0
    %1211 = vmatprep.subr.bf16.mxu0 0
    %1212 = vmatpush1.bf16.msra.mxu0 0
    %1213 = vmatprep.subr.bf16.mxu0 0
    %1214 = vmatpush1.bf16.msra.mxu0 0
    %1215 = vmatprep.subr.bf16.mxu0 0
    %1216 = vmatpush1.bf16.msra.mxu0 0
    %1217 = vmatprep.subr.bf16.mxu0 0
    %1218 = vmatpush1.bf16.msra.mxu0 0
    %1219 = vmatprep.mubr.bf16.mxu0 0
    %1220 = vmatmul.mubr.bf16.gmra.mrb[0].mxu0 %v1136
    %v1221 = vpop.f32.mrb[0].mxu0
    %v1222 = vadd.f32 0.0, %v1221
    %v1223 = vpop.f32.mrb[0].mxu0
    %v1224 = vpop.f32.mrb[0].mxu0
    %v1225 = vadd.f32 0.0, %v1224
    %v1226 = vpop.f32.mrb[0].mxu0
    %1227 = vmatprep.mubr.bf16.mxu0 0
    %1228 = vmatmul.mubr.bf16.gmra.mrb[0].mxu0 %v1139
    %v1229 = vpop.f32.mrb[0].mxu0
    %v1230 = vadd.f32 0.0, %v1229
    %v1231 = vpop.f32.mrb[0].mxu0
    %v1232 = vpop.f32.mrb[0].mxu0
    %v1233 = vadd.f32 0.0, %v1232
    %v1234 = vpop.f32.mrb[0].mxu0
    %1235 = vmatprep.mubr.bf16.mxu0 0
    %1236 = vmatmul.mubr.bf16.gmra.mrb[0].mxu0 %v1142
    %v1237 = vpop.f32.mrb[0].mxu0
    %v1238 = vadd.f32 0.0, %v1237
    %v1239 = vpop.f32.mrb[0].mxu0
    %v1240 = vpop.f32.mrb[0].mxu0
    %v1241 = vadd.f32 0.0, %v1240
    %v1242 = vpop.f32.mrb[0].mxu0
    %1243 = vmatprep.mubr.bf16.mxu0 0
    %1244 = vmatmul.mubr.bf16.gmra.mrb[0].mxu0 %v1145
    %v1245 = vpop.f32.mrb[0].mxu0
    %v1246 = vadd.f32 0.0, %v1245
    %v1247 = vpop.f32.mrb[0].mxu0
    %v1248 = vpop.f32.mrb[0].mxu0
    %v1249 = vadd.f32 0.0, %v1248
    %v1250 = vpop.f32.mrb[0].mxu0
    %1251 = vmatprep.mubr.bf16.mxu0 0
    %1252 = vmatmul.mubr.bf16.gmra.mrb[0].mxu0 %v1148
    %v1253 = vpop.f32.mrb[0].mxu0
    %v1254 = vadd.f32 0.0, %v1253
    %v1255 = vpop.f32.mrb[0].mxu0
    %v1256 = vpop.f32.mrb[0].mxu0
    %v1257 = vadd.f32 0.0, %v1256
    %v1258 = vpop.f32.mrb[0].mxu0
    %1259 = vmatprep.mubr.bf16.mxu0 0
    %1260 = vmatmul.mubr.bf16.gmra.mrb[0].mxu0 %v1151
    %v1261 = vpop.f32.mrb[0].mxu0
    %v1262 = vadd.f32 0.0, %v1261
    %v1263 = vpop.f32.mrb[0].mxu0
    %v1264 = vpop.f32.mrb[0].mxu0
    %v1265 = vadd.f32 0.0, %v1264
    %v1266 = vpop.f32.mrb[0].mxu0
    %1267 = vmatprep.mubr.bf16.mxu0 0
    %1268 = vmatmul.mubr.bf16.gmra.mrb[0].mxu0 %v1154
    %v1269 = vpop.f32.mrb[0].mxu0
    %v1270 = vadd.f32 0.0, %v1269
    %v1271 = vpop.f32.mrb[0].mxu0
    %v1272 = vpop.f32.mrb[0].mxu0
    %v1273 = vadd.f32 0.0, %v1272
    %v1274 = vpop.f32.mrb[0].mxu0
    %1275 = vmatprep.mubr.bf16.mxu0 0
    %1276 = vmatmul.mubr.bf16.gmra.mrb[0].mxu0 %v1157
    %v1277 = vpop.f32.mrb[0].mxu0
    %v1278 = vadd.f32 0.0, %v1277
    %v1279 = vpop.f32.mrb[0].mxu0
    %v1280 = vpop.f32.mrb[0].mxu0
    %v1281 = vadd.f32 0.0, %v1280
    %v1282 = vpop.f32.mrb[0].mxu0
    %1283 = vmatprep.mubr.bf16.mxu0 0
    %1284 = vmatmul.mubr.bf16.gmra.mrb[0].mxu0 %v1160
    %v1285 = vpop.f32.mrb[0].mxu0
    %v1286 = vadd.f32 0.0, %v1285
    %v1287 = vpop.f32.mrb[0].mxu0
    %v1288 = vpop.f32.mrb[0].mxu0
    %v1289 = vadd.f32 0.0, %v1288
    %v1290 = vpop.f32.mrb[0].mxu0
    %1291 = vmatprep.mubr.bf16.mxu0 0
    %1292 = vmatmul.mubr.bf16.gmra.mrb[0].mxu0 %v1163
    %v1293 = vpop.f32.mrb[0].mxu0
    %v1294 = vadd.f32 0.0, %v1293
    %v1295 = vpop.f32.mrb[0].mxu0
    %v1296 = vpop.f32.mrb[0].mxu0
    %v1297 = vadd.f32 0.0, %v1296
    %v1298 = vpop.f32.mrb[0].mxu0
    %1299 = vmatprep.mubr.bf16.mxu0 0
    %1300 = vmatmul.mubr.bf16.gmra.mrb[0].mxu0 %v1166
    %v1301 = vpop.f32.mrb[0].mxu0
    %v1302 = vadd.f32 0.0, %v1301
    %v1303 = vpop.f32.mrb[0].mxu0
    %v1304 = vpop.f32.mrb[0].mxu0
    %v1305 = vadd.f32 0.0, %v1304
    %v1306 = vpop.f32.mrb[0].mxu0
    %1307 = vmatprep.mubr.bf16.mxu0 0
    %1308 = vmatmul.mubr.bf16.gmra.mrb[0].mxu0 %v1169
    %v1309 = vpop.f32.mrb[0].mxu0
    %v1310 = vadd.f32 0.0, %v1309
    %v1311 = vpop.f32.mrb[0].mxu0
    %v1312 = vpop.f32.mrb[0].mxu0
    %v1313 = vadd.f32 0.0, %v1312
    %v1314 = vpop.f32.mrb[0].mxu0
    %1315 = vmatprep.mubr.bf16.mxu0 0
    %1316 = vmatmul.mubr.bf16.gmra.mrb[0].mxu0 %v1172
    %v1317 = vpop.f32.mrb[0].mxu0
    %v1318 = vadd.f32 0.0, %v1317
    %v1319 = vpop.f32.mrb[0].mxu0
    %v1320 = vpop.f32.mrb[0].mxu0
    %v1321 = vadd.f32 0.0, %v1320
    %v1322 = vpop.f32.mrb[0].mxu0
    %1323 = vmatprep.mubr.bf16.mxu0 0
    %1324 = vmatmul.mubr.bf16.gmra.mrb[0].mxu0 %v1175
    %v1325 = vpop.f32.mrb[0].mxu0
    %v1326 = vadd.f32 0.0, %v1325
    %v1327 = vpop.f32.mrb[0].mxu0
    %v1328 = vpop.f32.mrb[0].mxu0
    %v1329 = vadd.f32 0.0, %v1328
    %v1330 = vpop.f32.mrb[0].mxu0
    %1331 = vmatprep.mubr.bf16.mxu0 0
    %1332 = vmatmul.mubr.bf16.gmra.mrb[0].mxu0 %v1178
    %v1333 = vpop.f32.mrb[0].mxu0
    %v1334 = vadd.f32 0.0, %v1333
    %v1335 = vpop.f32.mrb[0].mxu0
    %v1336 = vpop.f32.mrb[0].mxu0
    %v1337 = vadd.f32 0.0, %v1336
    %v1338 = vpop.f32.mrb[0].mxu0
    %1339 = vmatprep.mubr.bf16.mxu0 0
    %1340 = vmatmul.mubr.bf16.gmra.mrb[0].mxu0 %v1181
    %v1341 = vpop.f32.mrb[0].mxu0
    %v1342 = vadd.f32 0.0, %v1341
    %v1343 = vpop.f32.mrb[0].mxu0
    %v1344 = vpop.f32.mrb[0].mxu0
    %v1345 = vadd.f32 0.0, %v1344
    %v1346 = vpop.f32.mrb[0].mxu0
    %1347 = vdwg.mxu0
    %v1349 = vsel %vm1134, %v747, 0
    %v1352 = vsel %vm1134, %v748, 0
    %v1355 = vsel %vm1134, %v749, 0
    %v1358 = vsel %vm1134, %v750, 0
    %v1361 = vsel %vm1134, %v751, 0
    %v1364 = vsel %vm1134, %v752, 0
    %v1367 = vsel %vm1134, %v753, 0
    %v1370 = vsel %vm1134, %v754, 0
    %v1373 = vsel %vm1134, %v755, 0
    %v1376 = vsel %vm1134, %v756, 0
    %v1379 = vsel %vm1134, %v757, 0
    %v1382 = vsel %vm1134, %v758, 0
    %v1385 = vsel %vm1134, %v759, 0
    %v1388 = vsel %vm1134, %v760, 0
    %v1391 = vsel %vm1134, %v761, 0
    %v1394 = vsel %vm1134, %v762, 0
    %v1397 = vsel %vm1183, %v1131, 0
    %1399 = vmatprep.subr.bf16.mxu0 0
    %1400 = vmatpush1.bf16.msra.mxu0 %v1397
    %1401 = vmatprep.subr.bf16.mxu0 0
    %1402 = vmatpush1.bf16.msra.mxu0 0
    %1403 = vmatprep.subr.bf16.mxu0 0
    %1404 = vmatpush1.bf16.msra.mxu0 0
    %1405 = vmatprep.subr.bf16.mxu0 0
    %1406 = vmatpush1.bf16.msra.mxu0 0
    %1407 = vmatprep.subr.bf16.mxu0 0
    %1408 = vmatpush1.bf16.msra.mxu0 0
    %1409 = vmatprep.subr.bf16.mxu0 0
    %1410 = vmatpush1.bf16.msra.mxu0 0
    %1411 = vmatprep.subr.bf16.mxu0 0
    %1412 = vmatpush1.bf16.msra.mxu0 0
    %1413 = vmatprep.subr.bf16.mxu0 0
    %1414 = vmatpush1.bf16.msra.mxu0 0
    %1415 = vmatprep.subr.bf16.mxu0 0
    %1416 = vmatpush1.bf16.msra.mxu0 0
    %1417 = vmatprep.subr.bf16.mxu0 0
    %1418 = vmatpush1.bf16.msra.mxu0 0
    %1419 = vmatprep.subr.bf16.mxu0 0
    %1420 = vmatpush1.bf16.msra.mxu0 0
    %1421 = vmatprep.subr.bf16.mxu0 0
    %1422 = vmatpush1.bf16.msra.mxu0 0
    %1423 = vmatprep.subr.bf16.mxu0 0
    %1424 = vmatpush1.bf16.msra.mxu0 0
    %1425 = vmatprep.subr.bf16.mxu0 0
    %1426 = vmatpush1.bf16.msra.mxu0 0
    %1427 = vmatprep.subr.bf16.mxu0 0
    %1428 = vmatpush1.bf16.msra.mxu0 0
    %1429 = vmatprep.subr.bf16.mxu0 0
    %1430 = vmatpush1.bf16.msra.mxu0 0
    %1431 = vmatprep.mubr.bf16.mxu0 0
    %1432 = vmatmul.mubr.bf16.gmra.mrb[0].mxu0 %v1349
    %v1433 = vpop.f32.mrb[0].mxu0
    %v1434 = vadd.f32 %v1222, %v1433
    %v1435 = vpop.f32.mrb[0].mxu0
    %v1436 = vpop.f32.mrb[0].mxu0
    %v1437 = vadd.f32 %v1225, %v1436
    %v1438 = vpop.f32.mrb[0].mxu0
    %1439 = vmatprep.mubr.bf16.mxu0 0
    %1440 = vmatmul.mubr.bf16.gmra.mrb[0].mxu0 %v1352
    %v1441 = vpop.f32.mrb[0].mxu0
    %v1442 = vadd.f32 %v1230, %v1441
    %v1443 = vpop.f32.mrb[0].mxu0
    %v1444 = vpop.f32.mrb[0].mxu0
    %v1445 = vadd.f32 %v1233, %v1444
    %v1446 = vpop.f32.mrb[0].mxu0
    %1447 = vmatprep.mubr.bf16.mxu0 0
    %1448 = vmatmul.mubr.bf16.gmra.mrb[0].mxu0 %v1355
    %v1449 = vpop.f32.mrb[0].mxu0
    %v1450 = vadd.f32 %v1238, %v1449
    %v1451 = vpop.f32.mrb[0].mxu0
    %v1452 = vpop.f32.mrb[0].mxu0
    %v1453 = vadd.f32 %v1241, %v1452
    %v1454 = vpop.f32.mrb[0].mxu0
    %1455 = vmatprep.mubr.bf16.mxu0 0
    %1456 = vmatmul.mubr.bf16.gmra.mrb[0].mxu0 %v1358
    %v1457 = vpop.f32.mrb[0].mxu0
    %v1458 = vadd.f32 %v1246, %v1457
    %v1459 = vpop.f32.mrb[0].mxu0
    %v1460 = vpop.f32.mrb[0].mxu0
    %v1461 = vadd.f32 %v1249, %v1460
    %v1462 = vpop.f32.mrb[0].mxu0
    %1463 = vmatprep.mubr.bf16.mxu0 0
    %1464 = vmatmul.mubr.bf16.gmra.mrb[0].mxu0 %v1361
    %v1465 = vpop.f32.mrb[0].mxu0
    %v1466 = vadd.f32 %v1254, %v1465
    %v1467 = vpop.f32.mrb[0].mxu0
    %v1468 = vpop.f32.mrb[0].mxu0
    %v1469 = vadd.f32 %v1257, %v1468
    %v1470 = vpop.f32.mrb[0].mxu0
    %1471 = vmatprep.mubr.bf16.mxu0 0
    %1472 = vmatmul.mubr.bf16.gmra.mrb[0].mxu0 %v1364
    %v1473 = vpop.f32.mrb[0].mxu0
    %v1474 = vadd.f32 %v1262, %v1473
    %v1475 = vpop.f32.mrb[0].mxu0
    %v1476 = vpop.f32.mrb[0].mxu0
    %v1477 = vadd.f32 %v1265, %v1476
    %v1478 = vpop.f32.mrb[0].mxu0
    %1479 = vmatprep.mubr.bf16.mxu0 0
    %1480 = vmatmul.mubr.bf16.gmra.mrb[0].mxu0 %v1367
    %v1481 = vpop.f32.mrb[0].mxu0
    %v1482 = vadd.f32 %v1270, %v1481
    %v1483 = vpop.f32.mrb[0].mxu0
    %v1484 = vpop.f32.mrb[0].mxu0
    %v1485 = vadd.f32 %v1273, %v1484
    %v1486 = vpop.f32.mrb[0].mxu0
    %1487 = vmatprep.mubr.bf16.mxu0 0
    %1488 = vmatmul.mubr.bf16.gmra.mrb[0].mxu0 %v1370
    %v1489 = vpop.f32.mrb[0].mxu0
    %v1490 = vadd.f32 %v1278, %v1489
    %v1491 = vpop.f32.mrb[0].mxu0
    %v1492 = vpop.f32.mrb[0].mxu0
    %v1493 = vadd.f32 %v1281, %v1492
    %v1494 = vpop.f32.mrb[0].mxu0
    %1495 = vmatprep.mubr.bf16.mxu0 0
    %1496 = vmatmul.mubr.bf16.gmra.mrb[0].mxu0 %v1373
    %v1497 = vpop.f32.mrb[0].mxu0
    %v1498 = vadd.f32 %v1286, %v1497
    %v1499 = vpop.f32.mrb[0].mxu0
    %v1500 = vpop.f32.mrb[0].mxu0
    %v1501 = vadd.f32 %v1289, %v1500
    %v1502 = vpop.f32.mrb[0].mxu0
    %1503 = vmatprep.mubr.bf16.mxu0 0
    %1504 = vmatmul.mubr.bf16.gmra.mrb[0].mxu0 %v1376
    %v1505 = vpop.f32.mrb[0].mxu0
    %v1506 = vadd.f32 %v1294, %v1505
    %v1507 = vpop.f32.mrb[0].mxu0
    %v1508 = vpop.f32.mrb[0].mxu0
    %v1509 = vadd.f32 %v1297, %v1508
    %v1510 = vpop.f32.mrb[0].mxu0
    %1511 = vmatprep.mubr.bf16.mxu0 0
    %1512 = vmatmul.mubr.bf16.gmra.mrb[0].mxu0 %v1379
    %v1513 = vpop.f32.mrb[0].mxu0
    %v1514 = vadd.f32 %v1302, %v1513
    %v1515 = vpop.f32.mrb[0].mxu0
    %v1516 = vpop.f32.mrb[0].mxu0
    %v1517 = vadd.f32 %v1305, %v1516
    %v1518 = vpop.f32.mrb[0].mxu0
    %1519 = vmatprep.mubr.bf16.mxu0 0
    %1520 = vmatmul.mubr.bf16.gmra.mrb[0].mxu0 %v1382
    %v1521 = vpop.f32.mrb[0].mxu0
    %v1522 = vadd.f32 %v1310, %v1521
    %v1523 = vpop.f32.mrb[0].mxu0
    %v1524 = vpop.f32.mrb[0].mxu0
    %v1525 = vadd.f32 %v1313, %v1524
    %v1526 = vpop.f32.mrb[0].mxu0
    %1527 = vmatprep.mubr.bf16.mxu0 0
    %1528 = vmatmul.mubr.bf16.gmra.mrb[0].mxu0 %v1385
    %v1529 = vpop.f32.mrb[0].mxu0
    %v1530 = vadd.f32 %v1318, %v1529
    %v1531 = vpop.f32.mrb[0].mxu0
    %v1532 = vpop.f32.mrb[0].mxu0
    %v1533 = vadd.f32 %v1321, %v1532
    %v1534 = vpop.f32.mrb[0].mxu0
    %1535 = vmatprep.mubr.bf16.mxu0 0
    %1536 = vmatmul.mubr.bf16.gmra.mrb[0].mxu0 %v1388
    %v1537 = vpop.f32.mrb[0].mxu0
    %v1538 = vadd.f32 %v1326, %v1537
    %v1539 = vpop.f32.mrb[0].mxu0
    %v1540 = vpop.f32.mrb[0].mxu0
    %v1541 = vadd.f32 %v1329, %v1540
    %v1542 = vpop.f32.mrb[0].mxu0
    %1543 = vmatprep.mubr.bf16.mxu0 0
    %1544 = vmatmul.mubr.bf16.gmra.mrb[0].mxu0 %v1391
    %v1545 = vpop.f32.mrb[0].mxu0
    %v1546 = vadd.f32 %v1334, %v1545
    %v1547 = vpop.f32.mrb[0].mxu0
    %v1548 = vpop.f32.mrb[0].mxu0
    %v1549 = vadd.f32 %v1337, %v1548
    %v1550 = vpop.f32.mrb[0].mxu0
    %1551 = vmatprep.mubr.bf16.mxu0 0
    %1552 = vmatmul.mubr.bf16.gmra.mrb[0].mxu0 %v1394
    %v1553 = vpop.f32.mrb[0].mxu0
    %v1554 = vadd.f32 %v1342, %v1553
    %v1555 = vpop.f32.mrb[0].mxu0
    %v1556 = vpop.f32.mrb[0].mxu0
    %v1557 = vadd.f32 %v1345, %v1556
    %v1558 = vpop.f32.mrb[0].mxu0
    %1559 = vdwg.mxu0
    %s1560 = scalar_lea.vmem %s2, 4
    %v1561 = vld [vmem:[%s1560] sm:$0x3]
    %vm1562 = vsmask.f32 7424
    %v1563 = vshrl.u32 %v747, 16
    %v1565 = vshll.u32 %v747, 16
    %v1567 = vrot.slane %v1565, 1
    %v1568 = vor.u32 %v1563, %v1567
    %v1569 = vshll.u32 %v748, 16
    %v1571 = vrot.slane %v1569, 1
    %v1572 = vsel %vm1562, %v1568, %v1571
    %v1573 = vshrl.u32 %v748, 16
    %v1575 = vor.u32 %v1573, %v1571
    %v1576 = vshll.u32 %v749, 16
    %v1578 = vrot.slane %v1576, 1
    %v1579 = vsel %vm1562, %v1575, %v1578
    %v1580 = vshrl.u32 %v749, 16
    %v1582 = vor.u32 %v1580, %v1578
    %v1583 = vshll.u32 %v750, 16
    %v1585 = vrot.slane %v1583, 1
    %v1586 = vsel %vm1562, %v1582, %v1585
    %v1587 = vshrl.u32 %v750, 16
    %v1589 = vor.u32 %v1587, %v1585
    %v1590 = vshll.u32 %v751, 16
    %v1592 = vrot.slane %v1590, 1
    %v1593 = vsel %vm1562, %v1589, %v1592
    %v1594 = vshrl.u32 %v751, 16
    %v1596 = vor.u32 %v1594, %v1592
    %v1597 = vshll.u32 %v752, 16
    %v1599 = vrot.slane %v1597, 1
    %v1600 = vsel %vm1562, %v1596, %v1599
    %v1601 = vshrl.u32 %v752, 16
    %v1603 = vor.u32 %v1601, %v1599
    %v1604 = vshll.u32 %v753, 16
    %v1606 = vrot.slane %v1604, 1
    %v1607 = vsel %vm1562, %v1603, %v1606
    %v1608 = vshrl.u32 %v753, 16
    %v1610 = vor.u32 %v1608, %v1606
    %v1611 = vshll.u32 %v754, 16
    %v1613 = vrot.slane %v1611, 1
    %v1614 = vsel %vm1562, %v1610, %v1613
    %v1615 = vshrl.u32 %v754, 16
    %v1617 = vor.u32 %v1615, %v1613
    %v1618 = vshll.u32 %v755, 16
    %v1620 = vrot.slane %v1618, 1
    %v1621 = vsel %vm1562, %v1617, %v1620
    %v1622 = vshrl.u32 %v755, 16
    %v1624 = vor.u32 %v1622, %v1620
    %v1625 = vshll.u32 %v756, 16
    %v1627 = vrot.slane %v1625, 1
    %v1628 = vsel %vm1562, %v1624, %v1627
    %v1629 = vshrl.u32 %v756, 16
    %v1631 = vor.u32 %v1629, %v1627
    %v1632 = vshll.u32 %v757, 16
    %v1634 = vrot.slane %v1632, 1
    %v1635 = vsel %vm1562, %v1631, %v1634
    %v1636 = vshrl.u32 %v757, 16
    %v1638 = vor.u32 %v1636, %v1634
    %v1639 = vshll.u32 %v758, 16
    %v1641 = vrot.slane %v1639, 1
    %v1642 = vsel %vm1562, %v1638, %v1641
    %v1643 = vshrl.u32 %v758, 16
    %v1645 = vor.u32 %v1643, %v1641
    %v1646 = vshll.u32 %v759, 16
    %v1648 = vrot.slane %v1646, 1
    %v1649 = vsel %vm1562, %v1645, %v1648
    %v1650 = vshrl.u32 %v759, 16
    %v1652 = vor.u32 %v1650, %v1648
    %v1653 = vshll.u32 %v760, 16
    %v1655 = vrot.slane %v1653, 1
    %v1656 = vsel %vm1562, %v1652, %v1655
    %v1657 = vshrl.u32 %v760, 16
    %v1659 = vor.u32 %v1657, %v1655
    %v1660 = vshll.u32 %v761, 16
    %v1662 = vrot.slane %v1660, 1
    %v1663 = vsel %vm1562, %v1659, %v1662
    %v1664 = vshrl.u32 %v761, 16
    %v1666 = vor.u32 %v1664, %v1662
    %v1667 = vshll.u32 %v762, 16
    %v1669 = vrot.slane %v1667, 1
    %v1670 = vsel %vm1562, %v1666, %v1669
    %v1671 = vshrl.u32 %v762, 16
    %v1673 = vor.u32 %v1671, %v1669
    %v1675 = vshll.u32 %v767, 16
    %v1677 = vrot.slane %v1675, 1
    %v1678 = vsel %vm1562, %v1673, %v1677
    %v1680 = vsel %vm1134, %v1572, 0
    %v1683 = vsel %vm1134, %v1579, 0
    %v1686 = vsel %vm1134, %v1586, 0
    %v1689 = vsel %vm1134, %v1593, 0
    %v1692 = vsel %vm1134, %v1600, 0
    %v1695 = vsel %vm1134, %v1607, 0
    %v1698 = vsel %vm1134, %v1614, 0
    %v1701 = vsel %vm1134, %v1621, 0
    %v1704 = vsel %vm1134, %v1628, 0
    %v1707 = vsel %vm1134, %v1635, 0
    %v1710 = vsel %vm1134, %v1642, 0
    %v1713 = vsel %vm1134, %v1649, 0
    %v1716 = vsel %vm1134, %v1656, 0
    %v1719 = vsel %vm1134, %v1663, 0
    %v1722 = vsel %vm1134, %v1670, 0
    %v1725 = vsel %vm1134, %v1678, 0
    %v1728 = vsel %vm1183, %v1561, 0
    %1730 = vmatprep.subr.bf16.mxu0 0
    %1731 = vmatpush1.bf16.msra.mxu0 %v1728
    %1732 = vmatprep.subr.bf16.mxu0 0
    %1733 = vmatpush1.bf16.msra.mxu0 0
    %1734 = vmatprep.subr.bf16.mxu0 0
    %1735 = vmatpush1.bf16.msra.mxu0 0
    %1736 = vmatprep.subr.bf16.mxu0 0
    %1737 = vmatpush1.bf16.msra.mxu0 0
    %1738 = vmatprep.subr.bf16.mxu0 0
    %1739 = vmatpush1.bf16.msra.mxu0 0
    %1740 = vmatprep.subr.bf16.mxu0 0
    %1741 = vmatpush1.bf16.msra.mxu0 0
    %1742 = vmatprep.subr.bf16.mxu0 0
    %1743 = vmatpush1.bf16.msra.mxu0 0
    %1744 = vmatprep.subr.bf16.mxu0 0
    %1745 = vmatpush1.bf16.msra.mxu0 0
    %1746 = vmatprep.subr.bf16.mxu0 0
    %1747 = vmatpush1.bf16.msra.mxu0 0
    %1748 = vmatprep.subr.bf16.mxu0 0
    %1749 = vmatpush1.bf16.msra.mxu0 0
    %1750 = vmatprep.subr.bf16.mxu0 0
    %1751 = vmatpush1.bf16.msra.mxu0 0
    %1752 = vmatprep.subr.bf16.mxu0 0
    %1753 = vmatpush1.bf16.msra.mxu0 0
    %1754 = vmatprep.subr.bf16.mxu0 0
    %1755 = vmatpush1.bf16.msra.mxu0 0
    %1756 = vmatprep.subr.bf16.mxu0 0
    %1757 = vmatpush1.bf16.msra.mxu0 0
    %1758 = vmatprep.subr.bf16.mxu0 0
    %1759 = vmatpush1.bf16.msra.mxu0 0
    %1760 = vmatprep.subr.bf16.mxu0 0
    %1761 = vmatpush1.bf16.msra.mxu0 0
    %1762 = vmatprep.mubr.bf16.mxu0 0
    %1763 = vmatmul.mubr.bf16.gmra.mrb[0].mxu0 %v1680
    %v1764 = vpop.f32.mrb[0].mxu0
    %v1765 = vadd.f32 0.0, %v1764
    %v1766 = vpop.f32.mrb[0].mxu0
    %v1767 = vpop.f32.mrb[0].mxu0
    %v1768 = vadd.f32 0.0, %v1767
    %v1769 = vpop.f32.mrb[0].mxu0
    %1770 = vmatprep.mubr.bf16.mxu0 0
    %1771 = vmatmul.mubr.bf16.gmra.mrb[0].mxu0 %v1683
    %v1772 = vpop.f32.mrb[0].mxu0
    %v1773 = vadd.f32 0.0, %v1772
    %v1774 = vpop.f32.mrb[0].mxu0
    %v1775 = vpop.f32.mrb[0].mxu0
    %v1776 = vadd.f32 0.0, %v1775
    %v1777 = vpop.f32.mrb[0].mxu0
    %1778 = vmatprep.mubr.bf16.mxu0 0
    %1779 = vmatmul.mubr.bf16.gmra.mrb[0].mxu0 %v1686
    %v1780 = vpop.f32.mrb[0].mxu0
    %v1781 = vadd.f32 0.0, %v1780
    %v1782 = vpop.f32.mrb[0].mxu0
    %v1783 = vpop.f32.mrb[0].mxu0
    %v1784 = vadd.f32 0.0, %v1783
    %v1785 = vpop.f32.mrb[0].mxu0
    %1786 = vmatprep.mubr.bf16.mxu0 0
    %1787 = vmatmul.mubr.bf16.gmra.mrb[0].mxu0 %v1689
    %v1788 = vpop.f32.mrb[0].mxu0
    %v1789 = vadd.f32 0.0, %v1788
    %v1790 = vpop.f32.mrb[0].mxu0
    %v1791 = vpop.f32.mrb[0].mxu0
    %v1792 = vadd.f32 0.0, %v1791
    %v1793 = vpop.f32.mrb[0].mxu0
    %1794 = vmatprep.mubr.bf16.mxu0 0
    %1795 = vmatmul.mubr.bf16.gmra.mrb[0].mxu0 %v1692
    %v1796 = vpop.f32.mrb[0].mxu0
    %v1797 = vadd.f32 0.0, %v1796
    %v1798 = vpop.f32.mrb[0].mxu0
    %v1799 = vpop.f32.mrb[0].mxu0
    %v1800 = vadd.f32 0.0, %v1799
    %v1801 = vpop.f32.mrb[0].mxu0
    %1802 = vmatprep.mubr.bf16.mxu0 0
    %1803 = vmatmul.mubr.bf16.gmra.mrb[0].mxu0 %v1695
    %v1804 = vpop.f32.mrb[0].mxu0
    %v1805 = vadd.f32 0.0, %v1804
    %v1806 = vpop.f32.mrb[0].mxu0
    %v1807 = vpop.f32.mrb[0].mxu0
    %v1808 = vadd.f32 0.0, %v1807
    %v1809 = vpop.f32.mrb[0].mxu0
    %1810 = vmatprep.mubr.bf16.mxu0 0
    %1811 = vmatmul.mubr.bf16.gmra.mrb[0].mxu0 %v1698
    %v1812 = vpop.f32.mrb[0].mxu0
    %v1813 = vadd.f32 0.0, %v1812
    %v1814 = vpop.f32.mrb[0].mxu0
    %v1815 = vpop.f32.mrb[0].mxu0
    %v1816 = vadd.f32 0.0, %v1815
    %v1817 = vpop.f32.mrb[0].mxu0
    %1818 = vmatprep.mubr.bf16.mxu0 0
    %1819 = vmatmul.mubr.bf16.gmra.mrb[0].mxu0 %v1701
    %v1820 = vpop.f32.mrb[0].mxu0
    %v1821 = vadd.f32 0.0, %v1820
    %v1822 = vpop.f32.mrb[0].mxu0
    %v1823 = vpop.f32.mrb[0].mxu0
    %v1824 = vadd.f32 0.0, %v1823
    %v1825 = vpop.f32.mrb[0].mxu0
    %1826 = vmatprep.mubr.bf16.mxu0 0
    %1827 = vmatmul.mubr.bf16.gmra.mrb[0].mxu0 %v1704
    %v1828 = vpop.f32.mrb[0].mxu0
    %v1829 = vadd.f32 0.0, %v1828
    %v1830 = vpop.f32.mrb[0].mxu0
    %v1831 = vpop.f32.mrb[0].mxu0
    %v1832 = vadd.f32 0.0, %v1831
    %v1833 = vpop.f32.mrb[0].mxu0
    %1834 = vmatprep.mubr.bf16.mxu0 0
    %1835 = vmatmul.mubr.bf16.gmra.mrb[0].mxu0 %v1707
    %v1836 = vpop.f32.mrb[0].mxu0
    %v1837 = vadd.f32 0.0, %v1836
    %v1838 = vpop.f32.mrb[0].mxu0
    %v1839 = vpop.f32.mrb[0].mxu0
    %v1840 = vadd.f32 0.0, %v1839
    %v1841 = vpop.f32.mrb[0].mxu0
    %1842 = vmatprep.mubr.bf16.mxu0 0
    %1843 = vmatmul.mubr.bf16.gmra.mrb[0].mxu0 %v1710
    %v1844 = vpop.f32.mrb[0].mxu0
    %v1845 = vadd.f32 0.0, %v1844
    %v1846 = vpop.f32.mrb[0].mxu0
    %v1847 = vpop.f32.mrb[0].mxu0
    %v1848 = vadd.f32 0.0, %v1847
    %v1849 = vpop.f32.mrb[0].mxu0
    %1850 = vmatprep.mubr.bf16.mxu0 0
    %1851 = vmatmul.mubr.bf16.gmra.mrb[0].mxu0 %v1713
    %v1852 = vpop.f32.mrb[0].mxu0
    %v1853 = vadd.f32 0.0, %v1852
    %v1854 = vpop.f32.mrb[0].mxu0
    %v1855 = vpop.f32.mrb[0].mxu0
    %v1856 = vadd.f32 0.0, %v1855
    %v1857 = vpop.f32.mrb[0].mxu0
    %1858 = vmatprep.mubr.bf16.mxu0 0
    %1859 = vmatmul.mubr.bf16.gmra.mrb[0].mxu0 %v1716
    %v1860 = vpop.f32.mrb[0].mxu0
    %v1861 = vadd.f32 0.0, %v1860
    %v1862 = vpop.f32.mrb[0].mxu0
    %v1863 = vpop.f32.mrb[0].mxu0
    %v1864 = vadd.f32 0.0, %v1863
    %v1865 = vpop.f32.mrb[0].mxu0
    %1866 = vmatprep.mubr.bf16.mxu0 0
    %1867 = vmatmul.mubr.bf16.gmra.mrb[0].mxu0 %v1719
    %v1868 = vpop.f32.mrb[0].mxu0
    %v1869 = vadd.f32 0.0, %v1868
    %v1870 = vpop.f32.mrb[0].mxu0
    %v1871 = vpop.f32.mrb[0].mxu0
    %v1872 = vadd.f32 0.0, %v1871
    %v1873 = vpop.f32.mrb[0].mxu0
    %1874 = vmatprep.mubr.bf16.mxu0 0
    %1875 = vmatmul.mubr.bf16.gmra.mrb[0].mxu0 %v1722
    %v1876 = vpop.f32.mrb[0].mxu0
    %v1877 = vadd.f32 0.0, %v1876
    %v1878 = vpop.f32.mrb[0].mxu0
    %v1879 = vpop.f32.mrb[0].mxu0
    %v1880 = vadd.f32 0.0, %v1879
    %v1881 = vpop.f32.mrb[0].mxu0
    %1882 = vmatprep.mubr.bf16.mxu0 0
    %1883 = vmatmul.mubr.bf16.gmra.mrb[0].mxu0 %v1725
    %v1884 = vpop.f32.mrb[0].mxu0
    %v1885 = vadd.f32 0.0, %v1884
    %v1886 = vpop.f32.mrb[0].mxu0
    %v1887 = vpop.f32.mrb[0].mxu0
    %v1888 = vadd.f32 0.0, %v1887
    %v1889 = vpop.f32.mrb[0].mxu0
    %1890 = vdwg.mxu0
    %v1891 = vadd.f32 %v1434, %v1765
    %v1892 = vadd.f32 %v1437, %v1768
    %v1893 = vadd.f32 %v1442, %v1773
    %v1894 = vadd.f32 %v1445, %v1776
    %v1895 = vadd.f32 %v1450, %v1781
    %v1896 = vadd.f32 %v1453, %v1784
    %v1897 = vadd.f32 %v1458, %v1789
    %v1898 = vadd.f32 %v1461, %v1792
    %v1899 = vadd.f32 %v1466, %v1797
    %v1900 = vadd.f32 %v1469, %v1800
    %v1901 = vadd.f32 %v1474, %v1805
    %v1902 = vadd.f32 %v1477, %v1808
    %v1903 = vadd.f32 %v1482, %v1813
    %v1904 = vadd.f32 %v1485, %v1816
    %v1905 = vadd.f32 %v1490, %v1821
    %v1906 = vadd.f32 %v1493, %v1824
    %v1907 = vadd.f32 %v1498, %v1829
    %v1908 = vadd.f32 %v1501, %v1832
    %v1909 = vadd.f32 %v1506, %v1837
    %v1910 = vadd.f32 %v1509, %v1840
    %v1911 = vadd.f32 %v1514, %v1845
    %v1912 = vadd.f32 %v1517, %v1848
    %v1913 = vadd.f32 %v1522, %v1853
    %v1914 = vadd.f32 %v1525, %v1856
    %v1915 = vadd.f32 %v1530, %v1861
    %v1916 = vadd.f32 %v1533, %v1864
    %v1917 = vadd.f32 %v1538, %v1869
    %v1918 = vadd.f32 %v1541, %v1872
    %v1919 = vadd.f32 %v1546, %v1877
    %v1920 = vadd.f32 %v1549, %v1880
    %v1921 = vadd.f32 %v1554, %v1885
    %v1922 = vadd.f32 %v1557, %v1888
    %s1923 = scalar_lea.vmem %s2, 6
    %v1924 = vld [vmem:[%s1923] sm:$0x3]
    %v1925 = vshrl.u32 %v868, 16
    %v1927 = vshll.u32 %v868, 16
    %v1929 = vrot.slane %v1927, 1
    %v1930 = vor.u32 %v1925, %v1929
    %v1931 = vshll.u32 %v869, 16
    %v1933 = vrot.slane %v1931, 1
    %v1934 = vsel %vm1562, %v1930, %v1933
    %v1935 = vshrl.u32 %v869, 16
    %v1937 = vor.u32 %v1935, %v1933
    %v1938 = vshll.u32 %v870, 16
    %v1940 = vrot.slane %v1938, 1
    %v1941 = vsel %vm1562, %v1937, %v1940
    %v1942 = vshrl.u32 %v870, 16
    %v1944 = vor.u32 %v1942, %v1940
    %v1945 = vshll.u32 %v871, 16
    %v1947 = vrot.slane %v1945, 1
    %v1948 = vsel %vm1562, %v1944, %v1947
    %v1949 = vshrl.u32 %v871, 16
    %v1951 = vor.u32 %v1949, %v1947
    %v1952 = vshll.u32 %v872, 16
    %v1954 = vrot.slane %v1952, 1
    %v1955 = vsel %vm1562, %v1951, %v1954
    %v1956 = vshrl.u32 %v872, 16
    %v1958 = vor.u32 %v1956, %v1954
    %v1959 = vshll.u32 %v873, 16
    %v1961 = vrot.slane %v1959, 1
    %v1962 = vsel %vm1562, %v1958, %v1961
    %v1963 = vshrl.u32 %v873, 16
    %v1965 = vor.u32 %v1963, %v1961
    %v1966 = vshll.u32 %v874, 16
    %v1968 = vrot.slane %v1966, 1
    %v1969 = vsel %vm1562, %v1965, %v1968
    %v1970 = vshrl.u32 %v874, 16
    %v1972 = vor.u32 %v1970, %v1968
    %v1973 = vshll.u32 %v875, 16
    %v1975 = vrot.slane %v1973, 1
    %v1976 = vsel %vm1562, %v1972, %v1975
    %v1977 = vshrl.u32 %v875, 16
    %v1979 = vor.u32 %v1977, %v1975
    %v1980 = vshll.u32 %v876, 16
    %v1982 = vrot.slane %v1980, 1
    %v1983 = vsel %vm1562, %v1979, %v1982
    %v1984 = vshrl.u32 %v876, 16
    %v1986 = vor.u32 %v1984, %v1982
    %v1987 = vshll.u32 %v877, 16
    %v1989 = vrot.slane %v1987, 1
    %v1990 = vsel %vm1562, %v1986, %v1989
    %v1991 = vshrl.u32 %v877, 16
    %v1993 = vor.u32 %v1991, %v1989
    %v1994 = vshll.u32 %v878, 16
    %v1996 = vrot.slane %v1994, 1
    %v1997 = vsel %vm1562, %v1993, %v1996
    %v1998 = vshrl.u32 %v878, 16
    %v2000 = vor.u32 %v1998, %v1996
    %v2001 = vshll.u32 %v879, 16
    %v2003 = vrot.slane %v2001, 1
    %v2004 = vsel %vm1562, %v2000, %v2003
    %v2005 = vshrl.u32 %v879, 16
    %v2007 = vor.u32 %v2005, %v2003
    %v2008 = vshll.u32 %v880, 16
    %v2010 = vrot.slane %v2008, 1
    %v2011 = vsel %vm1562, %v2007, %v2010
    %v2012 = vshrl.u32 %v880, 16
    %v2014 = vor.u32 %v2012, %v2010
    %v2015 = vshll.u32 %v881, 16
    %v2017 = vrot.slane %v2015, 1
    %v2018 = vsel %vm1562, %v2014, %v2017
    %v2019 = vshrl.u32 %v881, 16
    %v2021 = vor.u32 %v2019, %v2017
    %v2022 = vshll.u32 %v882, 16
    %v2024 = vrot.slane %v2022, 1
    %v2025 = vsel %vm1562, %v2021, %v2024
    %v2026 = vshrl.u32 %v882, 16
    %v2028 = vor.u32 %v2026, %v2024
    %v2029 = vshll.u32 %v883, 16
    %v2031 = vrot.slane %v2029, 1
    %v2032 = vsel %vm1562, %v2028, %v2031
    %v2033 = vshrl.u32 %v883, 16
    %v2035 = vor.u32 %v2033, %v2031
    %v2037 = vshll.u32 %v888, 16
    %v2039 = vrot.slane %v2037, 1
    %v2040 = vsel %vm1562, %v2035, %v2039
    %v2042 = vsel %vm1134, %v1934, 0
    %v2045 = vsel %vm1134, %v1941, 0
    %v2048 = vsel %vm1134, %v1948, 0
    %v2051 = vsel %vm1134, %v1955, 0
    %v2054 = vsel %vm1134, %v1962, 0
    %v2057 = vsel %vm1134, %v1969, 0
    %v2060 = vsel %vm1134, %v1976, 0
    %v2063 = vsel %vm1134, %v1983, 0
    %v2066 = vsel %vm1134, %v1990, 0
    %v2069 = vsel %vm1134, %v1997, 0
    %v2072 = vsel %vm1134, %v2004, 0
    %v2075 = vsel %vm1134, %v2011, 0
    %v2078 = vsel %vm1134, %v2018, 0
    %v2081 = vsel %vm1134, %v2025, 0
    %v2084 = vsel %vm1134, %v2032, 0
    %v2087 = vsel %vm1134, %v2040, 0
    %v2090 = vsel %vm1183, %v1924, 0
    %2092 = vmatprep.subr.bf16.mxu0 0
    %2093 = vmatpush1.bf16.msra.mxu0 %v2090
    %2094 = vmatprep.subr.bf16.mxu0 0
    %2095 = vmatpush1.bf16.msra.mxu0 0
    %2096 = vmatprep.subr.bf16.mxu0 0
    %2097 = vmatpush1.bf16.msra.mxu0 0
    %2098 = vmatprep.subr.bf16.mxu0 0
    %2099 = vmatpush1.bf16.msra.mxu0 0
    %2100 = vmatprep.subr.bf16.mxu0 0
    %2101 = vmatpush1.bf16.msra.mxu0 0
    %2102 = vmatprep.subr.bf16.mxu0 0
    %2103 = vmatpush1.bf16.msra.mxu0 0
    %2104 = vmatprep.subr.bf16.mxu0 0
    %2105 = vmatpush1.bf16.msra.mxu0 0
    %2106 = vmatprep.subr.bf16.mxu0 0
    %2107 = vmatpush1.bf16.msra.mxu0 0
    %2108 = vmatprep.subr.bf16.mxu0 0
    %2109 = vmatpush1.bf16.msra.mxu0 0
    %2110 = vmatprep.subr.bf16.mxu0 0
    %2111 = vmatpush1.bf16.msra.mxu0 0
    %2112 = vmatprep.subr.bf16.mxu0 0
    %2113 = vmatpush1.bf16.msra.mxu0 0
    %2114 = vmatprep.subr.bf16.mxu0 0
    %2115 = vmatpush1.bf16.msra.mxu0 0
    %2116 = vmatprep.subr.bf16.mxu0 0
    %2117 = vmatpush1.bf16.msra.mxu0 0
    %2118 = vmatprep.subr.bf16.mxu0 0
    %2119 = vmatpush1.bf16.msra.mxu0 0
    %2120 = vmatprep.subr.bf16.mxu0 0
    %2121 = vmatpush1.bf16.msra.mxu0 0
    %2122 = vmatprep.subr.bf16.mxu0 0
    %2123 = vmatpush1.bf16.msra.mxu0 0
    %2124 = vmatprep.mubr.bf16.mxu0 0
    %2125 = vmatmul.mubr.bf16.gmra.mrb[0].mxu0 %v2042
    %v2126 = vpop.f32.mrb[0].mxu0
    %v2127 = vadd.f32 0.0, %v2126
    %v2128 = vpop.f32.mrb[0].mxu0
    %v2129 = vpop.f32.mrb[0].mxu0
    %v2130 = vadd.f32 0.0, %v2129
    %v2131 = vpop.f32.mrb[0].mxu0
    %2132 = vmatprep.mubr.bf16.mxu0 0
    %2133 = vmatmul.mubr.bf16.gmra.mrb[0].mxu0 %v2045
    %v2134 = vpop.f32.mrb[0].mxu0
    %v2135 = vadd.f32 0.0, %v2134
    %v2136 = vpop.f32.mrb[0].mxu0
    %v2137 = vpop.f32.mrb[0].mxu0
    %v2138 = vadd.f32 0.0, %v2137
    %v2139 = vpop.f32.mrb[0].mxu0
    %2140 = vmatprep.mubr.bf16.mxu0 0
    %2141 = vmatmul.mubr.bf16.gmra.mrb[0].mxu0 %v2048
    %v2142 = vpop.f32.mrb[0].mxu0
    %v2143 = vadd.f32 0.0, %v2142
    %v2144 = vpop.f32.mrb[0].mxu0
    %v2145 = vpop.f32.mrb[0].mxu0
    %v2146 = vadd.f32 0.0, %v2145
    %v2147 = vpop.f32.mrb[0].mxu0
    %2148 = vmatprep.mubr.bf16.mxu0 0
    %2149 = vmatmul.mubr.bf16.gmra.mrb[0].mxu0 %v2051
    %v2150 = vpop.f32.mrb[0].mxu0
    %v2151 = vadd.f32 0.0, %v2150
    %v2152 = vpop.f32.mrb[0].mxu0
    %v2153 = vpop.f32.mrb[0].mxu0
    %v2154 = vadd.f32 0.0, %v2153
    %v2155 = vpop.f32.mrb[0].mxu0
    %2156 = vmatprep.mubr.bf16.mxu0 0
    %2157 = vmatmul.mubr.bf16.gmra.mrb[0].mxu0 %v2054
    %v2158 = vpop.f32.mrb[0].mxu0
    %v2159 = vadd.f32 0.0, %v2158
    %v2160 = vpop.f32.mrb[0].mxu0
    %v2161 = vpop.f32.mrb[0].mxu0
    %v2162 = vadd.f32 0.0, %v2161
    %v2163 = vpop.f32.mrb[0].mxu0
    %2164 = vmatprep.mubr.bf16.mxu0 0
    %2165 = vmatmul.mubr.bf16.gmra.mrb[0].mxu0 %v2057
    %v2166 = vpop.f32.mrb[0].mxu0
    %v2167 = vadd.f32 0.0, %v2166
    %v2168 = vpop.f32.mrb[0].mxu0
    %v2169 = vpop.f32.mrb[0].mxu0
    %v2170 = vadd.f32 0.0, %v2169
    %v2171 = vpop.f32.mrb[0].mxu0
    %2172 = vmatprep.mubr.bf16.mxu0 0
    %2173 = vmatmul.mubr.bf16.gmra.mrb[0].mxu0 %v2060
    %v2174 = vpop.f32.mrb[0].mxu0
    %v2175 = vadd.f32 0.0, %v2174
    %v2176 = vpop.f32.mrb[0].mxu0
    %v2177 = vpop.f32.mrb[0].mxu0
    %v2178 = vadd.f32 0.0, %v2177
    %v2179 = vpop.f32.mrb[0].mxu0
    %2180 = vmatprep.mubr.bf16.mxu0 0
    %2181 = vmatmul.mubr.bf16.gmra.mrb[0].mxu0 %v2063
    %v2182 = vpop.f32.mrb[0].mxu0
    %v2183 = vadd.f32 0.0, %v2182
    %v2184 = vpop.f32.mrb[0].mxu0
    %v2185 = vpop.f32.mrb[0].mxu0
    %v2186 = vadd.f32 0.0, %v2185
    %v2187 = vpop.f32.mrb[0].mxu0
    %2188 = vmatprep.mubr.bf16.mxu0 0
    %2189 = vmatmul.mubr.bf16.gmra.mrb[0].mxu0 %v2066
    %v2190 = vpop.f32.mrb[0].mxu0
    %v2191 = vadd.f32 0.0, %v2190
    %v2192 = vpop.f32.mrb[0].mxu0
    %v2193 = vpop.f32.mrb[0].mxu0
    %v2194 = vadd.f32 0.0, %v2193
    %v2195 = vpop.f32.mrb[0].mxu0
    %2196 = vmatprep.mubr.bf16.mxu0 0
    %2197 = vmatmul.mubr.bf16.gmra.mrb[0].mxu0 %v2069
    %v2198 = vpop.f32.mrb[0].mxu0
    %v2199 = vadd.f32 0.0, %v2198
    %v2200 = vpop.f32.mrb[0].mxu0
    %v2201 = vpop.f32.mrb[0].mxu0
    %v2202 = vadd.f32 0.0, %v2201
    %v2203 = vpop.f32.mrb[0].mxu0
    %2204 = vmatprep.mubr.bf16.mxu0 0
    %2205 = vmatmul.mubr.bf16.gmra.mrb[0].mxu0 %v2072
    %v2206 = vpop.f32.mrb[0].mxu0
    %v2207 = vadd.f32 0.0, %v2206
    %v2208 = vpop.f32.mrb[0].mxu0
    %v2209 = vpop.f32.mrb[0].mxu0
    %v2210 = vadd.f32 0.0, %v2209
    %v2211 = vpop.f32.mrb[0].mxu0
    %2212 = vmatprep.mubr.bf16.mxu0 0
    %2213 = vmatmul.mubr.bf16.gmra.mrb[0].mxu0 %v2075
    %v2214 = vpop.f32.mrb[0].mxu0
    %v2215 = vadd.f32 0.0, %v2214
    %v2216 = vpop.f32.mrb[0].mxu0
    %v2217 = vpop.f32.mrb[0].mxu0
    %v2218 = vadd.f32 0.0, %v2217
    %v2219 = vpop.f32.mrb[0].mxu0
    %2220 = vmatprep.mubr.bf16.mxu0 0
    %2221 = vmatmul.mubr.bf16.gmra.mrb[0].mxu0 %v2078
    %v2222 = vpop.f32.mrb[0].mxu0
    %v2223 = vadd.f32 0.0, %v2222
    %v2224 = vpop.f32.mrb[0].mxu0
    %v2225 = vpop.f32.mrb[0].mxu0
    %v2226 = vadd.f32 0.0, %v2225
    %v2227 = vpop.f32.mrb[0].mxu0
    %2228 = vmatprep.mubr.bf16.mxu0 0
    %2229 = vmatmul.mubr.bf16.gmra.mrb[0].mxu0 %v2081
    %v2230 = vpop.f32.mrb[0].mxu0
    %v2231 = vadd.f32 0.0, %v2230
    %v2232 = vpop.f32.mrb[0].mxu0
    %v2233 = vpop.f32.mrb[0].mxu0
    %v2234 = vadd.f32 0.0, %v2233
    %v2235 = vpop.f32.mrb[0].mxu0
    %2236 = vmatprep.mubr.bf16.mxu0 0
    %2237 = vmatmul.mubr.bf16.gmra.mrb[0].mxu0 %v2084
    %v2238 = vpop.f32.mrb[0].mxu0
    %v2239 = vadd.f32 0.0, %v2238
    %v2240 = vpop.f32.mrb[0].mxu0
    %v2241 = vpop.f32.mrb[0].mxu0
    %v2242 = vadd.f32 0.0, %v2241
    %v2243 = vpop.f32.mrb[0].mxu0
    %2244 = vmatprep.mubr.bf16.mxu0 0
    %2245 = vmatmul.mubr.bf16.gmra.mrb[0].mxu0 %v2087
    %v2246 = vpop.f32.mrb[0].mxu0
    %v2247 = vadd.f32 0.0, %v2246
    %v2248 = vpop.f32.mrb[0].mxu0
    %v2249 = vpop.f32.mrb[0].mxu0
    %v2250 = vadd.f32 0.0, %v2249
    %v2251 = vpop.f32.mrb[0].mxu0
    %2252 = vdwg.mxu0
    %v2253 = vadd.f32 %v1891, %v2127
    %v2254 = vadd.f32 %v1892, %v2130
    %v2255 = vadd.f32 %v1893, %v2135
    %v2256 = vadd.f32 %v1894, %v2138
    %v2257 = vadd.f32 %v1895, %v2143
    %v2258 = vadd.f32 %v1896, %v2146
    %v2259 = vadd.f32 %v1897, %v2151
    %v2260 = vadd.f32 %v1898, %v2154
    %v2261 = vadd.f32 %v1899, %v2159
    %v2262 = vadd.f32 %v1900, %v2162
    %v2263 = vadd.f32 %v1901, %v2167
    %v2264 = vadd.f32 %v1902, %v2170
    %v2265 = vadd.f32 %v1903, %v2175
    %v2266 = vadd.f32 %v1904, %v2178
    %v2267 = vadd.f32 %v1905, %v2183
    %v2268 = vadd.f32 %v1906, %v2186
    %v2269 = vadd.f32 %v1907, %v2191
    %v2270 = vadd.f32 %v1908, %v2194
    %v2271 = vadd.f32 %v1909, %v2199
    %v2272 = vadd.f32 %v1910, %v2202
    %v2273 = vadd.f32 %v1911, %v2207
    %v2274 = vadd.f32 %v1912, %v2210
    %v2275 = vadd.f32 %v1913, %v2215
    %v2276 = vadd.f32 %v1914, %v2218
    %v2277 = vadd.f32 %v1915, %v2223
    %v2278 = vadd.f32 %v1916, %v2226
    %v2279 = vadd.f32 %v1917, %v2231
    %v2280 = vadd.f32 %v1918, %v2234
    %v2281 = vadd.f32 %v1919, %v2239
    %v2282 = vadd.f32 %v1920, %v2242
    %v2283 = vadd.f32 %v1921, %v2247
    %v2284 = vadd.f32 %v1922, %v2250
    %s2285 = scalar_lea.vmem %s2, 8
    %v2286 = vld [vmem:[%s2285] sm:$0x3]
    %v2288 = vsel %vm1134, %v989, 0
    %v2291 = vsel %vm1134, %v990, 0
    %v2294 = vsel %vm1134, %v991, 0
    %v2297 = vsel %vm1134, %v992, 0
    %v2300 = vsel %vm1134, %v993, 0
    %v2303 = vsel %vm1134, %v994, 0
    %v2306 = vsel %vm1134, %v995, 0
    %v2309 = vsel %vm1134, %v996, 0
    %v2312 = vsel %vm1134, %v997, 0
    %v2315 = vsel %vm1134, %v998, 0
    %v2318 = vsel %vm1134, %v999, 0
    %v2321 = vsel %vm1134, %v1000, 0
    %v2324 = vsel %vm1134, %v1001, 0
    %v2327 = vsel %vm1134, %v1002, 0
    %v2330 = vsel %vm1134, %v1003, 0
    %v2333 = vsel %vm1134, %v1004, 0
    %v2336 = vsel %vm1183, %v2286, 0
    %2338 = vmatprep.subr.bf16.mxu0 0
    %2339 = vmatpush1.bf16.msra.mxu0 %v2336
    %2340 = vmatprep.subr.bf16.mxu0 0
    %2341 = vmatpush1.bf16.msra.mxu0 0
    %2342 = vmatprep.subr.bf16.mxu0 0
    %2343 = vmatpush1.bf16.msra.mxu0 0
    %2344 = vmatprep.subr.bf16.mxu0 0
    %2345 = vmatpush1.bf16.msra.mxu0 0
    %2346 = vmatprep.subr.bf16.mxu0 0
    %2347 = vmatpush1.bf16.msra.mxu0 0
    %2348 = vmatprep.subr.bf16.mxu0 0
    %2349 = vmatpush1.bf16.msra.mxu0 0
    %2350 = vmatprep.subr.bf16.mxu0 0
    %2351 = vmatpush1.bf16.msra.mxu0 0
    %2352 = vmatprep.subr.bf16.mxu0 0
    %2353 = vmatpush1.bf16.msra.mxu0 0
    %2354 = vmatprep.subr.bf16.mxu0 0
    %2355 = vmatpush1.bf16.msra.mxu0 0
    %2356 = vmatprep.subr.bf16.mxu0 0
    %2357 = vmatpush1.bf16.msra.mxu0 0
    %2358 = vmatprep.subr.bf16.mxu0 0
    %2359 = vmatpush1.bf16.msra.mxu0 0
    %2360 = vmatprep.subr.bf16.mxu0 0
    %2361 = vmatpush1.bf16.msra.mxu0 0
    %2362 = vmatprep.subr.bf16.mxu0 0
    %2363 = vmatpush1.bf16.msra.mxu0 0
    %2364 = vmatprep.subr.bf16.mxu0 0
    %2365 = vmatpush1.bf16.msra.mxu0 0
    %2366 = vmatprep.subr.bf16.mxu0 0
    %2367 = vmatpush1.bf16.msra.mxu0 0
    %2368 = vmatprep.subr.bf16.mxu0 0
    %2369 = vmatpush1.bf16.msra.mxu0 0
    %2370 = vmatprep.mubr.bf16.mxu0 0
    %2371 = vmatmul.mubr.bf16.gmra.mrb[0].mxu0 %v2288
    %v2372 = vpop.f32.mrb[0].mxu0
    %v2373 = vadd.f32 0.0, %v2372
    %v2374 = vpop.f32.mrb[0].mxu0
    %v2375 = vpop.f32.mrb[0].mxu0
    %v2376 = vadd.f32 0.0, %v2375
    %v2377 = vpop.f32.mrb[0].mxu0
    %2378 = vmatprep.mubr.bf16.mxu0 0
    %2379 = vmatmul.mubr.bf16.gmra.mrb[0].mxu0 %v2291
    %v2380 = vpop.f32.mrb[0].mxu0
    %v2381 = vadd.f32 0.0, %v2380
    %v2382 = vpop.f32.mrb[0].mxu0
    %v2383 = vpop.f32.mrb[0].mxu0
    %v2384 = vadd.f32 0.0, %v2383
    %v2385 = vpop.f32.mrb[0].mxu0
    %2386 = vmatprep.mubr.bf16.mxu0 0
    %2387 = vmatmul.mubr.bf16.gmra.mrb[0].mxu0 %v2294
    %v2388 = vpop.f32.mrb[0].mxu0
    %v2389 = vadd.f32 0.0, %v2388
    %v2390 = vpop.f32.mrb[0].mxu0
    %v2391 = vpop.f32.mrb[0].mxu0
    %v2392 = vadd.f32 0.0, %v2391
    %v2393 = vpop.f32.mrb[0].mxu0
    %2394 = vmatprep.mubr.bf16.mxu0 0
    %2395 = vmatmul.mubr.bf16.gmra.mrb[0].mxu0 %v2297
    %v2396 = vpop.f32.mrb[0].mxu0
    %v2397 = vadd.f32 0.0, %v2396
    %v2398 = vpop.f32.mrb[0].mxu0
    %v2399 = vpop.f32.mrb[0].mxu0
    %v2400 = vadd.f32 0.0, %v2399
    %v2401 = vpop.f32.mrb[0].mxu0
    %2402 = vmatprep.mubr.bf16.mxu0 0
    %2403 = vmatmul.mubr.bf16.gmra.mrb[0].mxu0 %v2300
    %v2404 = vpop.f32.mrb[0].mxu0
    %v2405 = vadd.f32 0.0, %v2404
    %v2406 = vpop.f32.mrb[0].mxu0
    %v2407 = vpop.f32.mrb[0].mxu0
    %v2408 = vadd.f32 0.0, %v2407
    %v2409 = vpop.f32.mrb[0].mxu0
    %2410 = vmatprep.mubr.bf16.mxu0 0
    %2411 = vmatmul.mubr.bf16.gmra.mrb[0].mxu0 %v2303
    %v2412 = vpop.f32.mrb[0].mxu0
    %v2413 = vadd.f32 0.0, %v2412
    %v2414 = vpop.f32.mrb[0].mxu0
    %v2415 = vpop.f32.mrb[0].mxu0
    %v2416 = vadd.f32 0.0, %v2415
    %v2417 = vpop.f32.mrb[0].mxu0
    %2418 = vmatprep.mubr.bf16.mxu0 0
    %2419 = vmatmul.mubr.bf16.gmra.mrb[0].mxu0 %v2306
    %v2420 = vpop.f32.mrb[0].mxu0
    %v2421 = vadd.f32 0.0, %v2420
    %v2422 = vpop.f32.mrb[0].mxu0
    %v2423 = vpop.f32.mrb[0].mxu0
    %v2424 = vadd.f32 0.0, %v2423
    %v2425 = vpop.f32.mrb[0].mxu0
    %2426 = vmatprep.mubr.bf16.mxu0 0
    %2427 = vmatmul.mubr.bf16.gmra.mrb[0].mxu0 %v2309
    %v2428 = vpop.f32.mrb[0].mxu0
    %v2429 = vadd.f32 0.0, %v2428
    %v2430 = vpop.f32.mrb[0].mxu0
    %v2431 = vpop.f32.mrb[0].mxu0
    %v2432 = vadd.f32 0.0, %v2431
    %v2433 = vpop.f32.mrb[0].mxu0
    %2434 = vmatprep.mubr.bf16.mxu0 0
    %2435 = vmatmul.mubr.bf16.gmra.mrb[0].mxu0 %v2312
    %v2436 = vpop.f32.mrb[0].mxu0
    %v2437 = vadd.f32 0.0, %v2436
    %v2438 = vpop.f32.mrb[0].mxu0
    %v2439 = vpop.f32.mrb[0].mxu0
    %v2440 = vadd.f32 0.0, %v2439
    %v2441 = vpop.f32.mrb[0].mxu0
    %2442 = vmatprep.mubr.bf16.mxu0 0
    %2443 = vmatmul.mubr.bf16.gmra.mrb[0].mxu0 %v2315
    %v2444 = vpop.f32.mrb[0].mxu0
    %v2445 = vadd.f32 0.0, %v2444
    %v2446 = vpop.f32.mrb[0].mxu0
    %v2447 = vpop.f32.mrb[0].mxu0
    %v2448 = vadd.f32 0.0, %v2447
    %v2449 = vpop.f32.mrb[0].mxu0
    %2450 = vmatprep.mubr.bf16.mxu0 0
    %2451 = vmatmul.mubr.bf16.gmra.mrb[0].mxu0 %v2318
    %v2452 = vpop.f32.mrb[0].mxu0
    %v2453 = vadd.f32 0.0, %v2452
    %v2454 = vpop.f32.mrb[0].mxu0
    %v2455 = vpop.f32.mrb[0].mxu0
    %v2456 = vadd.f32 0.0, %v2455
    %v2457 = vpop.f32.mrb[0].mxu0
    %2458 = vmatprep.mubr.bf16.mxu0 0
    %2459 = vmatmul.mubr.bf16.gmra.mrb[0].mxu0 %v2321
    %v2460 = vpop.f32.mrb[0].mxu0
    %v2461 = vadd.f32 0.0, %v2460
    %v2462 = vpop.f32.mrb[0].mxu0
    %v2463 = vpop.f32.mrb[0].mxu0
    %v2464 = vadd.f32 0.0, %v2463
    %v2465 = vpop.f32.mrb[0].mxu0
    %2466 = vmatprep.mubr.bf16.mxu0 0
    %2467 = vmatmul.mubr.bf16.gmra.mrb[0].mxu0 %v2324
    %v2468 = vpop.f32.mrb[0].mxu0
    %v2469 = vadd.f32 0.0, %v2468
    %v2470 = vpop.f32.mrb[0].mxu0
    %v2471 = vpop.f32.mrb[0].mxu0
    %v2472 = vadd.f32 0.0, %v2471
    %v2473 = vpop.f32.mrb[0].mxu0
    %2474 = vmatprep.mubr.bf16.mxu0 0
    %2475 = vmatmul.mubr.bf16.gmra.mrb[0].mxu0 %v2327
    %v2476 = vpop.f32.mrb[0].mxu0
    %v2477 = vadd.f32 0.0, %v2476
    %v2478 = vpop.f32.mrb[0].mxu0
    %v2479 = vpop.f32.mrb[0].mxu0
    %v2480 = vadd.f32 0.0, %v2479
    %v2481 = vpop.f32.mrb[0].mxu0
    %2482 = vmatprep.mubr.bf16.mxu0 0
    %2483 = vmatmul.mubr.bf16.gmra.mrb[0].mxu0 %v2330
    %v2484 = vpop.f32.mrb[0].mxu0
    %v2485 = vadd.f32 0.0, %v2484
    %v2486 = vpop.f32.mrb[0].mxu0
    %v2487 = vpop.f32.mrb[0].mxu0
    %v2488 = vadd.f32 0.0, %v2487
    %v2489 = vpop.f32.mrb[0].mxu0
    %2490 = vmatprep.mubr.bf16.mxu0 0
    %2491 = vmatmul.mubr.bf16.gmra.mrb[0].mxu0 %v2333
    %v2492 = vpop.f32.mrb[0].mxu0
    %v2493 = vadd.f32 0.0, %v2492
    %v2494 = vpop.f32.mrb[0].mxu0
    %v2495 = vpop.f32.mrb[0].mxu0
    %v2496 = vadd.f32 0.0, %v2495
    %v2497 = vpop.f32.mrb[0].mxu0
    %2498 = vdwg.mxu0
    %v2499 = vadd.f32 %v2253, %v2373
    %v2500 = vadd.f32 %v2254, %v2376
    %v2501 = vadd.f32 %v2255, %v2381
    %v2502 = vadd.f32 %v2256, %v2384
    %v2503 = vadd.f32 %v2257, %v2389
    %v2504 = vadd.f32 %v2258, %v2392
    %v2505 = vadd.f32 %v2259, %v2397
    %v2506 = vadd.f32 %v2260, %v2400
    %v2507 = vadd.f32 %v2261, %v2405
    %v2508 = vadd.f32 %v2262, %v2408
    %v2509 = vadd.f32 %v2263, %v2413
    %v2510 = vadd.f32 %v2264, %v2416
    %v2511 = vadd.f32 %v2265, %v2421
    %v2512 = vadd.f32 %v2266, %v2424
    %v2513 = vadd.f32 %v2267, %v2429
    %v2514 = vadd.f32 %v2268, %v2432
    %v2515 = vadd.f32 %v2269, %v2437
    %v2516 = vadd.f32 %v2270, %v2440
    %v2517 = vadd.f32 %v2271, %v2445
    %v2518 = vadd.f32 %v2272, %v2448
    %v2519 = vadd.f32 %v2273, %v2453
    %v2520 = vadd.f32 %v2274, %v2456
    %v2521 = vadd.f32 %v2275, %v2461
    %v2522 = vadd.f32 %v2276, %v2464
    %v2523 = vadd.f32 %v2277, %v2469
    %v2524 = vadd.f32 %v2278, %v2472
    %v2525 = vadd.f32 %v2279, %v2477
    %v2526 = vadd.f32 %v2280, %v2480
    %v2527 = vadd.f32 %v2281, %v2485
    %v2528 = vadd.f32 %v2282, %v2488
    %v2529 = vadd.f32 %v2283, %v2493
    %v2530 = vadd.f32 %v2284, %v2496
    %s2531 = scalar_lea.vmem %s2, 10
    %v2532 = vld [vmem:[%s2531] sm:$0x3]
    %v2534 = vsel %vm1134, %v1110, 0
    %v2537 = vsel %vm1134, %v1111, 0
    %v2540 = vsel %vm1134, %v1112, 0
    %v2543 = vsel %vm1134, %v1113, 0
    %v2546 = vsel %vm1134, %v1114, 0
    %v2549 = vsel %vm1134, %v1115, 0
    %v2552 = vsel %vm1134, %v1116, 0
    %v2555 = vsel %vm1134, %v1117, 0
    %v2558 = vsel %vm1134, %v1118, 0
    %v2561 = vsel %vm1134, %v1119, 0
    %v2564 = vsel %vm1134, %v1120, 0
    %v2567 = vsel %vm1134, %v1121, 0
    %v2570 = vsel %vm1134, %v1122, 0
    %v2573 = vsel %vm1134, %v1123, 0
    %v2576 = vsel %vm1134, %v1124, 0
    %v2579 = vsel %vm1134, %v1125, 0
    %v2582 = vsel %vm1183, %v2532, 0
    %2584 = vmatprep.subr.bf16.mxu0 0
    %2585 = vmatpush1.bf16.msra.mxu0 %v2582
    %2586 = vmatprep.subr.bf16.mxu0 0
    %2587 = vmatpush1.bf16.msra.mxu0 0
    %2588 = vmatprep.subr.bf16.mxu0 0
    %2589 = vmatpush1.bf16.msra.mxu0 0
    %2590 = vmatprep.subr.bf16.mxu0 0
    %2591 = vmatpush1.bf16.msra.mxu0 0
    %2592 = vmatprep.subr.bf16.mxu0 0
    %2593 = vmatpush1.bf16.msra.mxu0 0
    %2594 = vmatprep.subr.bf16.mxu0 0
    %2595 = vmatpush1.bf16.msra.mxu0 0
    %2596 = vmatprep.subr.bf16.mxu0 0
    %2597 = vmatpush1.bf16.msra.mxu0 0
    %2598 = vmatprep.subr.bf16.mxu0 0
    %2599 = vmatpush1.bf16.msra.mxu0 0
    %2600 = vmatprep.subr.bf16.mxu0 0
    %2601 = vmatpush1.bf16.msra.mxu0 0
    %2602 = vmatprep.subr.bf16.mxu0 0
    %2603 = vmatpush1.bf16.msra.mxu0 0
    %2604 = vmatprep.subr.bf16.mxu0 0
    %2605 = vmatpush1.bf16.msra.mxu0 0
    %2606 = vmatprep.subr.bf16.mxu0 0
    %2607 = vmatpush1.bf16.msra.mxu0 0
    %2608 = vmatprep.subr.bf16.mxu0 0
    %2609 = vmatpush1.bf16.msra.mxu0 0
    %2610 = vmatprep.subr.bf16.mxu0 0
    %2611 = vmatpush1.bf16.msra.mxu0 0
    %2612 = vmatprep.subr.bf16.mxu0 0
    %2613 = vmatpush1.bf16.msra.mxu0 0
    %2614 = vmatprep.subr.bf16.mxu0 0
    %2615 = vmatpush1.bf16.msra.mxu0 0
    %2616 = vmatprep.mubr.bf16.mxu0 0
    %2617 = vmatmul.mubr.bf16.gmra.mrb[0].mxu0 %v2534
    %v2618 = vpop.f32.mrb[0].mxu0
    %v2619 = vadd.f32 0.0, %v2618
    %v2620 = vpop.f32.mrb[0].mxu0
    %v2621 = vpop.f32.mrb[0].mxu0
    %v2622 = vadd.f32 0.0, %v2621
    %v2623 = vpop.f32.mrb[0].mxu0
    %2624 = vmatprep.mubr.bf16.mxu0 0
    %2625 = vmatmul.mubr.bf16.gmra.mrb[0].mxu0 %v2537
    %v2626 = vpop.f32.mrb[0].mxu0
    %v2627 = vadd.f32 0.0, %v2626
    %v2628 = vpop.f32.mrb[0].mxu0
    %v2629 = vpop.f32.mrb[0].mxu0
    %v2630 = vadd.f32 0.0, %v2629
    %v2631 = vpop.f32.mrb[0].mxu0
    %2632 = vmatprep.mubr.bf16.mxu0 0
    %2633 = vmatmul.mubr.bf16.gmra.mrb[0].mxu0 %v2540
    %v2634 = vpop.f32.mrb[0].mxu0
    %v2635 = vadd.f32 0.0, %v2634
    %v2636 = vpop.f32.mrb[0].mxu0
    %v2637 = vpop.f32.mrb[0].mxu0
    %v2638 = vadd.f32 0.0, %v2637
    %v2639 = vpop.f32.mrb[0].mxu0
    %2640 = vmatprep.mubr.bf16.mxu0 0
    %2641 = vmatmul.mubr.bf16.gmra.mrb[0].mxu0 %v2543
    %v2642 = vpop.f32.mrb[0].mxu0
    %v2643 = vadd.f32 0.0, %v2642
    %v2644 = vpop.f32.mrb[0].mxu0
    %v2645 = vpop.f32.mrb[0].mxu0
    %v2646 = vadd.f32 0.0, %v2645
    %v2647 = vpop.f32.mrb[0].mxu0
    %2648 = vmatprep.mubr.bf16.mxu0 0
    %2649 = vmatmul.mubr.bf16.gmra.mrb[0].mxu0 %v2546
    %v2650 = vpop.f32.mrb[0].mxu0
    %v2651 = vadd.f32 0.0, %v2650
    %v2652 = vpop.f32.mrb[0].mxu0
    %v2653 = vpop.f32.mrb[0].mxu0
    %v2654 = vadd.f32 0.0, %v2653
    %v2655 = vpop.f32.mrb[0].mxu0
    %2656 = vmatprep.mubr.bf16.mxu0 0
    %2657 = vmatmul.mubr.bf16.gmra.mrb[0].mxu0 %v2549
    %v2658 = vpop.f32.mrb[0].mxu0
    %v2659 = vadd.f32 0.0, %v2658
    %v2660 = vpop.f32.mrb[0].mxu0
    %v2661 = vpop.f32.mrb[0].mxu0
    %v2662 = vadd.f32 0.0, %v2661
    %v2663 = vpop.f32.mrb[0].mxu0
    %2664 = vmatprep.mubr.bf16.mxu0 0
    %2665 = vmatmul.mubr.bf16.gmra.mrb[0].mxu0 %v2552
    %v2666 = vpop.f32.mrb[0].mxu0
    %v2667 = vadd.f32 0.0, %v2666
    %v2668 = vpop.f32.mrb[0].mxu0
    %v2669 = vpop.f32.mrb[0].mxu0
    %v2670 = vadd.f32 0.0, %v2669
    %v2671 = vpop.f32.mrb[0].mxu0
    %2672 = vmatprep.mubr.bf16.mxu0 0
    %2673 = vmatmul.mubr.bf16.gmra.mrb[0].mxu0 %v2555
    %v2674 = vpop.f32.mrb[0].mxu0
    %v2675 = vadd.f32 0.0, %v2674
    %v2676 = vpop.f32.mrb[0].mxu0
    %v2677 = vpop.f32.mrb[0].mxu0
    %v2678 = vadd.f32 0.0, %v2677
    %v2679 = vpop.f32.mrb[0].mxu0
    %2680 = vmatprep.mubr.bf16.mxu0 0
    %2681 = vmatmul.mubr.bf16.gmra.mrb[0].mxu0 %v2558
    %v2682 = vpop.f32.mrb[0].mxu0
    %v2683 = vadd.f32 0.0, %v2682
    %v2684 = vpop.f32.mrb[0].mxu0
    %v2685 = vpop.f32.mrb[0].mxu0
    %v2686 = vadd.f32 0.0, %v2685
    %v2687 = vpop.f32.mrb[0].mxu0
    %2688 = vmatprep.mubr.bf16.mxu0 0
    %2689 = vmatmul.mubr.bf16.gmra.mrb[0].mxu0 %v2561
    %v2690 = vpop.f32.mrb[0].mxu0
    %v2691 = vadd.f32 0.0, %v2690
    %v2692 = vpop.f32.mrb[0].mxu0
    %v2693 = vpop.f32.mrb[0].mxu0
    %v2694 = vadd.f32 0.0, %v2693
    %v2695 = vpop.f32.mrb[0].mxu0
    %2696 = vmatprep.mubr.bf16.mxu0 0
    %2697 = vmatmul.mubr.bf16.gmra.mrb[0].mxu0 %v2564
    %v2698 = vpop.f32.mrb[0].mxu0
    %v2699 = vadd.f32 0.0, %v2698
    %v2700 = vpop.f32.mrb[0].mxu0
    %v2701 = vpop.f32.mrb[0].mxu0
    %v2702 = vadd.f32 0.0, %v2701
    %v2703 = vpop.f32.mrb[0].mxu0
    %2704 = vmatprep.mubr.bf16.mxu0 0
    %2705 = vmatmul.mubr.bf16.gmra.mrb[0].mxu0 %v2567
    %v2706 = vpop.f32.mrb[0].mxu0
    %v2707 = vadd.f32 0.0, %v2706
    %v2708 = vpop.f32.mrb[0].mxu0
    %v2709 = vpop.f32.mrb[0].mxu0
    %v2710 = vadd.f32 0.0, %v2709
    %v2711 = vpop.f32.mrb[0].mxu0
    %2712 = vmatprep.mubr.bf16.mxu0 0
    %2713 = vmatmul.mubr.bf16.gmra.mrb[0].mxu0 %v2570
    %v2714 = vpop.f32.mrb[0].mxu0
    %v2715 = vadd.f32 0.0, %v2714
    %v2716 = vpop.f32.mrb[0].mxu0
    %v2717 = vpop.f32.mrb[0].mxu0
    %v2718 = vadd.f32 0.0, %v2717
    %v2719 = vpop.f32.mrb[0].mxu0
    %2720 = vmatprep.mubr.bf16.mxu0 0
    %2721 = vmatmul.mubr.bf16.gmra.mrb[0].mxu0 %v2573
    %v2722 = vpop.f32.mrb[0].mxu0
    %v2723 = vadd.f32 0.0, %v2722
    %v2724 = vpop.f32.mrb[0].mxu0
    %v2725 = vpop.f32.mrb[0].mxu0
    %v2726 = vadd.f32 0.0, %v2725
    %v2727 = vpop.f32.mrb[0].mxu0
    %2728 = vmatprep.mubr.bf16.mxu0 0
    %2729 = vmatmul.mubr.bf16.gmra.mrb[0].mxu0 %v2576
    %v2730 = vpop.f32.mrb[0].mxu0
    %v2731 = vadd.f32 0.0, %v2730
    %v2732 = vpop.f32.mrb[0].mxu0
    %v2733 = vpop.f32.mrb[0].mxu0
    %v2734 = vadd.f32 0.0, %v2733
    %v2735 = vpop.f32.mrb[0].mxu0
    %2736 = vmatprep.mubr.bf16.mxu0 0
    %2737 = vmatmul.mubr.bf16.gmra.mrb[0].mxu0 %v2579
    %v2738 = vpop.f32.mrb[0].mxu0
    %v2739 = vadd.f32 0.0, %v2738
    %v2740 = vpop.f32.mrb[0].mxu0
    %v2741 = vpop.f32.mrb[0].mxu0
    %v2742 = vadd.f32 0.0, %v2741
    %v2743 = vpop.f32.mrb[0].mxu0
    %2744 = vdwg.mxu0
    %v2745 = vadd.f32 %v2499, %v2619
    %v2746 = vadd.f32 %v2500, %v2622
    %v2747 = vadd.f32 %v2501, %v2627
    %v2748 = vadd.f32 %v2502, %v2630
    %v2749 = vadd.f32 %v2503, %v2635
    %v2750 = vadd.f32 %v2504, %v2638
    %v2751 = vadd.f32 %v2505, %v2643
    %v2752 = vadd.f32 %v2506, %v2646
    %v2753 = vadd.f32 %v2507, %v2651
    %v2754 = vadd.f32 %v2508, %v2654
    %v2755 = vadd.f32 %v2509, %v2659
    %v2756 = vadd.f32 %v2510, %v2662
    %v2757 = vadd.f32 %v2511, %v2667
    %v2758 = vadd.f32 %v2512, %v2670
    %v2759 = vadd.f32 %v2513, %v2675
    %v2760 = vadd.f32 %v2514, %v2678
    %v2761 = vadd.f32 %v2515, %v2683
    %v2762 = vadd.f32 %v2516, %v2686
    %v2763 = vadd.f32 %v2517, %v2691
    %v2764 = vadd.f32 %v2518, %v2694
    %v2765 = vadd.f32 %v2519, %v2699
    %v2766 = vadd.f32 %v2520, %v2702
    %v2767 = vadd.f32 %v2521, %v2707
    %v2768 = vadd.f32 %v2522, %v2710
    %v2769 = vadd.f32 %v2523, %v2715
    %v2770 = vadd.f32 %v2524, %v2718
    %v2771 = vadd.f32 %v2525, %v2723
    %v2772 = vadd.f32 %v2526, %v2726
    %v2773 = vadd.f32 %v2527, %v2731
    %v2774 = vadd.f32 %v2528, %v2734
    %v2775 = vadd.f32 %v2529, %v2739
    %v2776 = vadd.f32 %v2530, %v2742
    %s2777 = scalar_lea.vmem %s2, 12
    %v2778 = vld [vmem:[%s2777] sm:$0x3]
    %v2779 = vshrl.u32 %v989, 16
    %v2781 = vshll.u32 %v989, 16
    %v2783 = vrot.slane %v2781, 1
    %v2784 = vor.u32 %v2779, %v2783
    %v2785 = vshll.u32 %v990, 16
    %v2787 = vrot.slane %v2785, 1
    %v2788 = vsel %vm1562, %v2784, %v2787
    %v2789 = vshrl.u32 %v990, 16
    %v2791 = vor.u32 %v2789, %v2787
    %v2792 = vshll.u32 %v991, 16
    %v2794 = vrot.slane %v2792, 1
    %v2795 = vsel %vm1562, %v2791, %v2794
    %v2796 = vshrl.u32 %v991, 16
    %v2798 = vor.u32 %v2796, %v2794
    %v2799 = vshll.u32 %v992, 16
    %v2801 = vrot.slane %v2799, 1
    %v2802 = vsel %vm1562, %v2798, %v2801
    %v2803 = vshrl.u32 %v992, 16
    %v2805 = vor.u32 %v2803, %v2801
    %v2806 = vshll.u32 %v993, 16
    %v2808 = vrot.slane %v2806, 1
    %v2809 = vsel %vm1562, %v2805, %v2808
    %v2810 = vshrl.u32 %v993, 16
    %v2812 = vor.u32 %v2810, %v2808
    %v2813 = vshll.u32 %v994, 16
    %v2815 = vrot.slane %v2813, 1
    %v2816 = vsel %vm1562, %v2812, %v2815
    %v2817 = vshrl.u32 %v994, 16
    %v2819 = vor.u32 %v2817, %v2815
    %v2820 = vshll.u32 %v995, 16
    %v2822 = vrot.slane %v2820, 1
    %v2823 = vsel %vm1562, %v2819, %v2822
    %v2824 = vshrl.u32 %v995, 16
    %v2826 = vor.u32 %v2824, %v2822
    %v2827 = vshll.u32 %v996, 16
    %v2829 = vrot.slane %v2827, 1
    %v2830 = vsel %vm1562, %v2826, %v2829
    %v2831 = vshrl.u32 %v996, 16
    %v2833 = vor.u32 %v2831, %v2829
    %v2834 = vshll.u32 %v997, 16
    %v2836 = vrot.slane %v2834, 1
    %v2837 = vsel %vm1562, %v2833, %v2836
    %v2838 = vshrl.u32 %v997, 16
    %v2840 = vor.u32 %v2838, %v2836
    %v2841 = vshll.u32 %v998, 16
    %v2843 = vrot.slane %v2841, 1
    %v2844 = vsel %vm1562, %v2840, %v2843
    %v2845 = vshrl.u32 %v998, 16
    %v2847 = vor.u32 %v2845, %v2843
    %v2848 = vshll.u32 %v999, 16
    %v2850 = vrot.slane %v2848, 1
    %v2851 = vsel %vm1562, %v2847, %v2850
    %v2852 = vshrl.u32 %v999, 16
    %v2854 = vor.u32 %v2852, %v2850
    %v2855 = vshll.u32 %v1000, 16
    %v2857 = vrot.slane %v2855, 1
    %v2858 = vsel %vm1562, %v2854, %v2857
    %v2859 = vshrl.u32 %v1000, 16
    %v2861 = vor.u32 %v2859, %v2857
    %v2862 = vshll.u32 %v1001, 16
    %v2864 = vrot.slane %v2862, 1
    %v2865 = vsel %vm1562, %v2861, %v2864
    %v2866 = vshrl.u32 %v1001, 16
    %v2868 = vor.u32 %v2866, %v2864
    %v2869 = vshll.u32 %v1002, 16
    %v2871 = vrot.slane %v2869, 1
    %v2872 = vsel %vm1562, %v2868, %v2871
    %v2873 = vshrl.u32 %v1002, 16
    %v2875 = vor.u32 %v2873, %v2871
    %v2876 = vshll.u32 %v1003, 16
    %v2878 = vrot.slane %v2876, 1
    %v2879 = vsel %vm1562, %v2875, %v2878
    %v2880 = vshrl.u32 %v1003, 16
    %v2882 = vor.u32 %v2880, %v2878
    %v2883 = vshll.u32 %v1004, 16
    %v2885 = vrot.slane %v2883, 1
    %v2886 = vsel %vm1562, %v2882, %v2885
    %v2887 = vshrl.u32 %v1004, 16
    %v2889 = vor.u32 %v2887, %v2885
    %v2891 = vshll.u32 %v1009, 16
    %v2893 = vrot.slane %v2891, 1
    %v2894 = vsel %vm1562, %v2889, %v2893
    %v2896 = vsel %vm1134, %v2788, 0
    %v2899 = vsel %vm1134, %v2795, 0
    %v2902 = vsel %vm1134, %v2802, 0
    %v2905 = vsel %vm1134, %v2809, 0
    %v2908 = vsel %vm1134, %v2816, 0
    %v2911 = vsel %vm1134, %v2823, 0
    %v2914 = vsel %vm1134, %v2830, 0
    %v2917 = vsel %vm1134, %v2837, 0
    %v2920 = vsel %vm1134, %v2844, 0
    %v2923 = vsel %vm1134, %v2851, 0
    %v2926 = vsel %vm1134, %v2858, 0
    %v2929 = vsel %vm1134, %v2865, 0
    %v2932 = vsel %vm1134, %v2872, 0
    %v2935 = vsel %vm1134, %v2879, 0
    %v2938 = vsel %vm1134, %v2886, 0
    %v2941 = vsel %vm1134, %v2894, 0
    %v2944 = vsel %vm1183, %v2778, 0
    %2946 = vmatprep.subr.bf16.mxu0 0
    %2947 = vmatpush1.bf16.msra.mxu0 %v2944
    %2948 = vmatprep.subr.bf16.mxu0 0
    %2949 = vmatpush1.bf16.msra.mxu0 0
    %2950 = vmatprep.subr.bf16.mxu0 0
    %2951 = vmatpush1.bf16.msra.mxu0 0
    %2952 = vmatprep.subr.bf16.mxu0 0
    %2953 = vmatpush1.bf16.msra.mxu0 0
    %2954 = vmatprep.subr.bf16.mxu0 0
    %2955 = vmatpush1.bf16.msra.mxu0 0
    %2956 = vmatprep.subr.bf16.mxu0 0
    %2957 = vmatpush1.bf16.msra.mxu0 0
    %2958 = vmatprep.subr.bf16.mxu0 0
    %2959 = vmatpush1.bf16.msra.mxu0 0
    %2960 = vmatprep.subr.bf16.mxu0 0
    %2961 = vmatpush1.bf16.msra.mxu0 0
    %2962 = vmatprep.subr.bf16.mxu0 0
    %2963 = vmatpush1.bf16.msra.mxu0 0
    %2964 = vmatprep.subr.bf16.mxu0 0
    %2965 = vmatpush1.bf16.msra.mxu0 0
    %2966 = vmatprep.subr.bf16.mxu0 0
    %2967 = vmatpush1.bf16.msra.mxu0 0
    %2968 = vmatprep.subr.bf16.mxu0 0
    %2969 = vmatpush1.bf16.msra.mxu0 0
    %2970 = vmatprep.subr.bf16.mxu0 0
    %2971 = vmatpush1.bf16.msra.mxu0 0
    %2972 = vmatprep.subr.bf16.mxu0 0
    %2973 = vmatpush1.bf16.msra.mxu0 0
    %2974 = vmatprep.subr.bf16.mxu0 0
    %2975 = vmatpush1.bf16.msra.mxu0 0
    %2976 = vmatprep.subr.bf16.mxu0 0
    %2977 = vmatpush1.bf16.msra.mxu0 0
    %2978 = vmatprep.mubr.bf16.mxu0 0
    %2979 = vmatmul.mubr.bf16.gmra.mrb[0].mxu0 %v2896
    %v2980 = vpop.f32.mrb[0].mxu0
    %v2981 = vadd.f32 0.0, %v2980
    %v2982 = vpop.f32.mrb[0].mxu0
    %v2983 = vpop.f32.mrb[0].mxu0
    %v2984 = vadd.f32 0.0, %v2983
    %v2985 = vpop.f32.mrb[0].mxu0
    %2986 = vmatprep.mubr.bf16.mxu0 0
    %2987 = vmatmul.mubr.bf16.gmra.mrb[0].mxu0 %v2899
    %v2988 = vpop.f32.mrb[0].mxu0
    %v2989 = vadd.f32 0.0, %v2988
    %v2990 = vpop.f32.mrb[0].mxu0
    %v2991 = vpop.f32.mrb[0].mxu0
    %v2992 = vadd.f32 0.0, %v2991
    %v2993 = vpop.f32.mrb[0].mxu0
    %2994 = vmatprep.mubr.bf16.mxu0 0
    %2995 = vmatmul.mubr.bf16.gmra.mrb[0].mxu0 %v2902
    %v2996 = vpop.f32.mrb[0].mxu0
    %v2997 = vadd.f32 0.0, %v2996
    %v2998 = vpop.f32.mrb[0].mxu0
    %v2999 = vpop.f32.mrb[0].mxu0
    %v3000 = vadd.f32 0.0, %v2999
    %v3001 = vpop.f32.mrb[0].mxu0
    %3002 = vmatprep.mubr.bf16.mxu0 0
    %3003 = vmatmul.mubr.bf16.gmra.mrb[0].mxu0 %v2905
    %v3004 = vpop.f32.mrb[0].mxu0
    %v3005 = vadd.f32 0.0, %v3004
    %v3006 = vpop.f32.mrb[0].mxu0
    %v3007 = vpop.f32.mrb[0].mxu0
    %v3008 = vadd.f32 0.0, %v3007
    %v3009 = vpop.f32.mrb[0].mxu0
    %3010 = vmatprep.mubr.bf16.mxu0 0
    %3011 = vmatmul.mubr.bf16.gmra.mrb[0].mxu0 %v2908
    %v3012 = vpop.f32.mrb[0].mxu0
    %v3013 = vadd.f32 0.0, %v3012
    %v3014 = vpop.f32.mrb[0].mxu0
    %v3015 = vpop.f32.mrb[0].mxu0
    %v3016 = vadd.f32 0.0, %v3015
    %v3017 = vpop.f32.mrb[0].mxu0
    %3018 = vmatprep.mubr.bf16.mxu0 0
    %3019 = vmatmul.mubr.bf16.gmra.mrb[0].mxu0 %v2911
    %v3020 = vpop.f32.mrb[0].mxu0
    %v3021 = vadd.f32 0.0, %v3020
    %v3022 = vpop.f32.mrb[0].mxu0
    %v3023 = vpop.f32.mrb[0].mxu0
    %v3024 = vadd.f32 0.0, %v3023
    %v3025 = vpop.f32.mrb[0].mxu0
    %3026 = vmatprep.mubr.bf16.mxu0 0
    %3027 = vmatmul.mubr.bf16.gmra.mrb[0].mxu0 %v2914
    %v3028 = vpop.f32.mrb[0].mxu0
    %v3029 = vadd.f32 0.0, %v3028
    %v3030 = vpop.f32.mrb[0].mxu0
    %v3031 = vpop.f32.mrb[0].mxu0
    %v3032 = vadd.f32 0.0, %v3031
    %v3033 = vpop.f32.mrb[0].mxu0
    %3034 = vmatprep.mubr.bf16.mxu0 0
    %3035 = vmatmul.mubr.bf16.gmra.mrb[0].mxu0 %v2917
    %v3036 = vpop.f32.mrb[0].mxu0
    %v3037 = vadd.f32 0.0, %v3036
    %v3038 = vpop.f32.mrb[0].mxu0
    %v3039 = vpop.f32.mrb[0].mxu0
    %v3040 = vadd.f32 0.0, %v3039
    %v3041 = vpop.f32.mrb[0].mxu0
    %3042 = vmatprep.mubr.bf16.mxu0 0
    %3043 = vmatmul.mubr.bf16.gmra.mrb[0].mxu0 %v2920
    %v3044 = vpop.f32.mrb[0].mxu0
    %v3045 = vadd.f32 0.0, %v3044
    %v3046 = vpop.f32.mrb[0].mxu0
    %v3047 = vpop.f32.mrb[0].mxu0
    %v3048 = vadd.f32 0.0, %v3047
    %v3049 = vpop.f32.mrb[0].mxu0
    %3050 = vmatprep.mubr.bf16.mxu0 0
    %3051 = vmatmul.mubr.bf16.gmra.mrb[0].mxu0 %v2923
    %v3052 = vpop.f32.mrb[0].mxu0
    %v3053 = vadd.f32 0.0, %v3052
    %v3054 = vpop.f32.mrb[0].mxu0
    %v3055 = vpop.f32.mrb[0].mxu0
    %v3056 = vadd.f32 0.0, %v3055
    %v3057 = vpop.f32.mrb[0].mxu0
    %3058 = vmatprep.mubr.bf16.mxu0 0
    %3059 = vmatmul.mubr.bf16.gmra.mrb[0].mxu0 %v2926
    %v3060 = vpop.f32.mrb[0].mxu0
    %v3061 = vadd.f32 0.0, %v3060
    %v3062 = vpop.f32.mrb[0].mxu0
    %v3063 = vpop.f32.mrb[0].mxu0
    %v3064 = vadd.f32 0.0, %v3063
    %v3065 = vpop.f32.mrb[0].mxu0
    %3066 = vmatprep.mubr.bf16.mxu0 0
    %3067 = vmatmul.mubr.bf16.gmra.mrb[0].mxu0 %v2929
    %v3068 = vpop.f32.mrb[0].mxu0
    %v3069 = vadd.f32 0.0, %v3068
    %v3070 = vpop.f32.mrb[0].mxu0
    %v3071 = vpop.f32.mrb[0].mxu0
    %v3072 = vadd.f32 0.0, %v3071
    %v3073 = vpop.f32.mrb[0].mxu0
    %3074 = vmatprep.mubr.bf16.mxu0 0
    %3075 = vmatmul.mubr.bf16.gmra.mrb[0].mxu0 %v2932
    %v3076 = vpop.f32.mrb[0].mxu0
    %v3077 = vadd.f32 0.0, %v3076
    %v3078 = vpop.f32.mrb[0].mxu0
    %v3079 = vpop.f32.mrb[0].mxu0
    %v3080 = vadd.f32 0.0, %v3079
    %v3081 = vpop.f32.mrb[0].mxu0
    %3082 = vmatprep.mubr.bf16.mxu0 0
    %3083 = vmatmul.mubr.bf16.gmra.mrb[0].mxu0 %v2935
    %v3084 = vpop.f32.mrb[0].mxu0
    %v3085 = vadd.f32 0.0, %v3084
    %v3086 = vpop.f32.mrb[0].mxu0
    %v3087 = vpop.f32.mrb[0].mxu0
    %v3088 = vadd.f32 0.0, %v3087
    %v3089 = vpop.f32.mrb[0].mxu0
    %3090 = vmatprep.mubr.bf16.mxu0 0
    %3091 = vmatmul.mubr.bf16.gmra.mrb[0].mxu0 %v2938
    %v3092 = vpop.f32.mrb[0].mxu0
    %v3093 = vadd.f32 0.0, %v3092
    %v3094 = vpop.f32.mrb[0].mxu0
    %v3095 = vpop.f32.mrb[0].mxu0
    %v3096 = vadd.f32 0.0, %v3095
    %v3097 = vpop.f32.mrb[0].mxu0
    %3098 = vmatprep.mubr.bf16.mxu0 0
    %3099 = vmatmul.mubr.bf16.gmra.mrb[0].mxu0 %v2941
    %v3100 = vpop.f32.mrb[0].mxu0
    %v3101 = vadd.f32 0.0, %v3100
    %v3102 = vpop.f32.mrb[0].mxu0
    %v3103 = vpop.f32.mrb[0].mxu0
    %v3104 = vadd.f32 0.0, %v3103
    %v3105 = vpop.f32.mrb[0].mxu0
    %3106 = vdwg.mxu0
    %v3107 = vadd.f32 %v2745, %v2981
    %v3108 = vadd.f32 %v2746, %v2984
    %v3109 = vadd.f32 %v2747, %v2989
    %v3110 = vadd.f32 %v2748, %v2992
    %v3111 = vadd.f32 %v2749, %v2997
    %v3112 = vadd.f32 %v2750, %v3000
    %v3113 = vadd.f32 %v2751, %v3005
    %v3114 = vadd.f32 %v2752, %v3008
    %v3115 = vadd.f32 %v2753, %v3013
    %v3116 = vadd.f32 %v2754, %v3016
    %v3117 = vadd.f32 %v2755, %v3021
    %v3118 = vadd.f32 %v2756, %v3024
    %v3119 = vadd.f32 %v2757, %v3029
    %v3120 = vadd.f32 %v2758, %v3032
    %v3121 = vadd.f32 %v2759, %v3037
    %v3122 = vadd.f32 %v2760, %v3040
    %v3123 = vadd.f32 %v2761, %v3045
    %v3124 = vadd.f32 %v2762, %v3048
    %v3125 = vadd.f32 %v2763, %v3053
    %v3126 = vadd.f32 %v2764, %v3056
    %v3127 = vadd.f32 %v2765, %v3061
    %v3128 = vadd.f32 %v2766, %v3064
    %v3129 = vadd.f32 %v2767, %v3069
    %v3130 = vadd.f32 %v2768, %v3072
    %v3131 = vadd.f32 %v2769, %v3077
    %v3132 = vadd.f32 %v2770, %v3080
    %v3133 = vadd.f32 %v2771, %v3085
    %v3134 = vadd.f32 %v2772, %v3088
    %v3135 = vadd.f32 %v2773, %v3093
    %v3136 = vadd.f32 %v2774, %v3096
    %v3137 = vadd.f32 %v2775, %v3101
    %v3138 = vadd.f32 %v2776, %v3104
    %s3139 = scalar_lea.vmem %s2, 14
    %v3140 = vld [vmem:[%s3139] sm:$0x3]
    %v3141 = vshrl.u32 %v1110, 16
    %v3143 = vshll.u32 %v1110, 16
    %v3145 = vrot.slane %v3143, 1
    %v3146 = vor.u32 %v3141, %v3145
    %v3147 = vshll.u32 %v1111, 16
    %v3149 = vrot.slane %v3147, 1
    %v3150 = vsel %vm1562, %v3146, %v3149
    %v3151 = vshrl.u32 %v1111, 16
    %v3153 = vor.u32 %v3151, %v3149
    %v3154 = vshll.u32 %v1112, 16
    %v3156 = vrot.slane %v3154, 1
    %v3157 = vsel %vm1562, %v3153, %v3156
    %v3158 = vshrl.u32 %v1112, 16
    %v3160 = vor.u32 %v3158, %v3156
    %v3161 = vshll.u32 %v1113, 16
    %v3163 = vrot.slane %v3161, 1
    %v3164 = vsel %vm1562, %v3160, %v3163
    %v3165 = vshrl.u32 %v1113, 16
    %v3167 = vor.u32 %v3165, %v3163
    %v3168 = vshll.u32 %v1114, 16
    %v3170 = vrot.slane %v3168, 1
    %v3171 = vsel %vm1562, %v3167, %v3170
    %v3172 = vshrl.u32 %v1114, 16
    %v3174 = vor.u32 %v3172, %v3170
    %v3175 = vshll.u32 %v1115, 16
    %v3177 = vrot.slane %v3175, 1
    %v3178 = vsel %vm1562, %v3174, %v3177
    %v3179 = vshrl.u32 %v1115, 16
    %v3181 = vor.u32 %v3179, %v3177
    %v3182 = vshll.u32 %v1116, 16
    %v3184 = vrot.slane %v3182, 1
    %v3185 = vsel %vm1562, %v3181, %v3184
    %v3186 = vshrl.u32 %v1116, 16
    %v3188 = vor.u32 %v3186, %v3184
    %v3189 = vshll.u32 %v1117, 16
    %v3191 = vrot.slane %v3189, 1
    %v3192 = vsel %vm1562, %v3188, %v3191
    %v3193 = vshrl.u32 %v1117, 16
    %v3195 = vor.u32 %v3193, %v3191
    %v3196 = vshll.u32 %v1118, 16
    %v3198 = vrot.slane %v3196, 1
    %v3199 = vsel %vm1562, %v3195, %v3198
    %v3200 = vshrl.u32 %v1118, 16
    %v3202 = vor.u32 %v3200, %v3198
    %v3203 = vshll.u32 %v1119, 16
    %v3205 = vrot.slane %v3203, 1
    %v3206 = vsel %vm1562, %v3202, %v3205
    %v3207 = vshrl.u32 %v1119, 16
    %v3209 = vor.u32 %v3207, %v3205
    %v3210 = vshll.u32 %v1120, 16
    %v3212 = vrot.slane %v3210, 1
    %v3213 = vsel %vm1562, %v3209, %v3212
    %v3214 = vshrl.u32 %v1120, 16
    %v3216 = vor.u32 %v3214, %v3212
    %v3217 = vshll.u32 %v1121, 16
    %v3219 = vrot.slane %v3217, 1
    %v3220 = vsel %vm1562, %v3216, %v3219
    %v3221 = vshrl.u32 %v1121, 16
    %v3223 = vor.u32 %v3221, %v3219
    %v3224 = vshll.u32 %v1122, 16
    %v3226 = vrot.slane %v3224, 1
    %v3227 = vsel %vm1562, %v3223, %v3226
    %v3228 = vshrl.u32 %v1122, 16
    %v3230 = vor.u32 %v3228, %v3226
    %v3231 = vshll.u32 %v1123, 16
    %v3233 = vrot.slane %v3231, 1
    %v3234 = vsel %vm1562, %v3230, %v3233
    %v3235 = vshrl.u32 %v1123, 16
    %v3237 = vor.u32 %v3235, %v3233
    %v3238 = vshll.u32 %v1124, 16
    %v3240 = vrot.slane %v3238, 1
    %v3241 = vsel %vm1562, %v3237, %v3240
    %v3242 = vshrl.u32 %v1124, 16
    %v3244 = vor.u32 %v3242, %v3240
    %v3245 = vshll.u32 %v1125, 16
    %v3247 = vrot.slane %v3245, 1
    %v3248 = vsel %vm1562, %v3244, %v3247
    %v3249 = vshrl.u32 %v1125, 16
    %v3251 = vor.u32 %v3249, %v3247
    %v3253 = vshll.u32 %v1130, 16
    %v3255 = vrot.slane %v3253, 1
    %v3256 = vsel %vm1562, %v3251, %v3255
    %v3258 = vsel %vm1134, %v3150, 0
    %v3261 = vsel %vm1134, %v3157, 0
    %v3264 = vsel %vm1134, %v3164, 0
    %v3267 = vsel %vm1134, %v3171, 0
    %v3270 = vsel %vm1134, %v3178, 0
    %v3273 = vsel %vm1134, %v3185, 0
    %v3276 = vsel %vm1134, %v3192, 0
    %v3279 = vsel %vm1134, %v3199, 0
    %v3282 = vsel %vm1134, %v3206, 0
    %v3285 = vsel %vm1134, %v3213, 0
    %v3288 = vsel %vm1134, %v3220, 0
    %v3291 = vsel %vm1134, %v3227, 0
    %v3294 = vsel %vm1134, %v3234, 0
    %v3297 = vsel %vm1134, %v3241, 0
    %v3300 = vsel %vm1134, %v3248, 0
    %v3303 = vsel %vm1134, %v3256, 0
    %v3306 = vsel %vm1183, %v3140, 0
    %3308 = vmatprep.subr.bf16.mxu0 0
    %3309 = vmatpush1.bf16.msra.mxu0 %v3306
    %3310 = vmatprep.subr.bf16.mxu0 0
    %3311 = vmatpush1.bf16.msra.mxu0 0
    %3312 = vmatprep.subr.bf16.mxu0 0
    %3313 = vmatpush1.bf16.msra.mxu0 0
    %3314 = vmatprep.subr.bf16.mxu0 0
    %3315 = vmatpush1.bf16.msra.mxu0 0
    %3316 = vmatprep.subr.bf16.mxu0 0
    %3317 = vmatpush1.bf16.msra.mxu0 0
    %3318 = vmatprep.subr.bf16.mxu0 0
    %3319 = vmatpush1.bf16.msra.mxu0 0
    %3320 = vmatprep.subr.bf16.mxu0 0
    %3321 = vmatpush1.bf16.msra.mxu0 0
    %3322 = vmatprep.subr.bf16.mxu0 0
    %3323 = vmatpush1.bf16.msra.mxu0 0
    %3324 = vmatprep.subr.bf16.mxu0 0
    %3325 = vmatpush1.bf16.msra.mxu0 0
    %3326 = vmatprep.subr.bf16.mxu0 0
    %3327 = vmatpush1.bf16.msra.mxu0 0
    %3328 = vmatprep.subr.bf16.mxu0 0
    %3329 = vmatpush1.bf16.msra.mxu0 0
    %3330 = vmatprep.subr.bf16.mxu0 0
    %3331 = vmatpush1.bf16.msra.mxu0 0
    %3332 = vmatprep.subr.bf16.mxu0 0
    %3333 = vmatpush1.bf16.msra.mxu0 0
    %3334 = vmatprep.subr.bf16.mxu0 0
    %3335 = vmatpush1.bf16.msra.mxu0 0
    %3336 = vmatprep.subr.bf16.mxu0 0
    %3337 = vmatpush1.bf16.msra.mxu0 0
    %3338 = vmatprep.subr.bf16.mxu0 0
    %3339 = vmatpush1.bf16.msra.mxu0 0
    %3340 = vmatprep.mubr.bf16.mxu0 0
    %3341 = vmatmul.mubr.bf16.gmra.mrb[0].mxu0 %v3258
    %v3342 = vpop.f32.mrb[0].mxu0
    %v3343 = vadd.f32 0.0, %v3342
    %v3344 = vpop.f32.mrb[0].mxu0
    %v3345 = vpop.f32.mrb[0].mxu0
    %v3346 = vadd.f32 0.0, %v3345
    %v3347 = vpop.f32.mrb[0].mxu0
    %3348 = vmatprep.mubr.bf16.mxu0 0
    %3349 = vmatmul.mubr.bf16.gmra.mrb[0].mxu0 %v3261
    %v3350 = vpop.f32.mrb[0].mxu0
    %v3351 = vadd.f32 0.0, %v3350
    %v3352 = vpop.f32.mrb[0].mxu0
    %v3353 = vpop.f32.mrb[0].mxu0
    %v3354 = vadd.f32 0.0, %v3353
    %v3355 = vpop.f32.mrb[0].mxu0
    %3356 = vmatprep.mubr.bf16.mxu0 0
    %3357 = vmatmul.mubr.bf16.gmra.mrb[0].mxu0 %v3264
    %v3358 = vpop.f32.mrb[0].mxu0
    %v3359 = vadd.f32 0.0, %v3358
    %v3360 = vpop.f32.mrb[0].mxu0
    %v3361 = vpop.f32.mrb[0].mxu0
    %v3362 = vadd.f32 0.0, %v3361
    %v3363 = vpop.f32.mrb[0].mxu0
    %3364 = vmatprep.mubr.bf16.mxu0 0
    %3365 = vmatmul.mubr.bf16.gmra.mrb[0].mxu0 %v3267
    %v3366 = vpop.f32.mrb[0].mxu0
    %v3367 = vadd.f32 0.0, %v3366
    %v3368 = vpop.f32.mrb[0].mxu0
    %v3369 = vpop.f32.mrb[0].mxu0
    %v3370 = vadd.f32 0.0, %v3369
    %v3371 = vpop.f32.mrb[0].mxu0
    %3372 = vmatprep.mubr.bf16.mxu0 0
    %3373 = vmatmul.mubr.bf16.gmra.mrb[0].mxu0 %v3270
    %v3374 = vpop.f32.mrb[0].mxu0
    %v3375 = vadd.f32 0.0, %v3374
    %v3376 = vpop.f32.mrb[0].mxu0
    %v3377 = vpop.f32.mrb[0].mxu0
    %v3378 = vadd.f32 0.0, %v3377
    %v3379 = vpop.f32.mrb[0].mxu0
    %3380 = vmatprep.mubr.bf16.mxu0 0
    %3381 = vmatmul.mubr.bf16.gmra.mrb[0].mxu0 %v3273
    %v3382 = vpop.f32.mrb[0].mxu0
    %v3383 = vadd.f32 0.0, %v3382
    %v3384 = vpop.f32.mrb[0].mxu0
    %v3385 = vpop.f32.mrb[0].mxu0
    %v3386 = vadd.f32 0.0, %v3385
    %v3387 = vpop.f32.mrb[0].mxu0
    %3388 = vmatprep.mubr.bf16.mxu0 0
    %3389 = vmatmul.mubr.bf16.gmra.mrb[0].mxu0 %v3276
    %v3390 = vpop.f32.mrb[0].mxu0
    %v3391 = vadd.f32 0.0, %v3390
    %v3392 = vpop.f32.mrb[0].mxu0
    %v3393 = vpop.f32.mrb[0].mxu0
    %v3394 = vadd.f32 0.0, %v3393
    %v3395 = vpop.f32.mrb[0].mxu0
    %3396 = vmatprep.mubr.bf16.mxu0 0
    %3397 = vmatmul.mubr.bf16.gmra.mrb[0].mxu0 %v3279
    %v3398 = vpop.f32.mrb[0].mxu0
    %v3399 = vadd.f32 0.0, %v3398
    %v3400 = vpop.f32.mrb[0].mxu0
    %v3401 = vpop.f32.mrb[0].mxu0
    %v3402 = vadd.f32 0.0, %v3401
    %v3403 = vpop.f32.mrb[0].mxu0
    %3404 = vmatprep.mubr.bf16.mxu0 0
    %3405 = vmatmul.mubr.bf16.gmra.mrb[0].mxu0 %v3282
    %v3406 = vpop.f32.mrb[0].mxu0
    %v3407 = vadd.f32 0.0, %v3406
    %v3408 = vpop.f32.mrb[0].mxu0
    %v3409 = vpop.f32.mrb[0].mxu0
    %v3410 = vadd.f32 0.0, %v3409
    %v3411 = vpop.f32.mrb[0].mxu0
    %3412 = vmatprep.mubr.bf16.mxu0 0
    %3413 = vmatmul.mubr.bf16.gmra.mrb[0].mxu0 %v3285
    %v3414 = vpop.f32.mrb[0].mxu0
    %v3415 = vadd.f32 0.0, %v3414
    %v3416 = vpop.f32.mrb[0].mxu0
    %v3417 = vpop.f32.mrb[0].mxu0
    %v3418 = vadd.f32 0.0, %v3417
    %v3419 = vpop.f32.mrb[0].mxu0
    %3420 = vmatprep.mubr.bf16.mxu0 0
    %3421 = vmatmul.mubr.bf16.gmra.mrb[0].mxu0 %v3288
    %v3422 = vpop.f32.mrb[0].mxu0
    %v3423 = vadd.f32 0.0, %v3422
    %v3424 = vpop.f32.mrb[0].mxu0
    %v3425 = vpop.f32.mrb[0].mxu0
    %v3426 = vadd.f32 0.0, %v3425
    %v3427 = vpop.f32.mrb[0].mxu0
    %3428 = vmatprep.mubr.bf16.mxu0 0
    %3429 = vmatmul.mubr.bf16.gmra.mrb[0].mxu0 %v3291
    %v3430 = vpop.f32.mrb[0].mxu0
    %v3431 = vadd.f32 0.0, %v3430
    %v3432 = vpop.f32.mrb[0].mxu0
    %v3433 = vpop.f32.mrb[0].mxu0
    %v3434 = vadd.f32 0.0, %v3433
    %v3435 = vpop.f32.mrb[0].mxu0
    %3436 = vmatprep.mubr.bf16.mxu0 0
    %3437 = vmatmul.mubr.bf16.gmra.mrb[0].mxu0 %v3294
    %v3438 = vpop.f32.mrb[0].mxu0
    %v3439 = vadd.f32 0.0, %v3438
    %v3440 = vpop.f32.mrb[0].mxu0
    %v3441 = vpop.f32.mrb[0].mxu0
    %v3442 = vadd.f32 0.0, %v3441
    %v3443 = vpop.f32.mrb[0].mxu0
    %3444 = vmatprep.mubr.bf16.mxu0 0
    %3445 = vmatmul.mubr.bf16.gmra.mrb[0].mxu0 %v3297
    %v3446 = vpop.f32.mrb[0].mxu0
    %v3447 = vadd.f32 0.0, %v3446
    %v3448 = vpop.f32.mrb[0].mxu0
    %v3449 = vpop.f32.mrb[0].mxu0
    %v3450 = vadd.f32 0.0, %v3449
    %v3451 = vpop.f32.mrb[0].mxu0
    %3452 = vmatprep.mubr.bf16.mxu0 0
    %3453 = vmatmul.mubr.bf16.gmra.mrb[0].mxu0 %v3300
    %v3454 = vpop.f32.mrb[0].mxu0
    %v3455 = vadd.f32 0.0, %v3454
    %v3456 = vpop.f32.mrb[0].mxu0
    %v3457 = vpop.f32.mrb[0].mxu0
    %v3458 = vadd.f32 0.0, %v3457
    %v3459 = vpop.f32.mrb[0].mxu0
    %3460 = vmatprep.mubr.bf16.mxu0 0
    %3461 = vmatmul.mubr.bf16.gmra.mrb[0].mxu0 %v3303
    %v3462 = vpop.f32.mrb[0].mxu0
    %v3463 = vadd.f32 0.0, %v3462
    %v3464 = vpop.f32.mrb[0].mxu0
    %v3465 = vpop.f32.mrb[0].mxu0
    %v3466 = vadd.f32 0.0, %v3465
    %v3467 = vpop.f32.mrb[0].mxu0
    %3468 = vdwg.mxu0
    %v3469 = vadd.f32 %v3107, %v3343
    %v3470 = vadd.f32 %v3108, %v3346
    %v3471 = vadd.f32 %v3109, %v3351
    %v3472 = vadd.f32 %v3110, %v3354
    %v3473 = vadd.f32 %v3111, %v3359
    %v3474 = vadd.f32 %v3112, %v3362
    %v3475 = vadd.f32 %v3113, %v3367
    %v3476 = vadd.f32 %v3114, %v3370
    %v3477 = vadd.f32 %v3115, %v3375
    %v3478 = vadd.f32 %v3116, %v3378
    %v3479 = vadd.f32 %v3117, %v3383
    %v3480 = vadd.f32 %v3118, %v3386
    %v3481 = vadd.f32 %v3119, %v3391
    %v3482 = vadd.f32 %v3120, %v3394
    %v3483 = vadd.f32 %v3121, %v3399
    %v3484 = vadd.f32 %v3122, %v3402
    %v3485 = vadd.f32 %v3123, %v3407
    %v3486 = vadd.f32 %v3124, %v3410
    %v3487 = vadd.f32 %v3125, %v3415
    %v3488 = vadd.f32 %v3126, %v3418
    %v3489 = vadd.f32 %v3127, %v3423
    %v3490 = vadd.f32 %v3128, %v3426
    %v3491 = vadd.f32 %v3129, %v3431
    %v3492 = vadd.f32 %v3130, %v3434
    %v3493 = vadd.f32 %v3131, %v3439
    %v3494 = vadd.f32 %v3132, %v3442
    %v3495 = vadd.f32 %v3133, %v3447
    %v3496 = vadd.f32 %v3134, %v3450
    %v3497 = vadd.f32 %v3135, %v3455
    %v3498 = vadd.f32 %v3136, %v3458
    %v3499 = vadd.f32 %v3137, %v3463
    %v3500 = vadd.f32 %v3138, %v3466
    %s3501 = scalar_lea.vmem %s2, 16
    %v3502 = vld [vmem:[%s3501] sm:$0x3]
    %vm3503 = vsmask.f32 3328
    %v3504 = vrot.slane %v1563, 4
    %v3505 = vrot.slane %v1565, 5
    %v3506 = vor.u32 %v3504, %v3505
    %v3507 = vrot.slane %v1573, 4
    %v3508 = vrot.slane %v1569, 5
    %v3509 = vor.u32 %v3507, %v3508
    %v3510 = vsel %vm3503, %v3506, %v3509
    %v3511 = vrot.slane %v1580, 4
    %v3512 = vrot.slane %v1576, 5
    %v3513 = vor.u32 %v3511, %v3512
    %v3514 = vsel %vm3503, %v3509, %v3513
    %v3515 = vrot.slane %v1587, 4
    %v3516 = vrot.slane %v1583, 5
    %v3517 = vor.u32 %v3515, %v3516
    %v3518 = vsel %vm3503, %v3513, %v3517
    %v3519 = vrot.slane %v1594, 4
    %v3520 = vrot.slane %v1590, 5
    %v3521 = vor.u32 %v3519, %v3520
    %v3522 = vsel %vm3503, %v3517, %v3521
    %v3523 = vrot.slane %v1601, 4
    %v3524 = vrot.slane %v1597, 5
    %v3525 = vor.u32 %v3523, %v3524
    %v3526 = vsel %vm3503, %v3521, %v3525
    %v3527 = vrot.slane %v1608, 4
    %v3528 = vrot.slane %v1604, 5
    %v3529 = vor.u32 %v3527, %v3528
    %v3530 = vsel %vm3503, %v3525, %v3529
    %v3531 = vrot.slane %v1615, 4
    %v3532 = vrot.slane %v1611, 5
    %v3533 = vor.u32 %v3531, %v3532
    %v3534 = vsel %vm3503, %v3529, %v3533
    %v3535 = vrot.slane %v1622, 4
    %v3536 = vrot.slane %v1618, 5
    %v3537 = vor.u32 %v3535, %v3536
    %v3538 = vsel %vm3503, %v3533, %v3537
    %v3539 = vrot.slane %v1629, 4
    %v3540 = vrot.slane %v1625, 5
    %v3541 = vor.u32 %v3539, %v3540
    %v3542 = vsel %vm3503, %v3537, %v3541
    %v3543 = vrot.slane %v1636, 4
    %v3544 = vrot.slane %v1632, 5
    %v3545 = vor.u32 %v3543, %v3544
    %v3546 = vsel %vm3503, %v3541, %v3545
    %v3547 = vrot.slane %v1643, 4
    %v3548 = vrot.slane %v1639, 5
    %v3549 = vor.u32 %v3547, %v3548
    %v3550 = vsel %vm3503, %v3545, %v3549
    %v3551 = vrot.slane %v1650, 4
    %v3552 = vrot.slane %v1646, 5
    %v3553 = vor.u32 %v3551, %v3552
    %v3554 = vsel %vm3503, %v3549, %v3553
    %v3555 = vrot.slane %v1657, 4
    %v3556 = vrot.slane %v1653, 5
    %v3557 = vor.u32 %v3555, %v3556
    %v3558 = vsel %vm3503, %v3553, %v3557
    %v3559 = vrot.slane %v1664, 4
    %v3560 = vrot.slane %v1660, 5
    %v3561 = vor.u32 %v3559, %v3560
    %v3562 = vsel %vm3503, %v3557, %v3561
    %v3563 = vrot.slane %v1671, 4
    %v3564 = vrot.slane %v1667, 5
    %v3565 = vor.u32 %v3563, %v3564
    %v3566 = vsel %vm3503, %v3561, %v3565
    %v3567 = vshrl.u32 %v767, 16
    %v3569 = vrot.slane %v3567, 4
    %v3570 = vrot.slane %v1675, 5
    %v3571 = vor.u32 %v3569, %v3570
    %v3572 = vsel %vm3503, %v3565, %v3571
    %v3574 = vsel %vm1134, %v3510, 0
    %v3577 = vsel %vm1134, %v3514, 0
    %v3580 = vsel %vm1134, %v3518, 0
    %v3583 = vsel %vm1134, %v3522, 0
    %v3586 = vsel %vm1134, %v3526, 0
    %v3589 = vsel %vm1134, %v3530, 0
    %v3592 = vsel %vm1134, %v3534, 0
    %v3595 = vsel %vm1134, %v3538, 0
    %v3598 = vsel %vm1134, %v3542, 0
    %v3601 = vsel %vm1134, %v3546, 0
    %v3604 = vsel %vm1134, %v3550, 0
    %v3607 = vsel %vm1134, %v3554, 0
    %v3610 = vsel %vm1134, %v3558, 0
    %v3613 = vsel %vm1134, %v3562, 0
    %v3616 = vsel %vm1134, %v3566, 0
    %v3619 = vsel %vm1134, %v3572, 0
    %v3622 = vsel %vm1183, %v3502, 0
    %3624 = vmatprep.subr.bf16.mxu0 0
    %3625 = vmatpush1.bf16.msra.mxu0 %v3622
    %3626 = vmatprep.subr.bf16.mxu0 0
    %3627 = vmatpush1.bf16.msra.mxu0 0
    %3628 = vmatprep.subr.bf16.mxu0 0
    %3629 = vmatpush1.bf16.msra.mxu0 0
    %3630 = vmatprep.subr.bf16.mxu0 0
    %3631 = vmatpush1.bf16.msra.mxu0 0
    %3632 = vmatprep.subr.bf16.mxu0 0
    %3633 = vmatpush1.bf16.msra.mxu0 0
    %3634 = vmatprep.subr.bf16.mxu0 0
    %3635 = vmatpush1.bf16.msra.mxu0 0
    %3636 = vmatprep.subr.bf16.mxu0 0
    %3637 = vmatpush1.bf16.msra.mxu0 0
    %3638 = vmatprep.subr.bf16.mxu0 0
    %3639 = vmatpush1.bf16.msra.mxu0 0
    %3640 = vmatprep.subr.bf16.mxu0 0
    %3641 = vmatpush1.bf16.msra.mxu0 0
    %3642 = vmatprep.subr.bf16.mxu0 0
    %3643 = vmatpush1.bf16.msra.mxu0 0
    %3644 = vmatprep.subr.bf16.mxu0 0
    %3645 = vmatpush1.bf16.msra.mxu0 0
    %3646 = vmatprep.subr.bf16.mxu0 0
    %3647 = vmatpush1.bf16.msra.mxu0 0
    %3648 = vmatprep.subr.bf16.mxu0 0
    %3649 = vmatpush1.bf16.msra.mxu0 0
    %3650 = vmatprep.subr.bf16.mxu0 0
    %3651 = vmatpush1.bf16.msra.mxu0 0
    %3652 = vmatprep.subr.bf16.mxu0 0
    %3653 = vmatpush1.bf16.msra.mxu0 0
    %3654 = vmatprep.subr.bf16.mxu0 0
    %3655 = vmatpush1.bf16.msra.mxu0 0
    %3656 = vmatprep.mubr.bf16.mxu0 0
    %3657 = vmatmul.mubr.bf16.gmra.mrb[0].mxu0 %v3574
    %v3658 = vpop.f32.mrb[0].mxu0
    %v3659 = vadd.f32 0.0, %v3658
    %v3660 = vpop.f32.mrb[0].mxu0
    %v3661 = vpop.f32.mrb[0].mxu0
    %v3662 = vadd.f32 0.0, %v3661
    %v3663 = vpop.f32.mrb[0].mxu0
    %3664 = vmatprep.mubr.bf16.mxu0 0
    %3665 = vmatmul.mubr.bf16.gmra.mrb[0].mxu0 %v3577
    %v3666 = vpop.f32.mrb[0].mxu0
    %v3667 = vadd.f32 0.0, %v3666
    %v3668 = vpop.f32.mrb[0].mxu0
    %v3669 = vpop.f32.mrb[0].mxu0
    %v3670 = vadd.f32 0.0, %v3669
    %v3671 = vpop.f32.mrb[0].mxu0
    %3672 = vmatprep.mubr.bf16.mxu0 0
    %3673 = vmatmul.mubr.bf16.gmra.mrb[0].mxu0 %v3580
    %v3674 = vpop.f32.mrb[0].mxu0
    %v3675 = vadd.f32 0.0, %v3674
    %v3676 = vpop.f32.mrb[0].mxu0
    %v3677 = vpop.f32.mrb[0].mxu0
    %v3678 = vadd.f32 0.0, %v3677
    %v3679 = vpop.f32.mrb[0].mxu0
    %3680 = vmatprep.mubr.bf16.mxu0 0
    %3681 = vmatmul.mubr.bf16.gmra.mrb[0].mxu0 %v3583
    %v3682 = vpop.f32.mrb[0].mxu0
    %v3683 = vadd.f32 0.0, %v3682
    %v3684 = vpop.f32.mrb[0].mxu0
    %v3685 = vpop.f32.mrb[0].mxu0
    %v3686 = vadd.f32 0.0, %v3685
    %v3687 = vpop.f32.mrb[0].mxu0
    %3688 = vmatprep.mubr.bf16.mxu0 0
    %3689 = vmatmul.mubr.bf16.gmra.mrb[0].mxu0 %v3586
    %v3690 = vpop.f32.mrb[0].mxu0
    %v3691 = vadd.f32 0.0, %v3690
    %v3692 = vpop.f32.mrb[0].mxu0
    %v3693 = vpop.f32.mrb[0].mxu0
    %v3694 = vadd.f32 0.0, %v3693
    %v3695 = vpop.f32.mrb[0].mxu0
    %3696 = vmatprep.mubr.bf16.mxu0 0
    %3697 = vmatmul.mubr.bf16.gmra.mrb[0].mxu0 %v3589
    %v3698 = vpop.f32.mrb[0].mxu0
    %v3699 = vadd.f32 0.0, %v3698
    %v3700 = vpop.f32.mrb[0].mxu0
    %v3701 = vpop.f32.mrb[0].mxu0
    %v3702 = vadd.f32 0.0, %v3701
    %v3703 = vpop.f32.mrb[0].mxu0
    %3704 = vmatprep.mubr.bf16.mxu0 0
    %3705 = vmatmul.mubr.bf16.gmra.mrb[0].mxu0 %v3592
    %v3706 = vpop.f32.mrb[0].mxu0
    %v3707 = vadd.f32 0.0, %v3706
    %v3708 = vpop.f32.mrb[0].mxu0
    %v3709 = vpop.f32.mrb[0].mxu0
    %v3710 = vadd.f32 0.0, %v3709
    %v3711 = vpop.f32.mrb[0].mxu0
    %3712 = vmatprep.mubr.bf16.mxu0 0
    %3713 = vmatmul.mubr.bf16.gmra.mrb[0].mxu0 %v3595
    %v3714 = vpop.f32.mrb[0].mxu0
    %v3715 = vadd.f32 0.0, %v3714
    %v3716 = vpop.f32.mrb[0].mxu0
    %v3717 = vpop.f32.mrb[0].mxu0
    %v3718 = vadd.f32 0.0, %v3717
    %v3719 = vpop.f32.mrb[0].mxu0
    %3720 = vmatprep.mubr.bf16.mxu0 0
    %3721 = vmatmul.mubr.bf16.gmra.mrb[0].mxu0 %v3598
    %v3722 = vpop.f32.mrb[0].mxu0
    %v3723 = vadd.f32 0.0, %v3722
    %v3724 = vpop.f32.mrb[0].mxu0
    %v3725 = vpop.f32.mrb[0].mxu0
    %v3726 = vadd.f32 0.0, %v3725
    %v3727 = vpop.f32.mrb[0].mxu0
    %3728 = vmatprep.mubr.bf16.mxu0 0
    %3729 = vmatmul.mubr.bf16.gmra.mrb[0].mxu0 %v3601
    %v3730 = vpop.f32.mrb[0].mxu0
    %v3731 = vadd.f32 0.0, %v3730
    %v3732 = vpop.f32.mrb[0].mxu0
    %v3733 = vpop.f32.mrb[0].mxu0
    %v3734 = vadd.f32 0.0, %v3733
    %v3735 = vpop.f32.mrb[0].mxu0
    %3736 = vmatprep.mubr.bf16.mxu0 0
    %3737 = vmatmul.mubr.bf16.gmra.mrb[0].mxu0 %v3604
    %v3738 = vpop.f32.mrb[0].mxu0
    %v3739 = vadd.f32 0.0, %v3738
    %v3740 = vpop.f32.mrb[0].mxu0
    %v3741 = vpop.f32.mrb[0].mxu0
    %v3742 = vadd.f32 0.0, %v3741
    %v3743 = vpop.f32.mrb[0].mxu0
    %3744 = vmatprep.mubr.bf16.mxu0 0
    %3745 = vmatmul.mubr.bf16.gmra.mrb[0].mxu0 %v3607
    %v3746 = vpop.f32.mrb[0].mxu0
    %v3747 = vadd.f32 0.0, %v3746
    %v3748 = vpop.f32.mrb[0].mxu0
    %v3749 = vpop.f32.mrb[0].mxu0
    %v3750 = vadd.f32 0.0, %v3749
    %v3751 = vpop.f32.mrb[0].mxu0
    %3752 = vmatprep.mubr.bf16.mxu0 0
    %3753 = vmatmul.mubr.bf16.gmra.mrb[0].mxu0 %v3610
    %v3754 = vpop.f32.mrb[0].mxu0
    %v3755 = vadd.f32 0.0, %v3754
    %v3756 = vpop.f32.mrb[0].mxu0
    %v3757 = vpop.f32.mrb[0].mxu0
    %v3758 = vadd.f32 0.0, %v3757
    %v3759 = vpop.f32.mrb[0].mxu0
    %3760 = vmatprep.mubr.bf16.mxu0 0
    %3761 = vmatmul.mubr.bf16.gmra.mrb[0].mxu0 %v3613
    %v3762 = vpop.f32.mrb[0].mxu0
    %v3763 = vadd.f32 0.0, %v3762
    %v3764 = vpop.f32.mrb[0].mxu0
    %v3765 = vpop.f32.mrb[0].mxu0
    %v3766 = vadd.f32 0.0, %v3765
    %v3767 = vpop.f32.mrb[0].mxu0
    %3768 = vmatprep.mubr.bf16.mxu0 0
    %3769 = vmatmul.mubr.bf16.gmra.mrb[0].mxu0 %v3616
    %v3770 = vpop.f32.mrb[0].mxu0
    %v3771 = vadd.f32 0.0, %v3770
    %v3772 = vpop.f32.mrb[0].mxu0
    %v3773 = vpop.f32.mrb[0].mxu0
    %v3774 = vadd.f32 0.0, %v3773
    %v3775 = vpop.f32.mrb[0].mxu0
    %3776 = vmatprep.mubr.bf16.mxu0 0
    %3777 = vmatmul.mubr.bf16.gmra.mrb[0].mxu0 %v3619
    %v3778 = vpop.f32.mrb[0].mxu0
    %v3779 = vadd.f32 0.0, %v3778
    %v3780 = vpop.f32.mrb[0].mxu0
    %v3781 = vpop.f32.mrb[0].mxu0
    %v3782 = vadd.f32 0.0, %v3781
    %v3783 = vpop.f32.mrb[0].mxu0
    %3784 = vdwg.mxu0
    %v3785 = vadd.f32 %v3469, %v3659
    %v3786 = vadd.f32 %v3470, %v3662
    %v3787 = vadd.f32 %v3471, %v3667
    %v3788 = vadd.f32 %v3472, %v3670
    %v3789 = vadd.f32 %v3473, %v3675
    %v3790 = vadd.f32 %v3474, %v3678
    %v3791 = vadd.f32 %v3475, %v3683
    %v3792 = vadd.f32 %v3476, %v3686
    %v3793 = vadd.f32 %v3477, %v3691
    %v3794 = vadd.f32 %v3478, %v3694
    %v3795 = vadd.f32 %v3479, %v3699
    %v3796 = vadd.f32 %v3480, %v3702
    %v3797 = vadd.f32 %v3481, %v3707
    %v3798 = vadd.f32 %v3482, %v3710
    %v3799 = vadd.f32 %v3483, %v3715
    %v3800 = vadd.f32 %v3484, %v3718
    %v3801 = vadd.f32 %v3485, %v3723
    %v3802 = vadd.f32 %v3486, %v3726
    %v3803 = vadd.f32 %v3487, %v3731
    %v3804 = vadd.f32 %v3488, %v3734
    %v3805 = vadd.f32 %v3489, %v3739
    %v3806 = vadd.f32 %v3490, %v3742
    %v3807 = vadd.f32 %v3491, %v3747
    %v3808 = vadd.f32 %v3492, %v3750
    %v3809 = vadd.f32 %v3493, %v3755
    %v3810 = vadd.f32 %v3494, %v3758
    %v3811 = vadd.f32 %v3495, %v3763
    %v3812 = vadd.f32 %v3496, %v3766
    %v3813 = vadd.f32 %v3497, %v3771
    %v3814 = vadd.f32 %v3498, %v3774
    %v3815 = vadd.f32 %v3499, %v3779
    %v3816 = vadd.f32 %v3500, %v3782
    %s3817 = scalar_lea.vmem %s2, 18
    %v3818 = vld [vmem:[%s3817] sm:$0x3]
    %v3819 = vrot.slane %v1925, 4
    %v3820 = vrot.slane %v1927, 5
    %v3821 = vor.u32 %v3819, %v3820
    %v3822 = vrot.slane %v1935, 4
    %v3823 = vrot.slane %v1931, 5
    %v3824 = vor.u32 %v3822, %v3823
    %v3825 = vsel %vm3503, %v3821, %v3824
    %v3826 = vrot.slane %v1942, 4
    %v3827 = vrot.slane %v1938, 5
    %v3828 = vor.u32 %v3826, %v3827
    %v3829 = vsel %vm3503, %v3824, %v3828
    %v3830 = vrot.slane %v1949, 4
    %v3831 = vrot.slane %v1945, 5
    %v3832 = vor.u32 %v3830, %v3831
    %v3833 = vsel %vm3503, %v3828, %v3832
    %v3834 = vrot.slane %v1956, 4
    %v3835 = vrot.slane %v1952, 5
    %v3836 = vor.u32 %v3834, %v3835
    %v3837 = vsel %vm3503, %v3832, %v3836
    %v3838 = vrot.slane %v1963, 4
    %v3839 = vrot.slane %v1959, 5
    %v3840 = vor.u32 %v3838, %v3839
    %v3841 = vsel %vm3503, %v3836, %v3840
    %v3842 = vrot.slane %v1970, 4
    %v3843 = vrot.slane %v1966, 5
    %v3844 = vor.u32 %v3842, %v3843
    %v3845 = vsel %vm3503, %v3840, %v3844
    %v3846 = vrot.slane %v1977, 4
    %v3847 = vrot.slane %v1973, 5
    %v3848 = vor.u32 %v3846, %v3847
    %v3849 = vsel %vm3503, %v3844, %v3848
    %v3850 = vrot.slane %v1984, 4
    %v3851 = vrot.slane %v1980, 5
    %v3852 = vor.u32 %v3850, %v3851
    %v3853 = vsel %vm3503, %v3848, %v3852
    %v3854 = vrot.slane %v1991, 4
    %v3855 = vrot.slane %v1987, 5
    %v3856 = vor.u32 %v3854, %v3855
    %v3857 = vsel %vm3503, %v3852, %v3856
    %v3858 = vrot.slane %v1998, 4
    %v3859 = vrot.slane %v1994, 5
    %v3860 = vor.u32 %v3858, %v3859
    %v3861 = vsel %vm3503, %v3856, %v3860
    %v3862 = vrot.slane %v2005, 4
    %v3863 = vrot.slane %v2001, 5
    %v3864 = vor.u32 %v3862, %v3863
    %v3865 = vsel %vm3503, %v3860, %v3864
    %v3866 = vrot.slane %v2012, 4
    %v3867 = vrot.slane %v2008, 5
    %v3868 = vor.u32 %v3866, %v3867
    %v3869 = vsel %vm3503, %v3864, %v3868
    %v3870 = vrot.slane %v2019, 4
    %v3871 = vrot.slane %v2015, 5
    %v3872 = vor.u32 %v3870, %v3871
    %v3873 = vsel %vm3503, %v3868, %v3872
    %v3874 = vrot.slane %v2026, 4
    %v3875 = vrot.slane %v2022, 5
    %v3876 = vor.u32 %v3874, %v3875
    %v3877 = vsel %vm3503, %v3872, %v3876
    %v3878 = vrot.slane %v2033, 4
    %v3879 = vrot.slane %v2029, 5
    %v3880 = vor.u32 %v3878, %v3879
    %v3881 = vsel %vm3503, %v3876, %v3880
    %v3882 = vshrl.u32 %v888, 16
    %v3884 = vrot.slane %v3882, 4
    %v3885 = vrot.slane %v2037, 5
    %v3886 = vor.u32 %v3884, %v3885
    %v3887 = vsel %vm3503, %v3880, %v3886
    %v3889 = vsel %vm1134, %v3825, 0
    %v3892 = vsel %vm1134, %v3829, 0
    %v3895 = vsel %vm1134, %v3833, 0
    %v3898 = vsel %vm1134, %v3837, 0
    %v3901 = vsel %vm1134, %v3841, 0
    %v3904 = vsel %vm1134, %v3845, 0
    %v3907 = vsel %vm1134, %v3849, 0
    %v3910 = vsel %vm1134, %v3853, 0
    %v3913 = vsel %vm1134, %v3857, 0
    %v3916 = vsel %vm1134, %v3861, 0
    %v3919 = vsel %vm1134, %v3865, 0
    %v3922 = vsel %vm1134, %v3869, 0
    %v3925 = vsel %vm1134, %v3873, 0
    %v3928 = vsel %vm1134, %v3877, 0
    %v3931 = vsel %vm1134, %v3881, 0
    %v3934 = vsel %vm1134, %v3887, 0
    %v3937 = vsel %vm1183, %v3818, 0
    %3939 = vmatprep.subr.bf16.mxu0 0
    %3940 = vmatpush1.bf16.msra.mxu0 %v3937
    %3941 = vmatprep.subr.bf16.mxu0 0
    %3942 = vmatpush1.bf16.msra.mxu0 0
    %3943 = vmatprep.subr.bf16.mxu0 0
    %3944 = vmatpush1.bf16.msra.mxu0 0
    %3945 = vmatprep.subr.bf16.mxu0 0
    %3946 = vmatpush1.bf16.msra.mxu0 0
    %3947 = vmatprep.subr.bf16.mxu0 0
    %3948 = vmatpush1.bf16.msra.mxu0 0
    %3949 = vmatprep.subr.bf16.mxu0 0
    %3950 = vmatpush1.bf16.msra.mxu0 0
    %3951 = vmatprep.subr.bf16.mxu0 0
    %3952 = vmatpush1.bf16.msra.mxu0 0
    %3953 = vmatprep.subr.bf16.mxu0 0
    %3954 = vmatpush1.bf16.msra.mxu0 0
    %3955 = vmatprep.subr.bf16.mxu0 0
    %3956 = vmatpush1.bf16.msra.mxu0 0
    %3957 = vmatprep.subr.bf16.mxu0 0
    %3958 = vmatpush1.bf16.msra.mxu0 0
    %3959 = vmatprep.subr.bf16.mxu0 0
    %3960 = vmatpush1.bf16.msra.mxu0 0
    %3961 = vmatprep.subr.bf16.mxu0 0
    %3962 = vmatpush1.bf16.msra.mxu0 0
    %3963 = vmatprep.subr.bf16.mxu0 0
    %3964 = vmatpush1.bf16.msra.mxu0 0
    %3965 = vmatprep.subr.bf16.mxu0 0
    %3966 = vmatpush1.bf16.msra.mxu0 0
    %3967 = vmatprep.subr.bf16.mxu0 0
    %3968 = vmatpush1.bf16.msra.mxu0 0
    %3969 = vmatprep.subr.bf16.mxu0 0
    %3970 = vmatpush1.bf16.msra.mxu0 0
    %3971 = vmatprep.mubr.bf16.mxu0 0
    %3972 = vmatmul.mubr.bf16.gmra.mrb[0].mxu0 %v3889
    %v3973 = vpop.f32.mrb[0].mxu0
    %v3974 = vadd.f32 0.0, %v3973
    %v3975 = vpop.f32.mrb[0].mxu0
    %v3976 = vpop.f32.mrb[0].mxu0
    %v3977 = vadd.f32 0.0, %v3976
    %v3978 = vpop.f32.mrb[0].mxu0
    %3979 = vmatprep.mubr.bf16.mxu0 0
    %3980 = vmatmul.mubr.bf16.gmra.mrb[0].mxu0 %v3892
    %v3981 = vpop.f32.mrb[0].mxu0
    %v3982 = vadd.f32 0.0, %v3981
    %v3983 = vpop.f32.mrb[0].mxu0
    %v3984 = vpop.f32.mrb[0].mxu0
    %v3985 = vadd.f32 0.0, %v3984
    %v3986 = vpop.f32.mrb[0].mxu0
    %3987 = vmatprep.mubr.bf16.mxu0 0
    %3988 = vmatmul.mubr.bf16.gmra.mrb[0].mxu0 %v3895
    %v3989 = vpop.f32.mrb[0].mxu0
    %v3990 = vadd.f32 0.0, %v3989
    %v3991 = vpop.f32.mrb[0].mxu0
    %v3992 = vpop.f32.mrb[0].mxu0
    %v3993 = vadd.f32 0.0, %v3992
    %v3994 = vpop.f32.mrb[0].mxu0
    %3995 = vmatprep.mubr.bf16.mxu0 0
    %3996 = vmatmul.mubr.bf16.gmra.mrb[0].mxu0 %v3898
    %v3997 = vpop.f32.mrb[0].mxu0
    %v3998 = vadd.f32 0.0, %v3997
    %v3999 = vpop.f32.mrb[0].mxu0
    %v4000 = vpop.f32.mrb[0].mxu0
    %v4001 = vadd.f32 0.0, %v4000
    %v4002 = vpop.f32.mrb[0].mxu0
    %4003 = vmatprep.mubr.bf16.mxu0 0
    %4004 = vmatmul.mubr.bf16.gmra.mrb[0].mxu0 %v3901
    %v4005 = vpop.f32.mrb[0].mxu0
    %v4006 = vadd.f32 0.0, %v4005
    %v4007 = vpop.f32.mrb[0].mxu0
    %v4008 = vpop.f32.mrb[0].mxu0
    %v4009 = vadd.f32 0.0, %v4008
    %v4010 = vpop.f32.mrb[0].mxu0
    %4011 = vmatprep.mubr.bf16.mxu0 0
    %4012 = vmatmul.mubr.bf16.gmra.mrb[0].mxu0 %v3904
    %v4013 = vpop.f32.mrb[0].mxu0
    %v4014 = vadd.f32 0.0, %v4013
    %v4015 = vpop.f32.mrb[0].mxu0
    %v4016 = vpop.f32.mrb[0].mxu0
    %v4017 = vadd.f32 0.0, %v4016
    %v4018 = vpop.f32.mrb[0].mxu0
    %4019 = vmatprep.mubr.bf16.mxu0 0
    %4020 = vmatmul.mubr.bf16.gmra.mrb[0].mxu0 %v3907
    %v4021 = vpop.f32.mrb[0].mxu0
    %v4022 = vadd.f32 0.0, %v4021
    %v4023 = vpop.f32.mrb[0].mxu0
    %v4024 = vpop.f32.mrb[0].mxu0
    %v4025 = vadd.f32 0.0, %v4024
    %v4026 = vpop.f32.mrb[0].mxu0
    %4027 = vmatprep.mubr.bf16.mxu0 0
    %4028 = vmatmul.mubr.bf16.gmra.mrb[0].mxu0 %v3910
    %v4029 = vpop.f32.mrb[0].mxu0
    %v4030 = vadd.f32 0.0, %v4029
    %v4031 = vpop.f32.mrb[0].mxu0
    %v4032 = vpop.f32.mrb[0].mxu0
    %v4033 = vadd.f32 0.0, %v4032
    %v4034 = vpop.f32.mrb[0].mxu0
    %4035 = vmatprep.mubr.bf16.mxu0 0
    %4036 = vmatmul.mubr.bf16.gmra.mrb[0].mxu0 %v3913
    %v4037 = vpop.f32.mrb[0].mxu0
    %v4038 = vadd.f32 0.0, %v4037
    %v4039 = vpop.f32.mrb[0].mxu0
    %v4040 = vpop.f32.mrb[0].mxu0
    %v4041 = vadd.f32 0.0, %v4040
    %v4042 = vpop.f32.mrb[0].mxu0
    %4043 = vmatprep.mubr.bf16.mxu0 0
    %4044 = vmatmul.mubr.bf16.gmra.mrb[0].mxu0 %v3916
    %v4045 = vpop.f32.mrb[0].mxu0
    %v4046 = vadd.f32 0.0, %v4045
    %v4047 = vpop.f32.mrb[0].mxu0
    %v4048 = vpop.f32.mrb[0].mxu0
    %v4049 = vadd.f32 0.0, %v4048
    %v4050 = vpop.f32.mrb[0].mxu0
    %4051 = vmatprep.mubr.bf16.mxu0 0
    %4052 = vmatmul.mubr.bf16.gmra.mrb[0].mxu0 %v3919
    %v4053 = vpop.f32.mrb[0].mxu0
    %v4054 = vadd.f32 0.0, %v4053
    %v4055 = vpop.f32.mrb[0].mxu0
    %v4056 = vpop.f32.mrb[0].mxu0
    %v4057 = vadd.f32 0.0, %v4056
    %v4058 = vpop.f32.mrb[0].mxu0
    %4059 = vmatprep.mubr.bf16.mxu0 0
    %4060 = vmatmul.mubr.bf16.gmra.mrb[0].mxu0 %v3922
    %v4061 = vpop.f32.mrb[0].mxu0
    %v4062 = vadd.f32 0.0, %v4061
    %v4063 = vpop.f32.mrb[0].mxu0
    %v4064 = vpop.f32.mrb[0].mxu0
    %v4065 = vadd.f32 0.0, %v4064
    %v4066 = vpop.f32.mrb[0].mxu0
    %4067 = vmatprep.mubr.bf16.mxu0 0
    %4068 = vmatmul.mubr.bf16.gmra.mrb[0].mxu0 %v3925
    %v4069 = vpop.f32.mrb[0].mxu0
    %v4070 = vadd.f32 0.0, %v4069
    %v4071 = vpop.f32.mrb[0].mxu0
    %v4072 = vpop.f32.mrb[0].mxu0
    %v4073 = vadd.f32 0.0, %v4072
    %v4074 = vpop.f32.mrb[0].mxu0
    %4075 = vmatprep.mubr.bf16.mxu0 0
    %4076 = vmatmul.mubr.bf16.gmra.mrb[0].mxu0 %v3928
    %v4077 = vpop.f32.mrb[0].mxu0
    %v4078 = vadd.f32 0.0, %v4077
    %v4079 = vpop.f32.mrb[0].mxu0
    %v4080 = vpop.f32.mrb[0].mxu0
    %v4081 = vadd.f32 0.0, %v4080
    %v4082 = vpop.f32.mrb[0].mxu0
    %4083 = vmatprep.mubr.bf16.mxu0 0
    %4084 = vmatmul.mubr.bf16.gmra.mrb[0].mxu0 %v3931
    %v4085 = vpop.f32.mrb[0].mxu0
    %v4086 = vadd.f32 0.0, %v4085
    %v4087 = vpop.f32.mrb[0].mxu0
    %v4088 = vpop.f32.mrb[0].mxu0
    %v4089 = vadd.f32 0.0, %v4088
    %v4090 = vpop.f32.mrb[0].mxu0
    %4091 = vmatprep.mubr.bf16.mxu0 0
    %4092 = vmatmul.mubr.bf16.gmra.mrb[0].mxu0 %v3934
    %v4093 = vpop.f32.mrb[0].mxu0
    %v4094 = vadd.f32 0.0, %v4093
    %v4095 = vpop.f32.mrb[0].mxu0
    %v4096 = vpop.f32.mrb[0].mxu0
    %v4097 = vadd.f32 0.0, %v4096
    %v4098 = vpop.f32.mrb[0].mxu0
    %4099 = vdwg.mxu0
    %v4100 = vadd.f32 %v3785, %v3974
    %v4101 = vadd.f32 %v3786, %v3977
    %v4102 = vadd.f32 %v3787, %v3982
    %v4103 = vadd.f32 %v3788, %v3985
    %v4104 = vadd.f32 %v3789, %v3990
    %v4105 = vadd.f32 %v3790, %v3993
    %v4106 = vadd.f32 %v3791, %v3998
    %v4107 = vadd.f32 %v3792, %v4001
    %v4108 = vadd.f32 %v3793, %v4006
    %v4109 = vadd.f32 %v3794, %v4009
    %v4110 = vadd.f32 %v3795, %v4014
    %v4111 = vadd.f32 %v3796, %v4017
    %v4112 = vadd.f32 %v3797, %v4022
    %v4113 = vadd.f32 %v3798, %v4025
    %v4114 = vadd.f32 %v3799, %v4030
    %v4115 = vadd.f32 %v3800, %v4033
    %v4116 = vadd.f32 %v3801, %v4038
    %v4117 = vadd.f32 %v3802, %v4041
    %v4118 = vadd.f32 %v3803, %v4046
    %v4119 = vadd.f32 %v3804, %v4049
    %v4120 = vadd.f32 %v3805, %v4054
    %v4121 = vadd.f32 %v3806, %v4057
    %v4122 = vadd.f32 %v3807, %v4062
    %v4123 = vadd.f32 %v3808, %v4065
    %v4124 = vadd.f32 %v3809, %v4070
    %v4125 = vadd.f32 %v3810, %v4073
    %v4126 = vadd.f32 %v3811, %v4078
    %v4127 = vadd.f32 %v3812, %v4081
    %v4128 = vadd.f32 %v3813, %v4086
    %v4129 = vadd.f32 %v3814, %v4089
    %v4130 = vadd.f32 %v3815, %v4094
    %v4131 = vadd.f32 %v3816, %v4097
    %s4132 = scalar_lea.vmem %s2, 20
    %v4133 = vld [vmem:[%s4132] sm:$0x3]
    %vm4134 = vcmask 1042432
    %v4135 = vrot.slane %v747, 5
    %v4136 = vrot.slane %v748, 5
    %v4137 = vsel %vm4134, %v4135, %v4136
    %v4138 = vrot.slane %v749, 5
    %v4139 = vsel %vm4134, %v4136, %v4138
    %v4140 = vrot.slane %v750, 5
    %v4141 = vsel %vm4134, %v4138, %v4140
    %v4142 = vrot.slane %v751, 5
    %v4143 = vsel %vm4134, %v4140, %v4142
    %v4144 = vrot.slane %v752, 5
    %v4145 = vsel %vm4134, %v4142, %v4144
    %v4146 = vrot.slane %v753, 5
    %v4147 = vsel %vm4134, %v4144, %v4146
    %v4148 = vrot.slane %v754, 5
    %v4149 = vsel %vm4134, %v4146, %v4148
    %v4150 = vrot.slane %v755, 5
    %v4151 = vsel %vm4134, %v4148, %v4150
    %v4152 = vrot.slane %v756, 5
    %v4153 = vsel %vm4134, %v4150, %v4152
    %v4154 = vrot.slane %v757, 5
    %v4155 = vsel %vm4134, %v4152, %v4154
    %v4156 = vrot.slane %v758, 5
    %v4157 = vsel %vm4134, %v4154, %v4156
    %v4158 = vrot.slane %v759, 5
    %v4159 = vsel %vm4134, %v4156, %v4158
    %v4160 = vrot.slane %v760, 5
    %v4161 = vsel %vm4134, %v4158, %v4160
    %v4162 = vrot.slane %v761, 5
    %v4163 = vsel %vm4134, %v4160, %v4162
    %v4164 = vrot.slane %v762, 5
    %v4165 = vsel %vm4134, %v4162, %v4164
    %v4166 = vrot.slane %v767, 5
    %v4167 = vsel %vm4134, %v4164, %v4166
    %v4169 = vsel %vm1134, %v4137, 0
    %v4172 = vsel %vm1134, %v4139, 0
    %v4175 = vsel %vm1134, %v4141, 0
    %v4178 = vsel %vm1134, %v4143, 0
    %v4181 = vsel %vm1134, %v4145, 0
    %v4184 = vsel %vm1134, %v4147, 0
    %v4187 = vsel %vm1134, %v4149, 0
    %v4190 = vsel %vm1134, %v4151, 0
    %v4193 = vsel %vm1134, %v4153, 0
    %v4196 = vsel %vm1134, %v4155, 0
    %v4199 = vsel %vm1134, %v4157, 0
    %v4202 = vsel %vm1134, %v4159, 0
    %v4205 = vsel %vm1134, %v4161, 0
    %v4208 = vsel %vm1134, %v4163, 0
    %v4211 = vsel %vm1134, %v4165, 0
    %v4214 = vsel %vm1134, %v4167, 0
    %v4217 = vsel %vm1183, %v4133, 0
    %4219 = vmatprep.subr.bf16.mxu0 0
    %4220 = vmatpush1.bf16.msra.mxu0 %v4217
    %4221 = vmatprep.subr.bf16.mxu0 0
    %4222 = vmatpush1.bf16.msra.mxu0 0
    %4223 = vmatprep.subr.bf16.mxu0 0
    %4224 = vmatpush1.bf16.msra.mxu0 0
    %4225 = vmatprep.subr.bf16.mxu0 0
    %4226 = vmatpush1.bf16.msra.mxu0 0
    %4227 = vmatprep.subr.bf16.mxu0 0
    %4228 = vmatpush1.bf16.msra.mxu0 0
    %4229 = vmatprep.subr.bf16.mxu0 0
    %4230 = vmatpush1.bf16.msra.mxu0 0
    %4231 = vmatprep.subr.bf16.mxu0 0
    %4232 = vmatpush1.bf16.msra.mxu0 0
    %4233 = vmatprep.subr.bf16.mxu0 0
    %4234 = vmatpush1.bf16.msra.mxu0 0
    %4235 = vmatprep.subr.bf16.mxu0 0
    %4236 = vmatpush1.bf16.msra.mxu0 0
    %4237 = vmatprep.subr.bf16.mxu0 0
    %4238 = vmatpush1.bf16.msra.mxu0 0
    %4239 = vmatprep.subr.bf16.mxu0 0
    %4240 = vmatpush1.bf16.msra.mxu0 0
    %4241 = vmatprep.subr.bf16.mxu0 0
    %4242 = vmatpush1.bf16.msra.mxu0 0
    %4243 = vmatprep.subr.bf16.mxu0 0
    %4244 = vmatpush1.bf16.msra.mxu0 0
    %4245 = vmatprep.subr.bf16.mxu0 0
    %4246 = vmatpush1.bf16.msra.mxu0 0
    %4247 = vmatprep.subr.bf16.mxu0 0
    %4248 = vmatpush1.bf16.msra.mxu0 0
    %4249 = vmatprep.subr.bf16.mxu0 0
    %4250 = vmatpush1.bf16.msra.mxu0 0
    %4251 = vmatprep.mubr.bf16.mxu0 0
    %4252 = vmatmul.mubr.bf16.gmra.mrb[0].mxu0 %v4169
    %v4253 = vpop.f32.mrb[0].mxu0
    %v4254 = vadd.f32 0.0, %v4253
    %v4255 = vpop.f32.mrb[0].mxu0
    %v4256 = vpop.f32.mrb[0].mxu0
    %v4257 = vadd.f32 0.0, %v4256
    %v4258 = vpop.f32.mrb[0].mxu0
    %4259 = vmatprep.mubr.bf16.mxu0 0
    %4260 = vmatmul.mubr.bf16.gmra.mrb[0].mxu0 %v4172
    %v4261 = vpop.f32.mrb[0].mxu0
    %v4262 = vadd.f32 0.0, %v4261
    %v4263 = vpop.f32.mrb[0].mxu0
    %v4264 = vpop.f32.mrb[0].mxu0
    %v4265 = vadd.f32 0.0, %v4264
    %v4266 = vpop.f32.mrb[0].mxu0
    %4267 = vmatprep.mubr.bf16.mxu0 0
    %4268 = vmatmul.mubr.bf16.gmra.mrb[0].mxu0 %v4175
    %v4269 = vpop.f32.mrb[0].mxu0
    %v4270 = vadd.f32 0.0, %v4269
    %v4271 = vpop.f32.mrb[0].mxu0
    %v4272 = vpop.f32.mrb[0].mxu0
    %v4273 = vadd.f32 0.0, %v4272
    %v4274 = vpop.f32.mrb[0].mxu0
    %4275 = vmatprep.mubr.bf16.mxu0 0
    %4276 = vmatmul.mubr.bf16.gmra.mrb[0].mxu0 %v4178
    %v4277 = vpop.f32.mrb[0].mxu0
    %v4278 = vadd.f32 0.0, %v4277
    %v4279 = vpop.f32.mrb[0].mxu0
    %v4280 = vpop.f32.mrb[0].mxu0
    %v4281 = vadd.f32 0.0, %v4280
    %v4282 = vpop.f32.mrb[0].mxu0
    %4283 = vmatprep.mubr.bf16.mxu0 0
    %4284 = vmatmul.mubr.bf16.gmra.mrb[0].mxu0 %v4181
    %v4285 = vpop.f32.mrb[0].mxu0
    %v4286 = vadd.f32 0.0, %v4285
    %v4287 = vpop.f32.mrb[0].mxu0
    %v4288 = vpop.f32.mrb[0].mxu0
    %v4289 = vadd.f32 0.0, %v4288
    %v4290 = vpop.f32.mrb[0].mxu0
    %4291 = vmatprep.mubr.bf16.mxu0 0
    %4292 = vmatmul.mubr.bf16.gmra.mrb[0].mxu0 %v4184
    %v4293 = vpop.f32.mrb[0].mxu0
    %v4294 = vadd.f32 0.0, %v4293
    %v4295 = vpop.f32.mrb[0].mxu0
    %v4296 = vpop.f32.mrb[0].mxu0
    %v4297 = vadd.f32 0.0, %v4296
    %v4298 = vpop.f32.mrb[0].mxu0
    %4299 = vmatprep.mubr.bf16.mxu0 0
    %4300 = vmatmul.mubr.bf16.gmra.mrb[0].mxu0 %v4187
    %v4301 = vpop.f32.mrb[0].mxu0
    %v4302 = vadd.f32 0.0, %v4301
    %v4303 = vpop.f32.mrb[0].mxu0
    %v4304 = vpop.f32.mrb[0].mxu0
    %v4305 = vadd.f32 0.0, %v4304
    %v4306 = vpop.f32.mrb[0].mxu0
    %4307 = vmatprep.mubr.bf16.mxu0 0
    %4308 = vmatmul.mubr.bf16.gmra.mrb[0].mxu0 %v4190
    %v4309 = vpop.f32.mrb[0].mxu0
    %v4310 = vadd.f32 0.0, %v4309
    %v4311 = vpop.f32.mrb[0].mxu0
    %v4312 = vpop.f32.mrb[0].mxu0
    %v4313 = vadd.f32 0.0, %v4312
    %v4314 = vpop.f32.mrb[0].mxu0
    %4315 = vmatprep.mubr.bf16.mxu0 0
    %4316 = vmatmul.mubr.bf16.gmra.mrb[0].mxu0 %v4193
    %v4317 = vpop.f32.mrb[0].mxu0
    %v4318 = vadd.f32 0.0, %v4317
    %v4319 = vpop.f32.mrb[0].mxu0
    %v4320 = vpop.f32.mrb[0].mxu0
    %v4321 = vadd.f32 0.0, %v4320
    %v4322 = vpop.f32.mrb[0].mxu0
    %4323 = vmatprep.mubr.bf16.mxu0 0
    %4324 = vmatmul.mubr.bf16.gmra.mrb[0].mxu0 %v4196
    %v4325 = vpop.f32.mrb[0].mxu0
    %v4326 = vadd.f32 0.0, %v4325
    %v4327 = vpop.f32.mrb[0].mxu0
    %v4328 = vpop.f32.mrb[0].mxu0
    %v4329 = vadd.f32 0.0, %v4328
    %v4330 = vpop.f32.mrb[0].mxu0
    %4331 = vmatprep.mubr.bf16.mxu0 0
    %4332 = vmatmul.mubr.bf16.gmra.mrb[0].mxu0 %v4199
    %v4333 = vpop.f32.mrb[0].mxu0
    %v4334 = vadd.f32 0.0, %v4333
    %v4335 = vpop.f32.mrb[0].mxu0
    %v4336 = vpop.f32.mrb[0].mxu0
    %v4337 = vadd.f32 0.0, %v4336
    %v4338 = vpop.f32.mrb[0].mxu0
    %4339 = vmatprep.mubr.bf16.mxu0 0
    %4340 = vmatmul.mubr.bf16.gmra.mrb[0].mxu0 %v4202
    %v4341 = vpop.f32.mrb[0].mxu0
    %v4342 = vadd.f32 0.0, %v4341
    %v4343 = vpop.f32.mrb[0].mxu0
    %v4344 = vpop.f32.mrb[0].mxu0
    %v4345 = vadd.f32 0.0, %v4344
    %v4346 = vpop.f32.mrb[0].mxu0
    %4347 = vmatprep.mubr.bf16.mxu0 0
    %4348 = vmatmul.mubr.bf16.gmra.mrb[0].mxu0 %v4205
    %v4349 = vpop.f32.mrb[0].mxu0
    %v4350 = vadd.f32 0.0, %v4349
    %v4351 = vpop.f32.mrb[0].mxu0
    %v4352 = vpop.f32.mrb[0].mxu0
    %v4353 = vadd.f32 0.0, %v4352
    %v4354 = vpop.f32.mrb[0].mxu0
    %4355 = vmatprep.mubr.bf16.mxu0 0
    %4356 = vmatmul.mubr.bf16.gmra.mrb[0].mxu0 %v4208
    %v4357 = vpop.f32.mrb[0].mxu0
    %v4358 = vadd.f32 0.0, %v4357
    %v4359 = vpop.f32.mrb[0].mxu0
    %v4360 = vpop.f32.mrb[0].mxu0
    %v4361 = vadd.f32 0.0, %v4360
    %v4362 = vpop.f32.mrb[0].mxu0
    %4363 = vmatprep.mubr.bf16.mxu0 0
    %4364 = vmatmul.mubr.bf16.gmra.mrb[0].mxu0 %v4211
    %v4365 = vpop.f32.mrb[0].mxu0
    %v4366 = vadd.f32 0.0, %v4365
    %v4367 = vpop.f32.mrb[0].mxu0
    %v4368 = vpop.f32.mrb[0].mxu0
    %v4369 = vadd.f32 0.0, %v4368
    %v4370 = vpop.f32.mrb[0].mxu0
    %4371 = vmatprep.mubr.bf16.mxu0 0
    %4372 = vmatmul.mubr.bf16.gmra.mrb[0].mxu0 %v4214
    %v4373 = vpop.f32.mrb[0].mxu0
    %v4374 = vadd.f32 0.0, %v4373
    %v4375 = vpop.f32.mrb[0].mxu0
    %v4376 = vpop.f32.mrb[0].mxu0
    %v4377 = vadd.f32 0.0, %v4376
    %v4378 = vpop.f32.mrb[0].mxu0
    %4379 = vdwg.mxu0
    %v4380 = vadd.f32 %v4100, %v4254
    %v4381 = vadd.f32 %v4101, %v4257
    %v4382 = vadd.f32 %v4102, %v4262
    %v4383 = vadd.f32 %v4103, %v4265
    %v4384 = vadd.f32 %v4104, %v4270
    %v4385 = vadd.f32 %v4105, %v4273
    %v4386 = vadd.f32 %v4106, %v4278
    %v4387 = vadd.f32 %v4107, %v4281
    %v4388 = vadd.f32 %v4108, %v4286
    %v4389 = vadd.f32 %v4109, %v4289
    %v4390 = vadd.f32 %v4110, %v4294
    %v4391 = vadd.f32 %v4111, %v4297
    %v4392 = vadd.f32 %v4112, %v4302
    %v4393 = vadd.f32 %v4113, %v4305
    %v4394 = vadd.f32 %v4114, %v4310
    %v4395 = vadd.f32 %v4115, %v4313
    %v4396 = vadd.f32 %v4116, %v4318
    %v4397 = vadd.f32 %v4117, %v4321
    %v4398 = vadd.f32 %v4118, %v4326
    %v4399 = vadd.f32 %v4119, %v4329
    %v4400 = vadd.f32 %v4120, %v4334
    %v4401 = vadd.f32 %v4121, %v4337
    %v4402 = vadd.f32 %v4122, %v4342
    %v4403 = vadd.f32 %v4123, %v4345
    %v4404 = vadd.f32 %v4124, %v4350
    %v4405 = vadd.f32 %v4125, %v4353
    %v4406 = vadd.f32 %v4126, %v4358
    %v4407 = vadd.f32 %v4127, %v4361
    %v4408 = vadd.f32 %v4128, %v4366
    %v4409 = vadd.f32 %v4129, %v4369
    %v4410 = vadd.f32 %v4130, %v4374
    %v4411 = vadd.f32 %v4131, %v4377
    %s4412 = scalar_lea.vmem %s2, 22
    %v4413 = vld [vmem:[%s4412] sm:$0x3]
    %v4414 = vrot.slane %v868, 5
    %v4415 = vrot.slane %v869, 5
    %v4416 = vsel %vm4134, %v4414, %v4415
    %v4417 = vrot.slane %v870, 5
    %v4418 = vsel %vm4134, %v4415, %v4417
    %v4419 = vrot.slane %v871, 5
    %v4420 = vsel %vm4134, %v4417, %v4419
    %v4421 = vrot.slane %v872, 5
    %v4422 = vsel %vm4134, %v4419, %v4421
    %v4423 = vrot.slane %v873, 5
    %v4424 = vsel %vm4134, %v4421, %v4423
    %v4425 = vrot.slane %v874, 5
    %v4426 = vsel %vm4134, %v4423, %v4425
    %v4427 = vrot.slane %v875, 5
    %v4428 = vsel %vm4134, %v4425, %v4427
    %v4429 = vrot.slane %v876, 5
    %v4430 = vsel %vm4134, %v4427, %v4429
    %v4431 = vrot.slane %v877, 5
    %v4432 = vsel %vm4134, %v4429, %v4431
    %v4433 = vrot.slane %v878, 5
    %v4434 = vsel %vm4134, %v4431, %v4433
    %v4435 = vrot.slane %v879, 5
    %v4436 = vsel %vm4134, %v4433, %v4435
    %v4437 = vrot.slane %v880, 5
    %v4438 = vsel %vm4134, %v4435, %v4437
    %v4439 = vrot.slane %v881, 5
    %v4440 = vsel %vm4134, %v4437, %v4439
    %v4441 = vrot.slane %v882, 5
    %v4442 = vsel %vm4134, %v4439, %v4441
    %v4443 = vrot.slane %v883, 5
    %v4444 = vsel %vm4134, %v4441, %v4443
    %v4445 = vrot.slane %v888, 5
    %v4446 = vsel %vm4134, %v4443, %v4445
    %v4448 = vsel %vm1134, %v4416, 0
    %v4451 = vsel %vm1134, %v4418, 0
    %v4454 = vsel %vm1134, %v4420, 0
    %v4457 = vsel %vm1134, %v4422, 0
    %v4460 = vsel %vm1134, %v4424, 0
    %v4463 = vsel %vm1134, %v4426, 0
    %v4466 = vsel %vm1134, %v4428, 0
    %v4469 = vsel %vm1134, %v4430, 0
    %v4472 = vsel %vm1134, %v4432, 0
    %v4475 = vsel %vm1134, %v4434, 0
    %v4478 = vsel %vm1134, %v4436, 0
    %v4481 = vsel %vm1134, %v4438, 0
    %v4484 = vsel %vm1134, %v4440, 0
    %v4487 = vsel %vm1134, %v4442, 0
    %v4490 = vsel %vm1134, %v4444, 0
    %v4493 = vsel %vm1134, %v4446, 0
    %v4496 = vsel %vm1183, %v4413, 0
    %4498 = vmatprep.subr.bf16.mxu0 0
    %4499 = vmatpush1.bf16.msra.mxu0 %v4496
    %4500 = vmatprep.subr.bf16.mxu0 0
    %4501 = vmatpush1.bf16.msra.mxu0 0
    %4502 = vmatprep.subr.bf16.mxu0 0
    %4503 = vmatpush1.bf16.msra.mxu0 0
    %4504 = vmatprep.subr.bf16.mxu0 0
    %4505 = vmatpush1.bf16.msra.mxu0 0
    %4506 = vmatprep.subr.bf16.mxu0 0
    %4507 = vmatpush1.bf16.msra.mxu0 0
    %4508 = vmatprep.subr.bf16.mxu0 0
    %4509 = vmatpush1.bf16.msra.mxu0 0
    %4510 = vmatprep.subr.bf16.mxu0 0
    %4511 = vmatpush1.bf16.msra.mxu0 0
    %4512 = vmatprep.subr.bf16.mxu0 0
    %4513 = vmatpush1.bf16.msra.mxu0 0
    %4514 = vmatprep.subr.bf16.mxu0 0
    %4515 = vmatpush1.bf16.msra.mxu0 0
    %4516 = vmatprep.subr.bf16.mxu0 0
    %4517 = vmatpush1.bf16.msra.mxu0 0
    %4518 = vmatprep.subr.bf16.mxu0 0
    %4519 = vmatpush1.bf16.msra.mxu0 0
    %4520 = vmatprep.subr.bf16.mxu0 0
    %4521 = vmatpush1.bf16.msra.mxu0 0
    %4522 = vmatprep.subr.bf16.mxu0 0
    %4523 = vmatpush1.bf16.msra.mxu0 0
    %4524 = vmatprep.subr.bf16.mxu0 0
    %4525 = vmatpush1.bf16.msra.mxu0 0
    %4526 = vmatprep.subr.bf16.mxu0 0
    %4527 = vmatpush1.bf16.msra.mxu0 0
    %4528 = vmatprep.subr.bf16.mxu0 0
    %4529 = vmatpush1.bf16.msra.mxu0 0
    %4530 = vmatprep.mubr.bf16.mxu0 0
    %4531 = vmatmul.mubr.bf16.gmra.mrb[0].mxu0 %v4448
    %v4532 = vpop.f32.mrb[0].mxu0
    %v4533 = vadd.f32 0.0, %v4532
    %v4534 = vpop.f32.mrb[0].mxu0
    %v4535 = vpop.f32.mrb[0].mxu0
    %v4536 = vadd.f32 0.0, %v4535
    %v4537 = vpop.f32.mrb[0].mxu0
    %4538 = vmatprep.mubr.bf16.mxu0 0
    %4539 = vmatmul.mubr.bf16.gmra.mrb[0].mxu0 %v4451
    %v4540 = vpop.f32.mrb[0].mxu0
    %v4541 = vadd.f32 0.0, %v4540
    %v4542 = vpop.f32.mrb[0].mxu0
    %v4543 = vpop.f32.mrb[0].mxu0
    %v4544 = vadd.f32 0.0, %v4543
    %v4545 = vpop.f32.mrb[0].mxu0
    %4546 = vmatprep.mubr.bf16.mxu0 0
    %4547 = vmatmul.mubr.bf16.gmra.mrb[0].mxu0 %v4454
    %v4548 = vpop.f32.mrb[0].mxu0
    %v4549 = vadd.f32 0.0, %v4548
    %v4550 = vpop.f32.mrb[0].mxu0
    %v4551 = vpop.f32.mrb[0].mxu0
    %v4552 = vadd.f32 0.0, %v4551
    %v4553 = vpop.f32.mrb[0].mxu0
    %4554 = vmatprep.mubr.bf16.mxu0 0
    %4555 = vmatmul.mubr.bf16.gmra.mrb[0].mxu0 %v4457
    %v4556 = vpop.f32.mrb[0].mxu0
    %v4557 = vadd.f32 0.0, %v4556
    %v4558 = vpop.f32.mrb[0].mxu0
    %v4559 = vpop.f32.mrb[0].mxu0
    %v4560 = vadd.f32 0.0, %v4559
    %v4561 = vpop.f32.mrb[0].mxu0
    %4562 = vmatprep.mubr.bf16.mxu0 0
    %4563 = vmatmul.mubr.bf16.gmra.mrb[0].mxu0 %v4460
    %v4564 = vpop.f32.mrb[0].mxu0
    %v4565 = vadd.f32 0.0, %v4564
    %v4566 = vpop.f32.mrb[0].mxu0
    %v4567 = vpop.f32.mrb[0].mxu0
    %v4568 = vadd.f32 0.0, %v4567
    %v4569 = vpop.f32.mrb[0].mxu0
    %4570 = vmatprep.mubr.bf16.mxu0 0
    %4571 = vmatmul.mubr.bf16.gmra.mrb[0].mxu0 %v4463
    %v4572 = vpop.f32.mrb[0].mxu0
    %v4573 = vadd.f32 0.0, %v4572
    %v4574 = vpop.f32.mrb[0].mxu0
    %v4575 = vpop.f32.mrb[0].mxu0
    %v4576 = vadd.f32 0.0, %v4575
    %v4577 = vpop.f32.mrb[0].mxu0
    %4578 = vmatprep.mubr.bf16.mxu0 0
    %4579 = vmatmul.mubr.bf16.gmra.mrb[0].mxu0 %v4466
    %v4580 = vpop.f32.mrb[0].mxu0
    %v4581 = vadd.f32 0.0, %v4580
    %v4582 = vpop.f32.mrb[0].mxu0
    %v4583 = vpop.f32.mrb[0].mxu0
    %v4584 = vadd.f32 0.0, %v4583
    %v4585 = vpop.f32.mrb[0].mxu0
    %4586 = vmatprep.mubr.bf16.mxu0 0
    %4587 = vmatmul.mubr.bf16.gmra.mrb[0].mxu0 %v4469
    %v4588 = vpop.f32.mrb[0].mxu0
    %v4589 = vadd.f32 0.0, %v4588
    %v4590 = vpop.f32.mrb[0].mxu0
    %v4591 = vpop.f32.mrb[0].mxu0
    %v4592 = vadd.f32 0.0, %v4591
    %v4593 = vpop.f32.mrb[0].mxu0
    %4594 = vmatprep.mubr.bf16.mxu0 0
    %4595 = vmatmul.mubr.bf16.gmra.mrb[0].mxu0 %v4472
    %v4596 = vpop.f32.mrb[0].mxu0
    %v4597 = vadd.f32 0.0, %v4596
    %v4598 = vpop.f32.mrb[0].mxu0
    %v4599 = vpop.f32.mrb[0].mxu0
    %v4600 = vadd.f32 0.0, %v4599
    %v4601 = vpop.f32.mrb[0].mxu0
    %4602 = vmatprep.mubr.bf16.mxu0 0
    %4603 = vmatmul.mubr.bf16.gmra.mrb[0].mxu0 %v4475
    %v4604 = vpop.f32.mrb[0].mxu0
    %v4605 = vadd.f32 0.0, %v4604
    %v4606 = vpop.f32.mrb[0].mxu0
    %v4607 = vpop.f32.mrb[0].mxu0
    %v4608 = vadd.f32 0.0, %v4607
    %v4609 = vpop.f32.mrb[0].mxu0
    %4610 = vmatprep.mubr.bf16.mxu0 0
    %4611 = vmatmul.mubr.bf16.gmra.mrb[0].mxu0 %v4478
    %v4612 = vpop.f32.mrb[0].mxu0
    %v4613 = vadd.f32 0.0, %v4612
    %v4614 = vpop.f32.mrb[0].mxu0
    %v4615 = vpop.f32.mrb[0].mxu0
    %v4616 = vadd.f32 0.0, %v4615
    %v4617 = vpop.f32.mrb[0].mxu0
    %4618 = vmatprep.mubr.bf16.mxu0 0
    %4619 = vmatmul.mubr.bf16.gmra.mrb[0].mxu0 %v4481
    %v4620 = vpop.f32.mrb[0].mxu0
    %v4621 = vadd.f32 0.0, %v4620
    %v4622 = vpop.f32.mrb[0].mxu0
    %v4623 = vpop.f32.mrb[0].mxu0
    %v4624 = vadd.f32 0.0, %v4623
    %v4625 = vpop.f32.mrb[0].mxu0
    %4626 = vmatprep.mubr.bf16.mxu0 0
    %4627 = vmatmul.mubr.bf16.gmra.mrb[0].mxu0 %v4484
    %v4628 = vpop.f32.mrb[0].mxu0
    %v4629 = vadd.f32 0.0, %v4628
    %v4630 = vpop.f32.mrb[0].mxu0
    %v4631 = vpop.f32.mrb[0].mxu0
    %v4632 = vadd.f32 0.0, %v4631
    %v4633 = vpop.f32.mrb[0].mxu0
    %4634 = vmatprep.mubr.bf16.mxu0 0
    %4635 = vmatmul.mubr.bf16.gmra.mrb[0].mxu0 %v4487
    %v4636 = vpop.f32.mrb[0].mxu0
    %v4637 = vadd.f32 0.0, %v4636
    %v4638 = vpop.f32.mrb[0].mxu0
    %v4639 = vpop.f32.mrb[0].mxu0
    %v4640 = vadd.f32 0.0, %v4639
    %v4641 = vpop.f32.mrb[0].mxu0
    %4642 = vmatprep.mubr.bf16.mxu0 0
    %4643 = vmatmul.mubr.bf16.gmra.mrb[0].mxu0 %v4490
    %v4644 = vpop.f32.mrb[0].mxu0
    %v4645 = vadd.f32 0.0, %v4644
    %v4646 = vpop.f32.mrb[0].mxu0
    %v4647 = vpop.f32.mrb[0].mxu0
    %v4648 = vadd.f32 0.0, %v4647
    %v4649 = vpop.f32.mrb[0].mxu0
    %4650 = vmatprep.mubr.bf16.mxu0 0
    %4651 = vmatmul.mubr.bf16.gmra.mrb[0].mxu0 %v4493
    %v4652 = vpop.f32.mrb[0].mxu0
    %v4653 = vadd.f32 0.0, %v4652
    %v4654 = vpop.f32.mrb[0].mxu0
    %v4655 = vpop.f32.mrb[0].mxu0
    %v4656 = vadd.f32 0.0, %v4655
    %v4657 = vpop.f32.mrb[0].mxu0
    %4658 = vdwg.mxu0
    %v4659 = vadd.f32 %v4380, %v4533
    %v4660 = vadd.f32 %v4381, %v4536
    %v4661 = vadd.f32 %v4382, %v4541
    %v4662 = vadd.f32 %v4383, %v4544
    %v4663 = vadd.f32 %v4384, %v4549
    %v4664 = vadd.f32 %v4385, %v4552
    %v4665 = vadd.f32 %v4386, %v4557
    %v4666 = vadd.f32 %v4387, %v4560
    %v4667 = vadd.f32 %v4388, %v4565
    %v4668 = vadd.f32 %v4389, %v4568
    %v4669 = vadd.f32 %v4390, %v4573
    %v4670 = vadd.f32 %v4391, %v4576
    %v4671 = vadd.f32 %v4392, %v4581
    %v4672 = vadd.f32 %v4393, %v4584
    %v4673 = vadd.f32 %v4394, %v4589
    %v4674 = vadd.f32 %v4395, %v4592
    %v4675 = vadd.f32 %v4396, %v4597
    %v4676 = vadd.f32 %v4397, %v4600
    %v4677 = vadd.f32 %v4398, %v4605
    %v4678 = vadd.f32 %v4399, %v4608
    %v4679 = vadd.f32 %v4400, %v4613
    %v4680 = vadd.f32 %v4401, %v4616
    %v4681 = vadd.f32 %v4402, %v4621
    %v4682 = vadd.f32 %v4403, %v4624
    %v4683 = vadd.f32 %v4404, %v4629
    %v4684 = vadd.f32 %v4405, %v4632
    %v4685 = vadd.f32 %v4406, %v4637
    %v4686 = vadd.f32 %v4407, %v4640
    %v4687 = vadd.f32 %v4408, %v4645
    %v4688 = vadd.f32 %v4409, %v4648
    %v4689 = vadd.f32 %v4410, %v4653
    %v4690 = vadd.f32 %v4411, %v4656
    %s4691 = scalar_lea.vmem %s2, 24
    %v4692 = vld [vmem:[%s4691] sm:$0x3]
    %v4693 = vrot.slane %v2779, 4
    %v4694 = vrot.slane %v2781, 5
    %v4695 = vor.u32 %v4693, %v4694
    %v4696 = vrot.slane %v2789, 4
    %v4697 = vrot.slane %v2785, 5
    %v4698 = vor.u32 %v4696, %v4697
    %v4699 = vsel %vm3503, %v4695, %v4698
    %v4700 = vrot.slane %v2796, 4
    %v4701 = vrot.slane %v2792, 5
    %v4702 = vor.u32 %v4700, %v4701
    %v4703 = vsel %vm3503, %v4698, %v4702
    %v4704 = vrot.slane %v2803, 4
    %v4705 = vrot.slane %v2799, 5
    %v4706 = vor.u32 %v4704, %v4705
    %v4707 = vsel %vm3503, %v4702, %v4706
    %v4708 = vrot.slane %v2810, 4
    %v4709 = vrot.slane %v2806, 5
    %v4710 = vor.u32 %v4708, %v4709
    %v4711 = vsel %vm3503, %v4706, %v4710
    %v4712 = vrot.slane %v2817, 4
    %v4713 = vrot.slane %v2813, 5
    %v4714 = vor.u32 %v4712, %v4713
    %v4715 = vsel %vm3503, %v4710, %v4714
    %v4716 = vrot.slane %v2824, 4
    %v4717 = vrot.slane %v2820, 5
    %v4718 = vor.u32 %v4716, %v4717
    %v4719 = vsel %vm3503, %v4714, %v4718
    %v4720 = vrot.slane %v2831, 4
    %v4721 = vrot.slane %v2827, 5
    %v4722 = vor.u32 %v4720, %v4721
    %v4723 = vsel %vm3503, %v4718, %v4722
    %v4724 = vrot.slane %v2838, 4
    %v4725 = vrot.slane %v2834, 5
    %v4726 = vor.u32 %v4724, %v4725
    %v4727 = vsel %vm3503, %v4722, %v4726
    %v4728 = vrot.slane %v2845, 4
    %v4729 = vrot.slane %v2841, 5
    %v4730 = vor.u32 %v4728, %v4729
    %v4731 = vsel %vm3503, %v4726, %v4730
    %v4732 = vrot.slane %v2852, 4
    %v4733 = vrot.slane %v2848, 5
    %v4734 = vor.u32 %v4732, %v4733
    %v4735 = vsel %vm3503, %v4730, %v4734
    %v4736 = vrot.slane %v2859, 4
    %v4737 = vrot.slane %v2855, 5
    %v4738 = vor.u32 %v4736, %v4737
    %v4739 = vsel %vm3503, %v4734, %v4738
    %v4740 = vrot.slane %v2866, 4
    %v4741 = vrot.slane %v2862, 5
    %v4742 = vor.u32 %v4740, %v4741
    %v4743 = vsel %vm3503, %v4738, %v4742
    %v4744 = vrot.slane %v2873, 4
    %v4745 = vrot.slane %v2869, 5
    %v4746 = vor.u32 %v4744, %v4745
    %v4747 = vsel %vm3503, %v4742, %v4746
    %v4748 = vrot.slane %v2880, 4
    %v4749 = vrot.slane %v2876, 5
    %v4750 = vor.u32 %v4748, %v4749
    %v4751 = vsel %vm3503, %v4746, %v4750
    %v4752 = vrot.slane %v2887, 4
    %v4753 = vrot.slane %v2883, 5
    %v4754 = vor.u32 %v4752, %v4753
    %v4755 = vsel %vm3503, %v4750, %v4754
    %v4756 = vshrl.u32 %v1009, 16
    %v4758 = vrot.slane %v4756, 4
    %v4759 = vrot.slane %v2891, 5
    %v4760 = vor.u32 %v4758, %v4759
    %v4761 = vsel %vm3503, %v4754, %v4760
    %v4763 = vsel %vm1134, %v4699, 0
    %v4766 = vsel %vm1134, %v4703, 0
    %v4769 = vsel %vm1134, %v4707, 0
    %v4772 = vsel %vm1134, %v4711, 0
    %v4775 = vsel %vm1134, %v4715, 0
    %v4778 = vsel %vm1134, %v4719, 0
    %v4781 = vsel %vm1134, %v4723, 0
    %v4784 = vsel %vm1134, %v4727, 0
    %v4787 = vsel %vm1134, %v4731, 0
    %v4790 = vsel %vm1134, %v4735, 0
    %v4793 = vsel %vm1134, %v4739, 0
    %v4796 = vsel %vm1134, %v4743, 0
    %v4799 = vsel %vm1134, %v4747, 0
    %v4802 = vsel %vm1134, %v4751, 0
    %v4805 = vsel %vm1134, %v4755, 0
    %v4808 = vsel %vm1134, %v4761, 0
    %v4811 = vsel %vm1183, %v4692, 0
    %4813 = vmatprep.subr.bf16.mxu0 0
    %4814 = vmatpush1.bf16.msra.mxu0 %v4811
    %4815 = vmatprep.subr.bf16.mxu0 0
    %4816 = vmatpush1.bf16.msra.mxu0 0
    %4817 = vmatprep.subr.bf16.mxu0 0
    %4818 = vmatpush1.bf16.msra.mxu0 0
    %4819 = vmatprep.subr.bf16.mxu0 0
    %4820 = vmatpush1.bf16.msra.mxu0 0
    %4821 = vmatprep.subr.bf16.mxu0 0
    %4822 = vmatpush1.bf16.msra.mxu0 0
    %4823 = vmatprep.subr.bf16.mxu0 0
    %4824 = vmatpush1.bf16.msra.mxu0 0
    %4825 = vmatprep.subr.bf16.mxu0 0
    %4826 = vmatpush1.bf16.msra.mxu0 0
    %4827 = vmatprep.subr.bf16.mxu0 0
    %4828 = vmatpush1.bf16.msra.mxu0 0
    %4829 = vmatprep.subr.bf16.mxu0 0
    %4830 = vmatpush1.bf16.msra.mxu0 0
    %4831 = vmatprep.subr.bf16.mxu0 0
    %4832 = vmatpush1.bf16.msra.mxu0 0
    %4833 = vmatprep.subr.bf16.mxu0 0
    %4834 = vmatpush1.bf16.msra.mxu0 0
    %4835 = vmatprep.subr.bf16.mxu0 0
    %4836 = vmatpush1.bf16.msra.mxu0 0
    %4837 = vmatprep.subr.bf16.mxu0 0
    %4838 = vmatpush1.bf16.msra.mxu0 0
    %4839 = vmatprep.subr.bf16.mxu0 0
    %4840 = vmatpush1.bf16.msra.mxu0 0
    %4841 = vmatprep.subr.bf16.mxu0 0
    %4842 = vmatpush1.bf16.msra.mxu0 0
    %4843 = vmatprep.subr.bf16.mxu0 0
    %4844 = vmatpush1.bf16.msra.mxu0 0
    %4845 = vmatprep.mubr.bf16.mxu0 0
    %4846 = vmatmul.mubr.bf16.gmra.mrb[0].mxu0 %v4763
    %v4847 = vpop.f32.mrb[0].mxu0
    %v4848 = vadd.f32 0.0, %v4847
    %v4849 = vpop.f32.mrb[0].mxu0
    %v4850 = vpop.f32.mrb[0].mxu0
    %v4851 = vadd.f32 0.0, %v4850
    %v4852 = vpop.f32.mrb[0].mxu0
    %4853 = vmatprep.mubr.bf16.mxu0 0
    %4854 = vmatmul.mubr.bf16.gmra.mrb[0].mxu0 %v4766
    %v4855 = vpop.f32.mrb[0].mxu0
    %v4856 = vadd.f32 0.0, %v4855
    %v4857 = vpop.f32.mrb[0].mxu0
    %v4858 = vpop.f32.mrb[0].mxu0
    %v4859 = vadd.f32 0.0, %v4858
    %v4860 = vpop.f32.mrb[0].mxu0
    %4861 = vmatprep.mubr.bf16.mxu0 0
    %4862 = vmatmul.mubr.bf16.gmra.mrb[0].mxu0 %v4769
    %v4863 = vpop.f32.mrb[0].mxu0
    %v4864 = vadd.f32 0.0, %v4863
    %v4865 = vpop.f32.mrb[0].mxu0
    %v4866 = vpop.f32.mrb[0].mxu0
    %v4867 = vadd.f32 0.0, %v4866
    %v4868 = vpop.f32.mrb[0].mxu0
    %4869 = vmatprep.mubr.bf16.mxu0 0
    %4870 = vmatmul.mubr.bf16.gmra.mrb[0].mxu0 %v4772
    %v4871 = vpop.f32.mrb[0].mxu0
    %v4872 = vadd.f32 0.0, %v4871
    %v4873 = vpop.f32.mrb[0].mxu0
    %v4874 = vpop.f32.mrb[0].mxu0
    %v4875 = vadd.f32 0.0, %v4874
    %v4876 = vpop.f32.mrb[0].mxu0
    %4877 = vmatprep.mubr.bf16.mxu0 0
    %4878 = vmatmul.mubr.bf16.gmra.mrb[0].mxu0 %v4775
    %v4879 = vpop.f32.mrb[0].mxu0
    %v4880 = vadd.f32 0.0, %v4879
    %v4881 = vpop.f32.mrb[0].mxu0
    %v4882 = vpop.f32.mrb[0].mxu0
    %v4883 = vadd.f32 0.0, %v4882
    %v4884 = vpop.f32.mrb[0].mxu0
    %4885 = vmatprep.mubr.bf16.mxu0 0
    %4886 = vmatmul.mubr.bf16.gmra.mrb[0].mxu0 %v4778
    %v4887 = vpop.f32.mrb[0].mxu0
    %v4888 = vadd.f32 0.0, %v4887
    %v4889 = vpop.f32.mrb[0].mxu0
    %v4890 = vpop.f32.mrb[0].mxu0
    %v4891 = vadd.f32 0.0, %v4890
    %v4892 = vpop.f32.mrb[0].mxu0
    %4893 = vmatprep.mubr.bf16.mxu0 0
    %4894 = vmatmul.mubr.bf16.gmra.mrb[0].mxu0 %v4781
    %v4895 = vpop.f32.mrb[0].mxu0
    %v4896 = vadd.f32 0.0, %v4895
    %v4897 = vpop.f32.mrb[0].mxu0
    %v4898 = vpop.f32.mrb[0].mxu0
    %v4899 = vadd.f32 0.0, %v4898
    %v4900 = vpop.f32.mrb[0].mxu0
    %4901 = vmatprep.mubr.bf16.mxu0 0
    %4902 = vmatmul.mubr.bf16.gmra.mrb[0].mxu0 %v4784
    %v4903 = vpop.f32.mrb[0].mxu0
    %v4904 = vadd.f32 0.0, %v4903
    %v4905 = vpop.f32.mrb[0].mxu0
    %v4906 = vpop.f32.mrb[0].mxu0
    %v4907 = vadd.f32 0.0, %v4906
    %v4908 = vpop.f32.mrb[0].mxu0
    %4909 = vmatprep.mubr.bf16.mxu0 0
    %4910 = vmatmul.mubr.bf16.gmra.mrb[0].mxu0 %v4787
    %v4911 = vpop.f32.mrb[0].mxu0
    %v4912 = vadd.f32 0.0, %v4911
    %v4913 = vpop.f32.mrb[0].mxu0
    %v4914 = vpop.f32.mrb[0].mxu0
    %v4915 = vadd.f32 0.0, %v4914
    %v4916 = vpop.f32.mrb[0].mxu0
    %4917 = vmatprep.mubr.bf16.mxu0 0
    %4918 = vmatmul.mubr.bf16.gmra.mrb[0].mxu0 %v4790
    %v4919 = vpop.f32.mrb[0].mxu0
    %v4920 = vadd.f32 0.0, %v4919
    %v4921 = vpop.f32.mrb[0].mxu0
    %v4922 = vpop.f32.mrb[0].mxu0
    %v4923 = vadd.f32 0.0, %v4922
    %v4924 = vpop.f32.mrb[0].mxu0
    %4925 = vmatprep.mubr.bf16.mxu0 0
    %4926 = vmatmul.mubr.bf16.gmra.mrb[0].mxu0 %v4793
    %v4927 = vpop.f32.mrb[0].mxu0
    %v4928 = vadd.f32 0.0, %v4927
    %v4929 = vpop.f32.mrb[0].mxu0
    %v4930 = vpop.f32.mrb[0].mxu0
    %v4931 = vadd.f32 0.0, %v4930
    %v4932 = vpop.f32.mrb[0].mxu0
    %4933 = vmatprep.mubr.bf16.mxu0 0
    %4934 = vmatmul.mubr.bf16.gmra.mrb[0].mxu0 %v4796
    %v4935 = vpop.f32.mrb[0].mxu0
    %v4936 = vadd.f32 0.0, %v4935
    %v4937 = vpop.f32.mrb[0].mxu0
    %v4938 = vpop.f32.mrb[0].mxu0
    %v4939 = vadd.f32 0.0, %v4938
    %v4940 = vpop.f32.mrb[0].mxu0
    %4941 = vmatprep.mubr.bf16.mxu0 0
    %4942 = vmatmul.mubr.bf16.gmra.mrb[0].mxu0 %v4799
    %v4943 = vpop.f32.mrb[0].mxu0
    %v4944 = vadd.f32 0.0, %v4943
    %v4945 = vpop.f32.mrb[0].mxu0
    %v4946 = vpop.f32.mrb[0].mxu0
    %v4947 = vadd.f32 0.0, %v4946
    %v4948 = vpop.f32.mrb[0].mxu0
    %4949 = vmatprep.mubr.bf16.mxu0 0
    %4950 = vmatmul.mubr.bf16.gmra.mrb[0].mxu0 %v4802
    %v4951 = vpop.f32.mrb[0].mxu0
    %v4952 = vadd.f32 0.0, %v4951
    %v4953 = vpop.f32.mrb[0].mxu0
    %v4954 = vpop.f32.mrb[0].mxu0
    %v4955 = vadd.f32 0.0, %v4954
    %v4956 = vpop.f32.mrb[0].mxu0
    %4957 = vmatprep.mubr.bf16.mxu0 0
    %4958 = vmatmul.mubr.bf16.gmra.mrb[0].mxu0 %v4805
    %v4959 = vpop.f32.mrb[0].mxu0
    %v4960 = vadd.f32 0.0, %v4959
    %v4961 = vpop.f32.mrb[0].mxu0
    %v4962 = vpop.f32.mrb[0].mxu0
    %v4963 = vadd.f32 0.0, %v4962
    %v4964 = vpop.f32.mrb[0].mxu0
    %4965 = vmatprep.mubr.bf16.mxu0 0
    %4966 = vmatmul.mubr.bf16.gmra.mrb[0].mxu0 %v4808
    %v4967 = vpop.f32.mrb[0].mxu0
    %v4968 = vadd.f32 0.0, %v4967
    %v4969 = vpop.f32.mrb[0].mxu0
    %v4970 = vpop.f32.mrb[0].mxu0
    %v4971 = vadd.f32 0.0, %v4970
    %v4972 = vpop.f32.mrb[0].mxu0
    %4973 = vdwg.mxu0
    %v4974 = vadd.f32 %v4659, %v4848
    %v4975 = vadd.f32 %v4660, %v4851
    %v4976 = vadd.f32 %v4661, %v4856
    %v4977 = vadd.f32 %v4662, %v4859
    %v4978 = vadd.f32 %v4663, %v4864
    %v4979 = vadd.f32 %v4664, %v4867
    %v4980 = vadd.f32 %v4665, %v4872
    %v4981 = vadd.f32 %v4666, %v4875
    %v4982 = vadd.f32 %v4667, %v4880
    %v4983 = vadd.f32 %v4668, %v4883
    %v4984 = vadd.f32 %v4669, %v4888
    %v4985 = vadd.f32 %v4670, %v4891
    %v4986 = vadd.f32 %v4671, %v4896
    %v4987 = vadd.f32 %v4672, %v4899
    %v4988 = vadd.f32 %v4673, %v4904
    %v4989 = vadd.f32 %v4674, %v4907
    %v4990 = vadd.f32 %v4675, %v4912
    %v4991 = vadd.f32 %v4676, %v4915
    %v4992 = vadd.f32 %v4677, %v4920
    %v4993 = vadd.f32 %v4678, %v4923
    %v4994 = vadd.f32 %v4679, %v4928
    %v4995 = vadd.f32 %v4680, %v4931
    %v4996 = vadd.f32 %v4681, %v4936
    %v4997 = vadd.f32 %v4682, %v4939
    %v4998 = vadd.f32 %v4683, %v4944
    %v4999 = vadd.f32 %v4684, %v4947
    %v5000 = vadd.f32 %v4685, %v4952
    %v5001 = vadd.f32 %v4686, %v4955
    %v5002 = vadd.f32 %v4687, %v4960
    %v5003 = vadd.f32 %v4688, %v4963
    %v5004 = vadd.f32 %v4689, %v4968
    %v5005 = vadd.f32 %v4690, %v4971
    %s5006 = scalar_lea.vmem %s2, 26
    %v5007 = vld [vmem:[%s5006] sm:$0x3]
    %v5008 = vrot.slane %v3141, 4
    %v5009 = vrot.slane %v3143, 5
    %v5010 = vor.u32 %v5008, %v5009
    %v5011 = vrot.slane %v3151, 4
    %v5012 = vrot.slane %v3147, 5
    %v5013 = vor.u32 %v5011, %v5012
    %v5014 = vsel %vm3503, %v5010, %v5013
    %v5015 = vrot.slane %v3158, 4
    %v5016 = vrot.slane %v3154, 5
    %v5017 = vor.u32 %v5015, %v5016
    %v5018 = vsel %vm3503, %v5013, %v5017
    %v5019 = vrot.slane %v3165, 4
    %v5020 = vrot.slane %v3161, 5
    %v5021 = vor.u32 %v5019, %v5020
    %v5022 = vsel %vm3503, %v5017, %v5021
    %v5023 = vrot.slane %v3172, 4
    %v5024 = vrot.slane %v3168, 5
    %v5025 = vor.u32 %v5023, %v5024
    %v5026 = vsel %vm3503, %v5021, %v5025
    %v5027 = vrot.slane %v3179, 4
    %v5028 = vrot.slane %v3175, 5
    %v5029 = vor.u32 %v5027, %v5028
    %v5030 = vsel %vm3503, %v5025, %v5029
    %v5031 = vrot.slane %v3186, 4
    %v5032 = vrot.slane %v3182, 5
    %v5033 = vor.u32 %v5031, %v5032
    %v5034 = vsel %vm3503, %v5029, %v5033
    %v5035 = vrot.slane %v3193, 4
    %v5036 = vrot.slane %v3189, 5
    %v5037 = vor.u32 %v5035, %v5036
    %v5038 = vsel %vm3503, %v5033, %v5037
    %v5039 = vrot.slane %v3200, 4
    %v5040 = vrot.slane %v3196, 5
    %v5041 = vor.u32 %v5039, %v5040
    %v5042 = vsel %vm3503, %v5037, %v5041
    %v5043 = vrot.slane %v3207, 4
    %v5044 = vrot.slane %v3203, 5
    %v5045 = vor.u32 %v5043, %v5044
    %v5046 = vsel %vm3503, %v5041, %v5045
    %v5047 = vrot.slane %v3214, 4
    %v5048 = vrot.slane %v3210, 5
    %v5049 = vor.u32 %v5047, %v5048
    %v5050 = vsel %vm3503, %v5045, %v5049
    %v5051 = vrot.slane %v3221, 4
    %v5052 = vrot.slane %v3217, 5
    %v5053 = vor.u32 %v5051, %v5052
    %v5054 = vsel %vm3503, %v5049, %v5053
    %v5055 = vrot.slane %v3228, 4
    %v5056 = vrot.slane %v3224, 5
    %v5057 = vor.u32 %v5055, %v5056
    %v5058 = vsel %vm3503, %v5053, %v5057
    %v5059 = vrot.slane %v3235, 4
    %v5060 = vrot.slane %v3231, 5
    %v5061 = vor.u32 %v5059, %v5060
    %v5062 = vsel %vm3503, %v5057, %v5061
    %v5063 = vrot.slane %v3242, 4
    %v5064 = vrot.slane %v3238, 5
    %v5065 = vor.u32 %v5063, %v5064
    %v5066 = vsel %vm3503, %v5061, %v5065
    %v5067 = vrot.slane %v3249, 4
    %v5068 = vrot.slane %v3245, 5
    %v5069 = vor.u32 %v5067, %v5068
    %v5070 = vsel %vm3503, %v5065, %v5069
    %v5071 = vshrl.u32 %v1130, 16
    %v5073 = vrot.slane %v5071, 4
    %v5074 = vrot.slane %v3253, 5
    %v5075 = vor.u32 %v5073, %v5074
    %v5076 = vsel %vm3503, %v5069, %v5075
    %v5078 = vsel %vm1134, %v5014, 0
    %v5081 = vsel %vm1134, %v5018, 0
    %v5084 = vsel %vm1134, %v5022, 0
    %v5087 = vsel %vm1134, %v5026, 0
    %v5090 = vsel %vm1134, %v5030, 0
    %v5093 = vsel %vm1134, %v5034, 0
    %v5096 = vsel %vm1134, %v5038, 0
    %v5099 = vsel %vm1134, %v5042, 0
    %v5102 = vsel %vm1134, %v5046, 0
    %v5105 = vsel %vm1134, %v5050, 0
    %v5108 = vsel %vm1134, %v5054, 0
    %v5111 = vsel %vm1134, %v5058, 0
    %v5114 = vsel %vm1134, %v5062, 0
    %v5117 = vsel %vm1134, %v5066, 0
    %v5120 = vsel %vm1134, %v5070, 0
    %v5123 = vsel %vm1134, %v5076, 0
    %v5126 = vsel %vm1183, %v5007, 0
    %5128 = vmatprep.subr.bf16.mxu0 0
    %5129 = vmatpush1.bf16.msra.mxu0 %v5126
    %5130 = vmatprep.subr.bf16.mxu0 0
    %5131 = vmatpush1.bf16.msra.mxu0 0
    %5132 = vmatprep.subr.bf16.mxu0 0
    %5133 = vmatpush1.bf16.msra.mxu0 0
    %5134 = vmatprep.subr.bf16.mxu0 0
    %5135 = vmatpush1.bf16.msra.mxu0 0
    %5136 = vmatprep.subr.bf16.mxu0 0
    %5137 = vmatpush1.bf16.msra.mxu0 0
    %5138 = vmatprep.subr.bf16.mxu0 0
    %5139 = vmatpush1.bf16.msra.mxu0 0
    %5140 = vmatprep.subr.bf16.mxu0 0
    %5141 = vmatpush1.bf16.msra.mxu0 0
    %5142 = vmatprep.subr.bf16.mxu0 0
    %5143 = vmatpush1.bf16.msra.mxu0 0
    %5144 = vmatprep.subr.bf16.mxu0 0
    %5145 = vmatpush1.bf16.msra.mxu0 0
    %5146 = vmatprep.subr.bf16.mxu0 0
    %5147 = vmatpush1.bf16.msra.mxu0 0
    %5148 = vmatprep.subr.bf16.mxu0 0
    %5149 = vmatpush1.bf16.msra.mxu0 0
    %5150 = vmatprep.subr.bf16.mxu0 0
    %5151 = vmatpush1.bf16.msra.mxu0 0
    %5152 = vmatprep.subr.bf16.mxu0 0
    %5153 = vmatpush1.bf16.msra.mxu0 0
    %5154 = vmatprep.subr.bf16.mxu0 0
    %5155 = vmatpush1.bf16.msra.mxu0 0
    %5156 = vmatprep.subr.bf16.mxu0 0
    %5157 = vmatpush1.bf16.msra.mxu0 0
    %5158 = vmatprep.subr.bf16.mxu0 0
    %5159 = vmatpush1.bf16.msra.mxu0 0
    %5160 = vmatprep.mubr.bf16.mxu0 0
    %5161 = vmatmul.mubr.bf16.gmra.mrb[0].mxu0 %v5078
    %v5162 = vpop.f32.mrb[0].mxu0
    %v5163 = vadd.f32 0.0, %v5162
    %v5164 = vpop.f32.mrb[0].mxu0
    %v5165 = vpop.f32.mrb[0].mxu0
    %v5166 = vadd.f32 0.0, %v5165
    %v5167 = vpop.f32.mrb[0].mxu0
    %5168 = vmatprep.mubr.bf16.mxu0 0
    %5169 = vmatmul.mubr.bf16.gmra.mrb[0].mxu0 %v5081
    %v5170 = vpop.f32.mrb[0].mxu0
    %v5171 = vadd.f32 0.0, %v5170
    %v5172 = vpop.f32.mrb[0].mxu0
    %v5173 = vpop.f32.mrb[0].mxu0
    %v5174 = vadd.f32 0.0, %v5173
    %v5175 = vpop.f32.mrb[0].mxu0
    %5176 = vmatprep.mubr.bf16.mxu0 0
    %5177 = vmatmul.mubr.bf16.gmra.mrb[0].mxu0 %v5084
    %v5178 = vpop.f32.mrb[0].mxu0
    %v5179 = vadd.f32 0.0, %v5178
    %v5180 = vpop.f32.mrb[0].mxu0
    %v5181 = vpop.f32.mrb[0].mxu0
    %v5182 = vadd.f32 0.0, %v5181
    %v5183 = vpop.f32.mrb[0].mxu0
    %5184 = vmatprep.mubr.bf16.mxu0 0
    %5185 = vmatmul.mubr.bf16.gmra.mrb[0].mxu0 %v5087
    %v5186 = vpop.f32.mrb[0].mxu0
    %v5187 = vadd.f32 0.0, %v5186
    %v5188 = vpop.f32.mrb[0].mxu0
    %v5189 = vpop.f32.mrb[0].mxu0
    %v5190 = vadd.f32 0.0, %v5189
    %v5191 = vpop.f32.mrb[0].mxu0
    %5192 = vmatprep.mubr.bf16.mxu0 0
    %5193 = vmatmul.mubr.bf16.gmra.mrb[0].mxu0 %v5090
    %v5194 = vpop.f32.mrb[0].mxu0
    %v5195 = vadd.f32 0.0, %v5194
    %v5196 = vpop.f32.mrb[0].mxu0
    %v5197 = vpop.f32.mrb[0].mxu0
    %v5198 = vadd.f32 0.0, %v5197
    %v5199 = vpop.f32.mrb[0].mxu0
    %5200 = vmatprep.mubr.bf16.mxu0 0
    %5201 = vmatmul.mubr.bf16.gmra.mrb[0].mxu0 %v5093
    %v5202 = vpop.f32.mrb[0].mxu0
    %v5203 = vadd.f32 0.0, %v5202
    %v5204 = vpop.f32.mrb[0].mxu0
    %v5205 = vpop.f32.mrb[0].mxu0
    %v5206 = vadd.f32 0.0, %v5205
    %v5207 = vpop.f32.mrb[0].mxu0
    %5208 = vmatprep.mubr.bf16.mxu0 0
    %5209 = vmatmul.mubr.bf16.gmra.mrb[0].mxu0 %v5096
    %v5210 = vpop.f32.mrb[0].mxu0
    %v5211 = vadd.f32 0.0, %v5210
    %v5212 = vpop.f32.mrb[0].mxu0
    %v5213 = vpop.f32.mrb[0].mxu0
    %v5214 = vadd.f32 0.0, %v5213
    %v5215 = vpop.f32.mrb[0].mxu0
    %5216 = vmatprep.mubr.bf16.mxu0 0
    %5217 = vmatmul.mubr.bf16.gmra.mrb[0].mxu0 %v5099
    %v5218 = vpop.f32.mrb[0].mxu0
    %v5219 = vadd.f32 0.0, %v5218
    %v5220 = vpop.f32.mrb[0].mxu0
    %v5221 = vpop.f32.mrb[0].mxu0
    %v5222 = vadd.f32 0.0, %v5221
    %v5223 = vpop.f32.mrb[0].mxu0
    %5224 = vmatprep.mubr.bf16.mxu0 0
    %5225 = vmatmul.mubr.bf16.gmra.mrb[0].mxu0 %v5102
    %v5226 = vpop.f32.mrb[0].mxu0
    %v5227 = vadd.f32 0.0, %v5226
    %v5228 = vpop.f32.mrb[0].mxu0
    %v5229 = vpop.f32.mrb[0].mxu0
    %v5230 = vadd.f32 0.0, %v5229
    %v5231 = vpop.f32.mrb[0].mxu0
    %5232 = vmatprep.mubr.bf16.mxu0 0
    %5233 = vmatmul.mubr.bf16.gmra.mrb[0].mxu0 %v5105
    %v5234 = vpop.f32.mrb[0].mxu0
    %v5235 = vadd.f32 0.0, %v5234
    %v5236 = vpop.f32.mrb[0].mxu0
    %v5237 = vpop.f32.mrb[0].mxu0
    %v5238 = vadd.f32 0.0, %v5237
    %v5239 = vpop.f32.mrb[0].mxu0
    %5240 = vmatprep.mubr.bf16.mxu0 0
    %5241 = vmatmul.mubr.bf16.gmra.mrb[0].mxu0 %v5108
    %v5242 = vpop.f32.mrb[0].mxu0
    %v5243 = vadd.f32 0.0, %v5242
    %v5244 = vpop.f32.mrb[0].mxu0
    %v5245 = vpop.f32.mrb[0].mxu0
    %v5246 = vadd.f32 0.0, %v5245
    %v5247 = vpop.f32.mrb[0].mxu0
    %5248 = vmatprep.mubr.bf16.mxu0 0
    %5249 = vmatmul.mubr.bf16.gmra.mrb[0].mxu0 %v5111
    %v5250 = vpop.f32.mrb[0].mxu0
    %v5251 = vadd.f32 0.0, %v5250
    %v5252 = vpop.f32.mrb[0].mxu0
    %v5253 = vpop.f32.mrb[0].mxu0
    %v5254 = vadd.f32 0.0, %v5253
    %v5255 = vpop.f32.mrb[0].mxu0
    %5256 = vmatprep.mubr.bf16.mxu0 0
    %5257 = vmatmul.mubr.bf16.gmra.mrb[0].mxu0 %v5114
    %v5258 = vpop.f32.mrb[0].mxu0
    %v5259 = vadd.f32 0.0, %v5258
    %v5260 = vpop.f32.mrb[0].mxu0
    %v5261 = vpop.f32.mrb[0].mxu0
    %v5262 = vadd.f32 0.0, %v5261
    %v5263 = vpop.f32.mrb[0].mxu0
    %5264 = vmatprep.mubr.bf16.mxu0 0
    %5265 = vmatmul.mubr.bf16.gmra.mrb[0].mxu0 %v5117
    %v5266 = vpop.f32.mrb[0].mxu0
    %v5267 = vadd.f32 0.0, %v5266
    %v5268 = vpop.f32.mrb[0].mxu0
    %v5269 = vpop.f32.mrb[0].mxu0
    %v5270 = vadd.f32 0.0, %v5269
    %v5271 = vpop.f32.mrb[0].mxu0
    %5272 = vmatprep.mubr.bf16.mxu0 0
    %5273 = vmatmul.mubr.bf16.gmra.mrb[0].mxu0 %v5120
    %v5274 = vpop.f32.mrb[0].mxu0
    %v5275 = vadd.f32 0.0, %v5274
    %v5276 = vpop.f32.mrb[0].mxu0
    %v5277 = vpop.f32.mrb[0].mxu0
    %v5278 = vadd.f32 0.0, %v5277
    %v5279 = vpop.f32.mrb[0].mxu0
    %5280 = vmatprep.mubr.bf16.mxu0 0
    %5281 = vmatmul.mubr.bf16.gmra.mrb[0].mxu0 %v5123
    %v5282 = vpop.f32.mrb[0].mxu0
    %v5283 = vadd.f32 0.0, %v5282
    %v5284 = vpop.f32.mrb[0].mxu0
    %v5285 = vpop.f32.mrb[0].mxu0
    %v5286 = vadd.f32 0.0, %v5285
    %v5287 = vpop.f32.mrb[0].mxu0
    %5288 = vdwg.mxu0
    %v5289 = vadd.f32 %v4974, %v5163
    %v5290 = vadd.f32 %v4975, %v5166
    %v5291 = vadd.f32 %v4976, %v5171
    %v5292 = vadd.f32 %v4977, %v5174
    %v5293 = vadd.f32 %v4978, %v5179
    %v5294 = vadd.f32 %v4979, %v5182
    %v5295 = vadd.f32 %v4980, %v5187
    %v5296 = vadd.f32 %v4981, %v5190
    %v5297 = vadd.f32 %v4982, %v5195
    %v5298 = vadd.f32 %v4983, %v5198
    %v5299 = vadd.f32 %v4984, %v5203
    %v5300 = vadd.f32 %v4985, %v5206
    %v5301 = vadd.f32 %v4986, %v5211
    %v5302 = vadd.f32 %v4987, %v5214
    %v5303 = vadd.f32 %v4988, %v5219
    %v5304 = vadd.f32 %v4989, %v5222
    %v5305 = vadd.f32 %v4990, %v5227
    %v5306 = vadd.f32 %v4991, %v5230
    %v5307 = vadd.f32 %v4992, %v5235
    %v5308 = vadd.f32 %v4993, %v5238
    %v5309 = vadd.f32 %v4994, %v5243
    %v5310 = vadd.f32 %v4995, %v5246
    %v5311 = vadd.f32 %v4996, %v5251
    %v5312 = vadd.f32 %v4997, %v5254
    %v5313 = vadd.f32 %v4998, %v5259
    %v5314 = vadd.f32 %v4999, %v5262
    %v5315 = vadd.f32 %v5000, %v5267
    %v5316 = vadd.f32 %v5001, %v5270
    %v5317 = vadd.f32 %v5002, %v5275
    %v5318 = vadd.f32 %v5003, %v5278
    %v5319 = vadd.f32 %v5004, %v5283
    %v5320 = vadd.f32 %v5005, %v5286
    %s5321 = scalar_lea.vmem %s2, 28
    %v5322 = vld [vmem:[%s5321] sm:$0x3]
    %v5323 = vrot.slane %v989, 5
    %v5324 = vrot.slane %v990, 5
    %v5325 = vsel %vm4134, %v5323, %v5324
    %v5326 = vrot.slane %v991, 5
    %v5327 = vsel %vm4134, %v5324, %v5326
    %v5328 = vrot.slane %v992, 5
    %v5329 = vsel %vm4134, %v5326, %v5328
    %v5330 = vrot.slane %v993, 5
    %v5331 = vsel %vm4134, %v5328, %v5330
    %v5332 = vrot.slane %v994, 5
    %v5333 = vsel %vm4134, %v5330, %v5332
    %v5334 = vrot.slane %v995, 5
    %v5335 = vsel %vm4134, %v5332, %v5334
    %v5336 = vrot.slane %v996, 5
    %v5337 = vsel %vm4134, %v5334, %v5336
    %v5338 = vrot.slane %v997, 5
    %v5339 = vsel %vm4134, %v5336, %v5338
    %v5340 = vrot.slane %v998, 5
    %v5341 = vsel %vm4134, %v5338, %v5340
    %v5342 = vrot.slane %v999, 5
    %v5343 = vsel %vm4134, %v5340, %v5342
    %v5344 = vrot.slane %v1000, 5
    %v5345 = vsel %vm4134, %v5342, %v5344
    %v5346 = vrot.slane %v1001, 5
    %v5347 = vsel %vm4134, %v5344, %v5346
    %v5348 = vrot.slane %v1002, 5
    %v5349 = vsel %vm4134, %v5346, %v5348
    %v5350 = vrot.slane %v1003, 5
    %v5351 = vsel %vm4134, %v5348, %v5350
    %v5352 = vrot.slane %v1004, 5
    %v5353 = vsel %vm4134, %v5350, %v5352
    %v5354 = vrot.slane %v1009, 5
    %v5355 = vsel %vm4134, %v5352, %v5354
    %v5357 = vsel %vm1134, %v5325, 0
    %v5360 = vsel %vm1134, %v5327, 0
    %v5363 = vsel %vm1134, %v5329, 0
    %v5366 = vsel %vm1134, %v5331, 0
    %v5369 = vsel %vm1134, %v5333, 0
    %v5372 = vsel %vm1134, %v5335, 0
    %v5375 = vsel %vm1134, %v5337, 0
    %v5378 = vsel %vm1134, %v5339, 0
    %v5381 = vsel %vm1134, %v5341, 0
    %v5384 = vsel %vm1134, %v5343, 0
    %v5387 = vsel %vm1134, %v5345, 0
    %v5390 = vsel %vm1134, %v5347, 0
    %v5393 = vsel %vm1134, %v5349, 0
    %v5396 = vsel %vm1134, %v5351, 0
    %v5399 = vsel %vm1134, %v5353, 0
    %v5402 = vsel %vm1134, %v5355, 0
    %v5405 = vsel %vm1183, %v5322, 0
    %5407 = vmatprep.subr.bf16.mxu0 0
    %5408 = vmatpush1.bf16.msra.mxu0 %v5405
    %5409 = vmatprep.subr.bf16.mxu0 0
    %5410 = vmatpush1.bf16.msra.mxu0 0
    %5411 = vmatprep.subr.bf16.mxu0 0
    %5412 = vmatpush1.bf16.msra.mxu0 0
    %5413 = vmatprep.subr.bf16.mxu0 0
    %5414 = vmatpush1.bf16.msra.mxu0 0
    %5415 = vmatprep.subr.bf16.mxu0 0
    %5416 = vmatpush1.bf16.msra.mxu0 0
    %5417 = vmatprep.subr.bf16.mxu0 0
    %5418 = vmatpush1.bf16.msra.mxu0 0
    %5419 = vmatprep.subr.bf16.mxu0 0
    %5420 = vmatpush1.bf16.msra.mxu0 0
    %5421 = vmatprep.subr.bf16.mxu0 0
    %5422 = vmatpush1.bf16.msra.mxu0 0
    %5423 = vmatprep.subr.bf16.mxu0 0
    %5424 = vmatpush1.bf16.msra.mxu0 0
    %5425 = vmatprep.subr.bf16.mxu0 0
    %5426 = vmatpush1.bf16.msra.mxu0 0
    %5427 = vmatprep.subr.bf16.mxu0 0
    %5428 = vmatpush1.bf16.msra.mxu0 0
    %5429 = vmatprep.subr.bf16.mxu0 0
    %5430 = vmatpush1.bf16.msra.mxu0 0
    %5431 = vmatprep.subr.bf16.mxu0 0
    %5432 = vmatpush1.bf16.msra.mxu0 0
    %5433 = vmatprep.subr.bf16.mxu0 0
    %5434 = vmatpush1.bf16.msra.mxu0 0
    %5435 = vmatprep.subr.bf16.mxu0 0
    %5436 = vmatpush1.bf16.msra.mxu0 0
    %5437 = vmatprep.subr.bf16.mxu0 0
    %5438 = vmatpush1.bf16.msra.mxu0 0
    %5439 = vmatprep.mubr.bf16.mxu0 0
    %5440 = vmatmul.mubr.bf16.gmra.mrb[0].mxu0 %v5357
    %v5441 = vpop.f32.mrb[0].mxu0
    %v5442 = vadd.f32 0.0, %v5441
    %v5443 = vpop.f32.mrb[0].mxu0
    %v5444 = vpop.f32.mrb[0].mxu0
    %v5445 = vadd.f32 0.0, %v5444
    %v5446 = vpop.f32.mrb[0].mxu0
    %5447 = vmatprep.mubr.bf16.mxu0 0
    %5448 = vmatmul.mubr.bf16.gmra.mrb[0].mxu0 %v5360
    %v5449 = vpop.f32.mrb[0].mxu0
    %v5450 = vadd.f32 0.0, %v5449
    %v5451 = vpop.f32.mrb[0].mxu0
    %v5452 = vpop.f32.mrb[0].mxu0
    %v5453 = vadd.f32 0.0, %v5452
    %v5454 = vpop.f32.mrb[0].mxu0
    %5455 = vmatprep.mubr.bf16.mxu0 0
    %5456 = vmatmul.mubr.bf16.gmra.mrb[0].mxu0 %v5363
    %v5457 = vpop.f32.mrb[0].mxu0
    %v5458 = vadd.f32 0.0, %v5457
    %v5459 = vpop.f32.mrb[0].mxu0
    %v5460 = vpop.f32.mrb[0].mxu0
    %v5461 = vadd.f32 0.0, %v5460
    %v5462 = vpop.f32.mrb[0].mxu0
    %5463 = vmatprep.mubr.bf16.mxu0 0
    %5464 = vmatmul.mubr.bf16.gmra.mrb[0].mxu0 %v5366
    %v5465 = vpop.f32.mrb[0].mxu0
    %v5466 = vadd.f32 0.0, %v5465
    %v5467 = vpop.f32.mrb[0].mxu0
    %v5468 = vpop.f32.mrb[0].mxu0
    %v5469 = vadd.f32 0.0, %v5468
    %v5470 = vpop.f32.mrb[0].mxu0
    %5471 = vmatprep.mubr.bf16.mxu0 0
    %5472 = vmatmul.mubr.bf16.gmra.mrb[0].mxu0 %v5369
    %v5473 = vpop.f32.mrb[0].mxu0
    %v5474 = vadd.f32 0.0, %v5473
    %v5475 = vpop.f32.mrb[0].mxu0
    %v5476 = vpop.f32.mrb[0].mxu0
    %v5477 = vadd.f32 0.0, %v5476
    %v5478 = vpop.f32.mrb[0].mxu0
    %5479 = vmatprep.mubr.bf16.mxu0 0
    %5480 = vmatmul.mubr.bf16.gmra.mrb[0].mxu0 %v5372
    %v5481 = vpop.f32.mrb[0].mxu0
    %v5482 = vadd.f32 0.0, %v5481
    %v5483 = vpop.f32.mrb[0].mxu0
    %v5484 = vpop.f32.mrb[0].mxu0
    %v5485 = vadd.f32 0.0, %v5484
    %v5486 = vpop.f32.mrb[0].mxu0
    %5487 = vmatprep.mubr.bf16.mxu0 0
    %5488 = vmatmul.mubr.bf16.gmra.mrb[0].mxu0 %v5375
    %v5489 = vpop.f32.mrb[0].mxu0
    %v5490 = vadd.f32 0.0, %v5489
    %v5491 = vpop.f32.mrb[0].mxu0
    %v5492 = vpop.f32.mrb[0].mxu0
    %v5493 = vadd.f32 0.0, %v5492
    %v5494 = vpop.f32.mrb[0].mxu0
    %5495 = vmatprep.mubr.bf16.mxu0 0
    %5496 = vmatmul.mubr.bf16.gmra.mrb[0].mxu0 %v5378
    %v5497 = vpop.f32.mrb[0].mxu0
    %v5498 = vadd.f32 0.0, %v5497
    %v5499 = vpop.f32.mrb[0].mxu0
    %v5500 = vpop.f32.mrb[0].mxu0
    %v5501 = vadd.f32 0.0, %v5500
    %v5502 = vpop.f32.mrb[0].mxu0
    %5503 = vmatprep.mubr.bf16.mxu0 0
    %5504 = vmatmul.mubr.bf16.gmra.mrb[0].mxu0 %v5381
    %v5505 = vpop.f32.mrb[0].mxu0
    %v5506 = vadd.f32 0.0, %v5505
    %v5507 = vpop.f32.mrb[0].mxu0
    %v5508 = vpop.f32.mrb[0].mxu0
    %v5509 = vadd.f32 0.0, %v5508
    %v5510 = vpop.f32.mrb[0].mxu0
    %5511 = vmatprep.mubr.bf16.mxu0 0
    %5512 = vmatmul.mubr.bf16.gmra.mrb[0].mxu0 %v5384
    %v5513 = vpop.f32.mrb[0].mxu0
    %v5514 = vadd.f32 0.0, %v5513
    %v5515 = vpop.f32.mrb[0].mxu0
    %v5516 = vpop.f32.mrb[0].mxu0
    %v5517 = vadd.f32 0.0, %v5516
    %v5518 = vpop.f32.mrb[0].mxu0
    %5519 = vmatprep.mubr.bf16.mxu0 0
    %5520 = vmatmul.mubr.bf16.gmra.mrb[0].mxu0 %v5387
    %v5521 = vpop.f32.mrb[0].mxu0
    %v5522 = vadd.f32 0.0, %v5521
    %v5523 = vpop.f32.mrb[0].mxu0
    %v5524 = vpop.f32.mrb[0].mxu0
    %v5525 = vadd.f32 0.0, %v5524
    %v5526 = vpop.f32.mrb[0].mxu0
    %5527 = vmatprep.mubr.bf16.mxu0 0
    %5528 = vmatmul.mubr.bf16.gmra.mrb[0].mxu0 %v5390
    %v5529 = vpop.f32.mrb[0].mxu0
    %v5530 = vadd.f32 0.0, %v5529
    %v5531 = vpop.f32.mrb[0].mxu0
    %v5532 = vpop.f32.mrb[0].mxu0
    %v5533 = vadd.f32 0.0, %v5532
    %v5534 = vpop.f32.mrb[0].mxu0
    %5535 = vmatprep.mubr.bf16.mxu0 0
    %5536 = vmatmul.mubr.bf16.gmra.mrb[0].mxu0 %v5393
    %v5537 = vpop.f32.mrb[0].mxu0
    %v5538 = vadd.f32 0.0, %v5537
    %v5539 = vpop.f32.mrb[0].mxu0
    %v5540 = vpop.f32.mrb[0].mxu0
    %v5541 = vadd.f32 0.0, %v5540
    %v5542 = vpop.f32.mrb[0].mxu0
    %5543 = vmatprep.mubr.bf16.mxu0 0
    %5544 = vmatmul.mubr.bf16.gmra.mrb[0].mxu0 %v5396
    %v5545 = vpop.f32.mrb[0].mxu0
    %v5546 = vadd.f32 0.0, %v5545
    %v5547 = vpop.f32.mrb[0].mxu0
    %v5548 = vpop.f32.mrb[0].mxu0
    %v5549 = vadd.f32 0.0, %v5548
    %v5550 = vpop.f32.mrb[0].mxu0
    %5551 = vmatprep.mubr.bf16.mxu0 0
    %5552 = vmatmul.mubr.bf16.gmra.mrb[0].mxu0 %v5399
    %v5553 = vpop.f32.mrb[0].mxu0
    %v5554 = vadd.f32 0.0, %v5553
    %v5555 = vpop.f32.mrb[0].mxu0
    %v5556 = vpop.f32.mrb[0].mxu0
    %v5557 = vadd.f32 0.0, %v5556
    %v5558 = vpop.f32.mrb[0].mxu0
    %5559 = vmatprep.mubr.bf16.mxu0 0
    %5560 = vmatmul.mubr.bf16.gmra.mrb[0].mxu0 %v5402
    %v5561 = vpop.f32.mrb[0].mxu0
    %v5562 = vadd.f32 0.0, %v5561
    %v5563 = vpop.f32.mrb[0].mxu0
    %v5564 = vpop.f32.mrb[0].mxu0
    %v5565 = vadd.f32 0.0, %v5564
    %v5566 = vpop.f32.mrb[0].mxu0
    %5567 = vdwg.mxu0
    %v5568 = vadd.f32 %v5289, %v5442
    %v5569 = vadd.f32 %v5290, %v5445
    %v5570 = vadd.f32 %v5291, %v5450
    %v5571 = vadd.f32 %v5292, %v5453
    %v5572 = vadd.f32 %v5293, %v5458
    %v5573 = vadd.f32 %v5294, %v5461
    %v5574 = vadd.f32 %v5295, %v5466
    %v5575 = vadd.f32 %v5296, %v5469
    %v5576 = vadd.f32 %v5297, %v5474
    %v5577 = vadd.f32 %v5298, %v5477
    %v5578 = vadd.f32 %v5299, %v5482
    %v5579 = vadd.f32 %v5300, %v5485
    %v5580 = vadd.f32 %v5301, %v5490
    %v5581 = vadd.f32 %v5302, %v5493
    %v5582 = vadd.f32 %v5303, %v5498
    %v5583 = vadd.f32 %v5304, %v5501
    %v5584 = vadd.f32 %v5305, %v5506
    %v5585 = vadd.f32 %v5306, %v5509
    %v5586 = vadd.f32 %v5307, %v5514
    %v5587 = vadd.f32 %v5308, %v5517
    %v5588 = vadd.f32 %v5309, %v5522
    %v5589 = vadd.f32 %v5310, %v5525
    %v5590 = vadd.f32 %v5311, %v5530
    %v5591 = vadd.f32 %v5312, %v5533
    %v5592 = vadd.f32 %v5313, %v5538
    %v5593 = vadd.f32 %v5314, %v5541
    %v5594 = vadd.f32 %v5315, %v5546
    %v5595 = vadd.f32 %v5316, %v5549
    %v5596 = vadd.f32 %v5317, %v5554
    %v5597 = vadd.f32 %v5318, %v5557
    %v5598 = vadd.f32 %v5319, %v5562
    %v5599 = vadd.f32 %v5320, %v5565
    %s5600 = scalar_lea.vmem %s2, 30
    %v5601 = vld [vmem:[%s5600] sm:$0x3]
    %v5602 = vrot.slane %v1110, 5
    %v5603 = vrot.slane %v1111, 5
    %v5604 = vsel %vm4134, %v5602, %v5603
    %v5605 = vrot.slane %v1112, 5
    %v5606 = vsel %vm4134, %v5603, %v5605
    %v5607 = vrot.slane %v1113, 5
    %v5608 = vsel %vm4134, %v5605, %v5607
    %v5609 = vrot.slane %v1114, 5
    %v5610 = vsel %vm4134, %v5607, %v5609
    %v5611 = vrot.slane %v1115, 5
    %v5612 = vsel %vm4134, %v5609, %v5611
    %v5613 = vrot.slane %v1116, 5
    %v5614 = vsel %vm4134, %v5611, %v5613
    %v5615 = vrot.slane %v1117, 5
    %v5616 = vsel %vm4134, %v5613, %v5615
    %v5617 = vrot.slane %v1118, 5
    %v5618 = vsel %vm4134, %v5615, %v5617
    %v5619 = vrot.slane %v1119, 5
    %v5620 = vsel %vm4134, %v5617, %v5619
    %v5621 = vrot.slane %v1120, 5
    %v5622 = vsel %vm4134, %v5619, %v5621
    %v5623 = vrot.slane %v1121, 5
    %v5624 = vsel %vm4134, %v5621, %v5623
    %v5625 = vrot.slane %v1122, 5
    %v5626 = vsel %vm4134, %v5623, %v5625
    %v5627 = vrot.slane %v1123, 5
    %v5628 = vsel %vm4134, %v5625, %v5627
    %v5629 = vrot.slane %v1124, 5
    %v5630 = vsel %vm4134, %v5627, %v5629
    %v5631 = vrot.slane %v1125, 5
    %v5632 = vsel %vm4134, %v5629, %v5631
    %v5633 = vrot.slane %v1130, 5
    %v5634 = vsel %vm4134, %v5631, %v5633
    %v5636 = vsel %vm1134, %v5604, 0
    %v5639 = vsel %vm1134, %v5606, 0
    %v5642 = vsel %vm1134, %v5608, 0
    %v5645 = vsel %vm1134, %v5610, 0
    %v5648 = vsel %vm1134, %v5612, 0
    %v5651 = vsel %vm1134, %v5614, 0
    %v5654 = vsel %vm1134, %v5616, 0
    %v5657 = vsel %vm1134, %v5618, 0
    %v5660 = vsel %vm1134, %v5620, 0
    %v5663 = vsel %vm1134, %v5622, 0
    %v5666 = vsel %vm1134, %v5624, 0
    %v5669 = vsel %vm1134, %v5626, 0
    %v5672 = vsel %vm1134, %v5628, 0
    %v5675 = vsel %vm1134, %v5630, 0
    %v5678 = vsel %vm1134, %v5632, 0
    %v5681 = vsel %vm1134, %v5634, 0
    %v5684 = vsel %vm1183, %v5601, 0
    %5686 = vmatprep.subr.bf16.mxu0 0
    %5687 = vmatpush1.bf16.msra.mxu0 %v5684
    %5688 = vmatprep.subr.bf16.mxu0 0
    %5689 = vmatpush1.bf16.msra.mxu0 0
    %5690 = vmatprep.subr.bf16.mxu0 0
    %5691 = vmatpush1.bf16.msra.mxu0 0
    %5692 = vmatprep.subr.bf16.mxu0 0
    %5693 = vmatpush1.bf16.msra.mxu0 0
    %5694 = vmatprep.subr.bf16.mxu0 0
    %5695 = vmatpush1.bf16.msra.mxu0 0
    %5696 = vmatprep.subr.bf16.mxu0 0
    %5697 = vmatpush1.bf16.msra.mxu0 0
    %5698 = vmatprep.subr.bf16.mxu0 0
    %5699 = vmatpush1.bf16.msra.mxu0 0
    %5700 = vmatprep.subr.bf16.mxu0 0
    %5701 = vmatpush1.bf16.msra.mxu0 0
    %5702 = vmatprep.subr.bf16.mxu0 0
    %5703 = vmatpush1.bf16.msra.mxu0 0
    %5704 = vmatprep.subr.bf16.mxu0 0
    %5705 = vmatpush1.bf16.msra.mxu0 0
    %5706 = vmatprep.subr.bf16.mxu0 0
    %5707 = vmatpush1.bf16.msra.mxu0 0
    %5708 = vmatprep.subr.bf16.mxu0 0
    %5709 = vmatpush1.bf16.msra.mxu0 0
    %5710 = vmatprep.subr.bf16.mxu0 0
    %5711 = vmatpush1.bf16.msra.mxu0 0
    %5712 = vmatprep.subr.bf16.mxu0 0
    %5713 = vmatpush1.bf16.msra.mxu0 0
    %5714 = vmatprep.subr.bf16.mxu0 0
    %5715 = vmatpush1.bf16.msra.mxu0 0
    %5716 = vmatprep.subr.bf16.mxu0 0
    %5717 = vmatpush1.bf16.msra.mxu0 0
    %5718 = vmatprep.mubr.bf16.mxu0 0
    %5719 = vmatmul.mubr.bf16.gmra.mrb[0].mxu0 %v5636
    %v5720 = vpop.f32.mrb[0].mxu0
    %v5721 = vadd.f32 0.0, %v5720
    %v5722 = vpop.f32.mrb[0].mxu0
    %v5723 = vpop.f32.mrb[0].mxu0
    %v5724 = vadd.f32 0.0, %v5723
    %v5725 = vpop.f32.mrb[0].mxu0
    %5726 = vmatprep.mubr.bf16.mxu0 0
    %5727 = vmatmul.mubr.bf16.gmra.mrb[0].mxu0 %v5639
    %v5728 = vpop.f32.mrb[0].mxu0
    %v5729 = vadd.f32 0.0, %v5728
    %v5730 = vpop.f32.mrb[0].mxu0
    %v5731 = vpop.f32.mrb[0].mxu0
    %v5732 = vadd.f32 0.0, %v5731
    %v5733 = vpop.f32.mrb[0].mxu0
    %5734 = vmatprep.mubr.bf16.mxu0 0
    %5735 = vmatmul.mubr.bf16.gmra.mrb[0].mxu0 %v5642
    %v5736 = vpop.f32.mrb[0].mxu0
    %v5737 = vadd.f32 0.0, %v5736
    %v5738 = vpop.f32.mrb[0].mxu0
    %v5739 = vpop.f32.mrb[0].mxu0
    %v5740 = vadd.f32 0.0, %v5739
    %v5741 = vpop.f32.mrb[0].mxu0
    %5742 = vmatprep.mubr.bf16.mxu0 0
    %5743 = vmatmul.mubr.bf16.gmra.mrb[0].mxu0 %v5645
    %v5744 = vpop.f32.mrb[0].mxu0
    %v5745 = vadd.f32 0.0, %v5744
    %v5746 = vpop.f32.mrb[0].mxu0
    %v5747 = vpop.f32.mrb[0].mxu0
    %v5748 = vadd.f32 0.0, %v5747
    %v5749 = vpop.f32.mrb[0].mxu0
    %5750 = vmatprep.mubr.bf16.mxu0 0
    %5751 = vmatmul.mubr.bf16.gmra.mrb[0].mxu0 %v5648
    %v5752 = vpop.f32.mrb[0].mxu0
    %v5753 = vadd.f32 0.0, %v5752
    %v5754 = vpop.f32.mrb[0].mxu0
    %v5755 = vpop.f32.mrb[0].mxu0
    %v5756 = vadd.f32 0.0, %v5755
    %v5757 = vpop.f32.mrb[0].mxu0
    %5758 = vmatprep.mubr.bf16.mxu0 0
    %5759 = vmatmul.mubr.bf16.gmra.mrb[0].mxu0 %v5651
    %v5760 = vpop.f32.mrb[0].mxu0
    %v5761 = vadd.f32 0.0, %v5760
    %v5762 = vpop.f32.mrb[0].mxu0
    %v5763 = vpop.f32.mrb[0].mxu0
    %v5764 = vadd.f32 0.0, %v5763
    %v5765 = vpop.f32.mrb[0].mxu0
    %5766 = vmatprep.mubr.bf16.mxu0 0
    %5767 = vmatmul.mubr.bf16.gmra.mrb[0].mxu0 %v5654
    %v5768 = vpop.f32.mrb[0].mxu0
    %v5769 = vadd.f32 0.0, %v5768
    %v5770 = vpop.f32.mrb[0].mxu0
    %v5771 = vpop.f32.mrb[0].mxu0
    %v5772 = vadd.f32 0.0, %v5771
    %v5773 = vpop.f32.mrb[0].mxu0
    %5774 = vmatprep.mubr.bf16.mxu0 0
    %5775 = vmatmul.mubr.bf16.gmra.mrb[0].mxu0 %v5657
    %v5776 = vpop.f32.mrb[0].mxu0
    %v5777 = vadd.f32 0.0, %v5776
    %v5778 = vpop.f32.mrb[0].mxu0
    %v5779 = vpop.f32.mrb[0].mxu0
    %v5780 = vadd.f32 0.0, %v5779
    %v5781 = vpop.f32.mrb[0].mxu0
    %5782 = vmatprep.mubr.bf16.mxu0 0
    %5783 = vmatmul.mubr.bf16.gmra.mrb[0].mxu0 %v5660
    %v5784 = vpop.f32.mrb[0].mxu0
    %v5785 = vadd.f32 0.0, %v5784
    %v5786 = vpop.f32.mrb[0].mxu0
    %v5787 = vpop.f32.mrb[0].mxu0
    %v5788 = vadd.f32 0.0, %v5787
    %v5789 = vpop.f32.mrb[0].mxu0
    %5790 = vmatprep.mubr.bf16.mxu0 0
    %5791 = vmatmul.mubr.bf16.gmra.mrb[0].mxu0 %v5663
    %v5792 = vpop.f32.mrb[0].mxu0
    %v5793 = vadd.f32 0.0, %v5792
    %v5794 = vpop.f32.mrb[0].mxu0
    %v5795 = vpop.f32.mrb[0].mxu0
    %v5796 = vadd.f32 0.0, %v5795
    %v5797 = vpop.f32.mrb[0].mxu0
    %5798 = vmatprep.mubr.bf16.mxu0 0
    %5799 = vmatmul.mubr.bf16.gmra.mrb[0].mxu0 %v5666
    %v5800 = vpop.f32.mrb[0].mxu0
    %v5801 = vadd.f32 0.0, %v5800
    %v5802 = vpop.f32.mrb[0].mxu0
    %v5803 = vpop.f32.mrb[0].mxu0
    %v5804 = vadd.f32 0.0, %v5803
    %v5805 = vpop.f32.mrb[0].mxu0
    %5806 = vmatprep.mubr.bf16.mxu0 0
    %5807 = vmatmul.mubr.bf16.gmra.mrb[0].mxu0 %v5669
    %v5808 = vpop.f32.mrb[0].mxu0
    %v5809 = vadd.f32 0.0, %v5808
    %v5810 = vpop.f32.mrb[0].mxu0
    %v5811 = vpop.f32.mrb[0].mxu0
    %v5812 = vadd.f32 0.0, %v5811
    %v5813 = vpop.f32.mrb[0].mxu0
    %5814 = vmatprep.mubr.bf16.mxu0 0
    %5815 = vmatmul.mubr.bf16.gmra.mrb[0].mxu0 %v5672
    %v5816 = vpop.f32.mrb[0].mxu0
    %v5817 = vadd.f32 0.0, %v5816
    %v5818 = vpop.f32.mrb[0].mxu0
    %v5819 = vpop.f32.mrb[0].mxu0
    %v5820 = vadd.f32 0.0, %v5819
    %v5821 = vpop.f32.mrb[0].mxu0
    %5822 = vmatprep.mubr.bf16.mxu0 0
    %5823 = vmatmul.mubr.bf16.gmra.mrb[0].mxu0 %v5675
    %v5824 = vpop.f32.mrb[0].mxu0
    %v5825 = vadd.f32 0.0, %v5824
    %v5826 = vpop.f32.mrb[0].mxu0
    %v5827 = vpop.f32.mrb[0].mxu0
    %v5828 = vadd.f32 0.0, %v5827
    %v5829 = vpop.f32.mrb[0].mxu0
    %5830 = vmatprep.mubr.bf16.mxu0 0
    %5831 = vmatmul.mubr.bf16.gmra.mrb[0].mxu0 %v5678
    %v5832 = vpop.f32.mrb[0].mxu0
    %v5833 = vadd.f32 0.0, %v5832
    %v5834 = vpop.f32.mrb[0].mxu0
    %v5835 = vpop.f32.mrb[0].mxu0
    %v5836 = vadd.f32 0.0, %v5835
    %v5837 = vpop.f32.mrb[0].mxu0
    %5838 = vmatprep.mubr.bf16.mxu0 0
    %5839 = vmatmul.mubr.bf16.gmra.mrb[0].mxu0 %v5681
    %v5840 = vpop.f32.mrb[0].mxu0
    %v5841 = vadd.f32 0.0, %v5840
    %v5842 = vpop.f32.mrb[0].mxu0
    %v5843 = vpop.f32.mrb[0].mxu0
    %v5844 = vadd.f32 0.0, %v5843
    %v5845 = vpop.f32.mrb[0].mxu0
    %5846 = vdwg.mxu0
    %v5847 = vadd.f32 %v5568, %v5721
    %v5848 = vadd.f32 %v5569, %v5724
    %v5849 = vadd.f32 %v5570, %v5729
    %v5850 = vadd.f32 %v5571, %v5732
    %v5851 = vadd.f32 %v5572, %v5737
    %v5852 = vadd.f32 %v5573, %v5740
    %v5853 = vadd.f32 %v5574, %v5745
    %v5854 = vadd.f32 %v5575, %v5748
    %v5855 = vadd.f32 %v5576, %v5753
    %v5856 = vadd.f32 %v5577, %v5756
    %v5857 = vadd.f32 %v5578, %v5761
    %v5858 = vadd.f32 %v5579, %v5764
    %v5859 = vadd.f32 %v5580, %v5769
    %v5860 = vadd.f32 %v5581, %v5772
    %v5861 = vadd.f32 %v5582, %v5777
    %v5862 = vadd.f32 %v5583, %v5780
    %v5863 = vadd.f32 %v5584, %v5785
    %v5864 = vadd.f32 %v5585, %v5788
    %v5865 = vadd.f32 %v5586, %v5793
    %v5866 = vadd.f32 %v5587, %v5796
    %v5867 = vadd.f32 %v5588, %v5801
    %v5868 = vadd.f32 %v5589, %v5804
    %v5869 = vadd.f32 %v5590, %v5809
    %v5870 = vadd.f32 %v5591, %v5812
    %v5871 = vadd.f32 %v5592, %v5817
    %v5872 = vadd.f32 %v5593, %v5820
    %v5873 = vadd.f32 %v5594, %v5825
    %v5874 = vadd.f32 %v5595, %v5828
    %v5875 = vadd.f32 %v5596, %v5833
    %v5876 = vadd.f32 %v5597, %v5836
    %v5877 = vadd.f32 %v5598, %v5841
    %v5878 = vadd.f32 %v5599, %v5844
    %v5879 = vpack.c.bf16 %v5848, %v5847
    %v5880 = vpack.c.bf16 %v5850, %v5849
    %v5881 = vpack.c.bf16 %v5852, %v5851
    %v5882 = vpack.c.bf16 %v5854, %v5853
    %v5883 = vpack.c.bf16 %v5856, %v5855
    %v5884 = vpack.c.bf16 %v5858, %v5857
    %v5885 = vpack.c.bf16 %v5860, %v5859
    %v5886 = vpack.c.bf16 %v5862, %v5861
    %v5887 = vpack.c.bf16 %v5864, %v5863
    %v5888 = vpack.c.bf16 %v5866, %v5865
    %v5889 = vpack.c.bf16 %v5868, %v5867
    %v5890 = vpack.c.bf16 %v5870, %v5869
    %v5891 = vpack.c.bf16 %v5872, %v5871
    %v5892 = vpack.c.bf16 %v5874, %v5873
    %v5893 = vpack.c.bf16 %v5876, %v5875
    %v5894 = vpack.c.bf16 %v5878, %v5877
    %v5911 = vunpack.c.l.b16 %v5879
    %v5912 = vunpack.c.h.b16 %v5879
    %v5913 = vunpack.c.l.b16 %v5880
    %v5914 = vunpack.c.h.b16 %v5880
    %v5915 = vunpack.c.l.b16 %v5881
    %v5916 = vunpack.c.h.b16 %v5881
    %v5917 = vunpack.c.l.b16 %v5882
    %v5918 = vunpack.c.h.b16 %v5882
    %v5919 = vunpack.c.l.b16 %v5883
    %v5920 = vunpack.c.h.b16 %v5883
    %v5921 = vunpack.c.l.b16 %v5884
    %v5922 = vunpack.c.h.b16 %v5884
    %v5923 = vunpack.c.l.b16 %v5885
    %v5924 = vunpack.c.h.b16 %v5885
    %v5925 = vunpack.c.l.b16 %v5886
    %v5926 = vunpack.c.h.b16 %v5886
    %v5927 = vunpack.c.l.b16 %v5887
    %v5928 = vunpack.c.h.b16 %v5887
    %v5929 = vunpack.c.l.b16 %v5888
    %v5930 = vunpack.c.h.b16 %v5888
    %v5931 = vunpack.c.l.b16 %v5889
    %v5932 = vunpack.c.h.b16 %v5889
    %v5933 = vunpack.c.l.b16 %v5890
    %v5934 = vunpack.c.h.b16 %v5890
    %v5935 = vunpack.c.l.b16 %v5891
    %v5936 = vunpack.c.h.b16 %v5891
    %v5937 = vunpack.c.l.b16 %v5892
    %v5938 = vunpack.c.h.b16 %v5892
    %v5939 = vunpack.c.l.b16 %v5893
    %v5940 = vunpack.c.h.b16 %v5893
    %v5941 = vunpack.c.l.b16 %v5894
    %v5942 = vunpack.c.h.b16 %v5894
    %v5943 = vpack.c.b16 %v5911, %v5911
    %v5944 = vpack.c.b16 %v5912, %v5912
    %v5945 = vpack.c.b16 %v5913, %v5913
    %v5946 = vpack.c.b16 %v5914, %v5914
    %v5947 = vpack.c.b16 %v5915, %v5915
    %v5948 = vpack.c.b16 %v5916, %v5916
    %v5949 = vpack.c.b16 %v5917, %v5917
    %v5950 = vpack.c.b16 %v5918, %v5918
    %v5951 = vpack.c.b16 %v5919, %v5919
    %v5952 = vpack.c.b16 %v5920, %v5920
    %v5953 = vpack.c.b16 %v5921, %v5921
    %v5954 = vpack.c.b16 %v5922, %v5922
    %v5955 = vpack.c.b16 %v5923, %v5923
    %v5956 = vpack.c.b16 %v5924, %v5924
    %v5957 = vpack.c.b16 %v5925, %v5925
    %v5958 = vpack.c.b16 %v5926, %v5926
    %v5959 = vpack.c.b16 %v5927, %v5927
    %v5960 = vpack.c.b16 %v5928, %v5928
    %v5961 = vpack.c.b16 %v5929, %v5929
    %v5962 = vpack.c.b16 %v5930, %v5930
    %v5963 = vpack.c.b16 %v5931, %v5931
    %v5964 = vpack.c.b16 %v5932, %v5932
    %v5965 = vpack.c.b16 %v5933, %v5933
    %v5966 = vpack.c.b16 %v5934, %v5934
    %v5967 = vpack.c.b16 %v5935, %v5935
    %v5968 = vpack.c.b16 %v5936, %v5936
    %v5969 = vpack.c.b16 %v5937, %v5937
    %v5970 = vpack.c.b16 %v5938, %v5938
    %v5971 = vpack.c.b16 %v5939, %v5939
    %v5972 = vpack.c.b16 %v5940, %v5940
    %v5973 = vpack.c.b16 %v5941, %v5941
    %v5974 = vpack.c.b16 %v5942, %v5942
    %6007 = vst [vmem:[#allocation4] sm:$0xf] %v5943
    %6008 = vst [vmem:[#allocation4 + $0x4] sm:$0xf] %v5944
    %6009 = vst [vmem:[#allocation4 + $0x8] sm:$0xf] %v5945
    %6010 = vst [vmem:[#allocation4 + $0xc] sm:$0xf] %v5946
    %6011 = vst [vmem:[#allocation4 + $0x10] sm:$0xf] %v5947
    %6012 = vst [vmem:[#allocation4 + $0x14] sm:$0xf] %v5948
    %6013 = vst [vmem:[#allocation4 + $0x18] sm:$0xf] %v5949
    %6014 = vst [vmem:[#allocation4 + $0x1c] sm:$0xf] %v5950
    %6015 = vst [vmem:[#allocation4 + $0x20] sm:$0xf] %v5951
    %6016 = vst [vmem:[#allocation4 + $0x24] sm:$0xf] %v5952
    %6017 = vst [vmem:[#allocation4 + $0x28] sm:$0xf] %v5953
    %6018 = vst [vmem:[#allocation4 + $0x2c] sm:$0xf] %v5954
    %6019 = vst [vmem:[#allocation4 + $0x30] sm:$0xf] %v5955
    %6020 = vst [vmem:[#allocation4 + $0x34] sm:$0xf] %v5956
    %6021 = vst [vmem:[#allocation4 + $0x38] sm:$0xf] %v5957
    %6022 = vst [vmem:[#allocation4 + $0x3c] sm:$0xf] %v5958
    %6023 = vst [vmem:[#allocation4 + $0x40] sm:$0xf] %v5959
    %6024 = vst [vmem:[#allocation4 + $0x44] sm:$0xf] %v5960
    %6025 = vst [vmem:[#allocation4 + $0x48] sm:$0xf] %v5961
    %6026 = vst [vmem:[#allocation4 + $0x4c] sm:$0xf] %v5962
    %6027 = vst [vmem:[#allocation4 + $0x50] sm:$0xf] %v5963
    %6028 = vst [vmem:[#allocation4 + $0x54] sm:$0xf] %v5964
    %6029 = vst [vmem:[#allocation4 + $0x58] sm:$0xf] %v5965
    %6030 = vst [vmem:[#allocation4 + $0x5c] sm:$0xf] %v5966
    %6031 = vst [vmem:[#allocation4 + $0x60] sm:$0xf] %v5967
    %6032 = vst [vmem:[#allocation4 + $0x64] sm:$0xf] %v5968
    %6033 = vst [vmem:[#allocation4 + $0x68] sm:$0xf] %v5969
    %6034 = vst [vmem:[#allocation4 + $0x6c] sm:$0xf] %v5970
    %6035 = vst [vmem:[#allocation4 + $0x70] sm:$0xf] %v5971
    %6036 = vst [vmem:[#allocation4 + $0x74] sm:$0xf] %v5972
    %6037 = vst [vmem:[#allocation4 + $0x78] sm:$0xf] %v5973
    %6038 = vst [vmem:[#allocation4 + $0x7c] sm:$0xf] %v5974
    %v6039 = vld [vmem:[%s3] sm:$0xff]
    %v6040 = vld [vmem:[%s3 + $0x8] sm:$0xff]
    %v6041 = vld [vmem:[%s3 + $0x10] sm:$0xff]
    %v6042 = vld [vmem:[%s3 + $0x18] sm:$0xff]
    %v6043 = vld [vmem:[%s3 + $0x20] sm:$0xff]
    %v6044 = vld [vmem:[%s3 + $0x28] sm:$0xff]
    %v6045 = vld [vmem:[%s3 + $0x30] sm:$0xff]
    %v6046 = vld [vmem:[%s3 + $0x38] sm:$0xff]
    %v6047 = vld [vmem:[%s3 + $0x40] sm:$0xff]
    %v6048 = vld [vmem:[%s3 + $0x48] sm:$0xff]
    %v6049 = vld [vmem:[%s3 + $0x50] sm:$0xff]
    %v6050 = vld [vmem:[%s3 + $0x58] sm:$0xff]
    %v6051 = vld [vmem:[%s3 + $0x60] sm:$0xff]
    %v6052 = vld [vmem:[%s3 + $0x68] sm:$0xff]
    %v6053 = vld [vmem:[%s3 + $0x70] sm:$0xff]
    %v6054 = vld [vmem:[%s3 + $0x78] sm:$0xff]
    %v6055 = vld [vmem:[%s3 + $0x80] sm:$0xff]
    %v6056 = vld [vmem:[%s3 + $0x88] sm:$0xff]
    %v6057 = vld [vmem:[%s3 + $0x90] sm:$0xff]
    %v6058 = vld [vmem:[%s3 + $0x98] sm:$0xff]
    %v6059 = vld [vmem:[%s3 + $0xa0] sm:$0xff]
    %v6060 = vld [vmem:[%s3 + $0xa8] sm:$0xff]
    %v6061 = vld [vmem:[%s3 + $0xb0] sm:$0xff]
    %v6062 = vld [vmem:[%s3 + $0xb8] sm:$0xff]
    %v6063 = vld [vmem:[%s3 + $0xc0] sm:$0xff]
    %v6064 = vld [vmem:[%s3 + $0xc8] sm:$0xff]
    %v6065 = vld [vmem:[%s3 + $0xd0] sm:$0xff]
    %v6066 = vld [vmem:[%s3 + $0xd8] sm:$0xff]
    %v6067 = vld [vmem:[%s3 + $0xe0] sm:$0xff]
    %v6068 = vld [vmem:[%s3 + $0xe8] sm:$0xff]
    %v6069 = vld [vmem:[%s3 + $0xf0] sm:$0xff]
    %v6070 = vld [vmem:[%s3 + $0xf8] sm:$0xff]
    %vm6071 = vcmask 7168
    %v6072 = vsel %vm6071, %v6039, 0.0
    %v6073 = vsel %vm6071, %v6040, 0.0
    %v6074 = vadd.f32 %v6072, %v6073
    %v6075 = vsel %vm6071, %v6041, 0.0
    %v6076 = vadd.f32 %v6074, %v6075
    %v6077 = vsel %vm6071, %v6042, 0.0
    %v6078 = vadd.f32 %v6076, %v6077
    %v6079 = vsel %vm6071, %v6043, 0.0
    %v6080 = vadd.f32 %v6078, %v6079
    %v6081 = vsel %vm6071, %v6044, 0.0
    %v6082 = vadd.f32 %v6080, %v6081
    %v6083 = vsel %vm6071, %v6045, 0.0
    %v6084 = vadd.f32 %v6082, %v6083
    %v6085 = vsel %vm6071, %v6046, 0.0
    %v6086 = vadd.f32 %v6084, %v6085
    %v6087 = vsel %vm6071, %v6047, 0.0
    %v6088 = vadd.f32 %v6086, %v6087
    %v6089 = vsel %vm6071, %v6048, 0.0
    %v6090 = vadd.f32 %v6088, %v6089
    %v6091 = vsel %vm6071, %v6049, 0.0
    %v6092 = vadd.f32 %v6090, %v6091
    %v6093 = vsel %vm6071, %v6050, 0.0
    %v6094 = vadd.f32 %v6092, %v6093
    %v6095 = vsel %vm6071, %v6051, 0.0
    %v6096 = vadd.f32 %v6094, %v6095
    %v6097 = vsel %vm6071, %v6052, 0.0
    %v6098 = vadd.f32 %v6096, %v6097
    %v6099 = vsel %vm6071, %v6053, 0.0
    %v6100 = vadd.f32 %v6098, %v6099
    %v6101 = vsel %vm6071, %v6054, 0.0
    %v6102 = vadd.f32 %v6100, %v6101
    %v6103 = vsel %vm6071, %v6055, 0.0
    %v6104 = vadd.f32 %v6102, %v6103
    %v6105 = vsel %vm6071, %v6056, 0.0
    %v6106 = vadd.f32 %v6104, %v6105
    %v6107 = vsel %vm6071, %v6057, 0.0
    %v6108 = vadd.f32 %v6106, %v6107
    %v6109 = vsel %vm6071, %v6058, 0.0
    %v6110 = vadd.f32 %v6108, %v6109
    %v6111 = vsel %vm6071, %v6059, 0.0
    %v6112 = vadd.f32 %v6110, %v6111
    %v6113 = vsel %vm6071, %v6060, 0.0
    %v6114 = vadd.f32 %v6112, %v6113
    %v6115 = vsel %vm6071, %v6061, 0.0
    %v6116 = vadd.f32 %v6114, %v6115
    %v6117 = vsel %vm6071, %v6062, 0.0
    %v6118 = vadd.f32 %v6116, %v6117
    %v6119 = vsel %vm6071, %v6063, 0.0
    %v6120 = vadd.f32 %v6118, %v6119
    %v6121 = vsel %vm6071, %v6064, 0.0
    %v6122 = vadd.f32 %v6120, %v6121
    %v6123 = vsel %vm6071, %v6065, 0.0
    %v6124 = vadd.f32 %v6122, %v6123
    %v6125 = vsel %vm6071, %v6066, 0.0
    %v6126 = vadd.f32 %v6124, %v6125
    %v6127 = vsel %vm6071, %v6067, 0.0
    %v6128 = vadd.f32 %v6126, %v6127
    %v6129 = vsel %vm6071, %v6068, 0.0
    %v6130 = vadd.f32 %v6128, %v6129
    %v6131 = vsel %vm6071, %v6069, 0.0
    %v6132 = vadd.f32 %v6130, %v6131
    %v6133 = vsel %vm6071, %v6070, 0.0
    %v6134 = vadd.f32 %v6132, %v6133
    %v6135 = vrot.slane %v6134, 4
    %v6136 = vadd.f32 %v6134, %v6135
    %v6137 = vrot.slane %v6136, 2
    %v6138 = vadd.f32 %v6136, %v6137
    %v6139 = vrot.slane %v6138, 1
    %v6140 = vadd.f32 %v6138, %v6139
    %6142 = vset.pattern.permute.xlu0 0
    %6143 = vperm.xlu0 %6142, %v6039
    %v6144 = vpop.permute.xlu0 %6143
    %6147 = vset.pattern.permute.xlu0 0
    %6148 = vperm.xlu0 %6147, %v6040
    %v6149 = vpop.permute.xlu0 %6148
    %6152 = vset.pattern.permute.xlu0 0
    %6153 = vperm.xlu0 %6152, %v6041
    %v6154 = vpop.permute.xlu0 %6153
    %6157 = vset.pattern.permute.xlu0 0
    %6158 = vperm.xlu0 %6157, %v6042
    %v6159 = vpop.permute.xlu0 %6158
    %6162 = vset.pattern.permute.xlu0 0
    %6163 = vperm.xlu0 %6162, %v6043
    %v6164 = vpop.permute.xlu0 %6163
    %6167 = vset.pattern.permute.xlu0 0
    %6168 = vperm.xlu0 %6167, %v6044
    %v6169 = vpop.permute.xlu0 %6168
    %6172 = vset.pattern.permute.xlu0 0
    %6173 = vperm.xlu0 %6172, %v6045
    %v6174 = vpop.permute.xlu0 %6173
    %6177 = vset.pattern.permute.xlu0 0
    %6178 = vperm.xlu0 %6177, %v6046
    %v6179 = vpop.permute.xlu0 %6178
    %6182 = vset.pattern.permute.xlu0 0
    %6183 = vperm.xlu0 %6182, %v6047
    %v6184 = vpop.permute.xlu0 %6183
    %6187 = vset.pattern.permute.xlu0 0
    %6188 = vperm.xlu0 %6187, %v6048
    %v6189 = vpop.permute.xlu0 %6188
    %6192 = vset.pattern.permute.xlu0 0
    %6193 = vperm.xlu0 %6192, %v6049
    %v6194 = vpop.permute.xlu0 %6193
    %6197 = vset.pattern.permute.xlu0 0
    %6198 = vperm.xlu0 %6197, %v6050
    %v6199 = vpop.permute.xlu0 %6198
    %6202 = vset.pattern.permute.xlu0 0
    %6203 = vperm.xlu0 %6202, %v6051
    %v6204 = vpop.permute.xlu0 %6203
    %6207 = vset.pattern.permute.xlu0 0
    %6208 = vperm.xlu0 %6207, %v6052
    %v6209 = vpop.permute.xlu0 %6208
    %6212 = vset.pattern.permute.xlu0 0
    %6213 = vperm.xlu0 %6212, %v6053
    %v6214 = vpop.permute.xlu0 %6213
    %6217 = vset.pattern.permute.xlu0 0
    %6218 = vperm.xlu0 %6217, %v6054
    %v6219 = vpop.permute.xlu0 %6218
    %6222 = vset.pattern.permute.xlu0 0
    %6223 = vperm.xlu0 %6222, %v6055
    %v6224 = vpop.permute.xlu0 %6223
    %6227 = vset.pattern.permute.xlu0 0
    %6228 = vperm.xlu0 %6227, %v6056
    %v6229 = vpop.permute.xlu0 %6228
    %6232 = vset.pattern.permute.xlu0 0
    %6233 = vperm.xlu0 %6232, %v6057
    %v6234 = vpop.permute.xlu0 %6233
    %6237 = vset.pattern.permute.xlu0 0
    %6238 = vperm.xlu0 %6237, %v6058
    %v6239 = vpop.permute.xlu0 %6238
    %6242 = vset.pattern.permute.xlu0 0
    %6243 = vperm.xlu0 %6242, %v6059
    %v6244 = vpop.permute.xlu0 %6243
    %6247 = vset.pattern.permute.xlu0 0
    %6248 = vperm.xlu0 %6247, %v6060
    %v6249 = vpop.permute.xlu0 %6248
    %6252 = vset.pattern.permute.xlu0 0
    %6253 = vperm.xlu0 %6252, %v6061
    %v6254 = vpop.permute.xlu0 %6253
    %6257 = vset.pattern.permute.xlu0 0
    %6258 = vperm.xlu0 %6257, %v6062
    %v6259 = vpop.permute.xlu0 %6258
    %6262 = vset.pattern.permute.xlu0 0
    %6263 = vperm.xlu0 %6262, %v6063
    %v6264 = vpop.permute.xlu0 %6263
    %6267 = vset.pattern.permute.xlu0 0
    %6268 = vperm.xlu0 %6267, %v6064
    %v6269 = vpop.permute.xlu0 %6268
    %6272 = vset.pattern.permute.xlu0 0
    %6273 = vperm.xlu0 %6272, %v6065
    %v6274 = vpop.permute.xlu0 %6273
    %6277 = vset.pattern.permute.xlu0 0
    %6278 = vperm.xlu0 %6277, %v6066
    %v6279 = vpop.permute.xlu0 %6278
    %6282 = vset.pattern.permute.xlu0 0
    %6283 = vperm.xlu0 %6282, %v6067
    %v6284 = vpop.permute.xlu0 %6283
    %6287 = vset.pattern.permute.xlu0 0
    %6288 = vperm.xlu0 %6287, %v6068
    %v6289 = vpop.permute.xlu0 %6288
    %6292 = vset.pattern.permute.xlu0 0
    %6293 = vperm.xlu0 %6292, %v6069
    %v6294 = vpop.permute.xlu0 %6293
    %6297 = vset.pattern.permute.xlu0 0
    %6298 = vperm.xlu0 %6297, %v6070
    %v6299 = vpop.permute.xlu0 %6298
    %v6301 = vmul.f32 %v5847, %v6144
    %v6302 = vmul.f32 %v5848, %v6149
    %v6303 = vmul.f32 %v5849, %v6154
    %v6304 = vmul.f32 %v5850, %v6159
    %v6305 = vmul.f32 %v5851, %v6164
    %v6306 = vmul.f32 %v5852, %v6169
    %v6307 = vmul.f32 %v5853, %v6174
    %v6308 = vmul.f32 %v5854, %v6179
    %v6309 = vmul.f32 %v5855, %v6184
    %v6310 = vmul.f32 %v5856, %v6189
    %v6311 = vmul.f32 %v5857, %v6194
    %v6312 = vmul.f32 %v5858, %v6199
    %v6313 = vmul.f32 %v5859, %v6204
    %v6314 = vmul.f32 %v5860, %v6209
    %v6315 = vmul.f32 %v5861, %v6214
    %v6316 = vmul.f32 %v5862, %v6219
    %v6317 = vmul.f32 %v5863, %v6224
    %v6318 = vmul.f32 %v5864, %v6229
    %v6319 = vmul.f32 %v5865, %v6234
    %v6320 = vmul.f32 %v5866, %v6239
    %v6321 = vmul.f32 %v5867, %v6244
    %v6322 = vmul.f32 %v5868, %v6249
    %v6323 = vmul.f32 %v5869, %v6254
    %v6324 = vmul.f32 %v5870, %v6259
    %v6325 = vmul.f32 %v5871, %v6264
    %v6326 = vmul.f32 %v5872, %v6269
    %v6327 = vmul.f32 %v5873, %v6274
    %v6328 = vmul.f32 %v5874, %v6279
    %v6329 = vmul.f32 %v5875, %v6284
    %v6330 = vmul.f32 %v5876, %v6289
    %v6331 = vmul.f32 %v5877, %v6294
    %v6332 = vmul.f32 %v5878, %v6299
    %v6333 = vadd.f32 %v6301, %v6302
    %v6334 = vadd.f32 %v6333, %v6303
    %v6335 = vadd.f32 %v6334, %v6304
    %v6336 = vadd.f32 %v6335, %v6305
    %v6337 = vadd.f32 %v6336, %v6306
    %v6338 = vadd.f32 %v6337, %v6307
    %v6339 = vadd.f32 %v6338, %v6308
    %v6340 = vadd.f32 %v6339, %v6309
    %v6341 = vadd.f32 %v6340, %v6310
    %v6342 = vadd.f32 %v6341, %v6311
    %v6343 = vadd.f32 %v6342, %v6312
    %v6344 = vadd.f32 %v6343, %v6313
    %v6345 = vadd.f32 %v6344, %v6314
    %v6346 = vadd.f32 %v6345, %v6315
    %v6347 = vadd.f32 %v6346, %v6316
    %v6348 = vadd.f32 %v6347, %v6317
    %v6349 = vadd.f32 %v6348, %v6318
    %v6350 = vadd.f32 %v6349, %v6319
    %v6351 = vadd.f32 %v6350, %v6320
    %v6352 = vadd.f32 %v6351, %v6321
    %v6353 = vadd.f32 %v6352, %v6322
    %v6354 = vadd.f32 %v6353, %v6323
    %v6355 = vadd.f32 %v6354, %v6324
    %v6356 = vadd.f32 %v6355, %v6325
    %v6357 = vadd.f32 %v6356, %v6326
    %v6358 = vadd.f32 %v6357, %v6327
    %v6359 = vadd.f32 %v6358, %v6328
    %v6360 = vadd.f32 %v6359, %v6329
    %v6361 = vadd.f32 %v6360, %v6330
    %v6362 = vadd.f32 %v6361, %v6331
    %v6363 = vadd.f32 %v6362, %v6332
    %v6364 = vrot.slane %v6363, 4
    %v6365 = vadd.f32 %v6363, %v6364
    %v6366 = vrot.slane %v6365, 2
    %v6367 = vadd.f32 %v6365, %v6366
    %v6368 = vrot.slane %v6367, 1
    %v6369 = vadd.f32 %v6367, %v6368
    %v6370 = vmax.f32 %v6140, 1.0
    %6372 = vset.pattern.permute.xlu0 0
    %6373 = vperm.xlu0 %6372, %v6370
    %v6374 = vpop.permute.xlu0 %6373
    %v6376 = vrcp.pop %v6374
    %v6377 = vmul.f32 %v6369, %v6376
    %v6378 = vsub.f32 %v5847, %v6377
    %v6379 = vsub.f32 %v5848, %v6377
    %v6380 = vsub.f32 %v5849, %v6377
    %v6381 = vsub.f32 %v5850, %v6377
    %v6382 = vsub.f32 %v5851, %v6377
    %v6383 = vsub.f32 %v5852, %v6377
    %v6384 = vsub.f32 %v5853, %v6377
    %v6385 = vsub.f32 %v5854, %v6377
    %v6386 = vsub.f32 %v5855, %v6377
    %v6387 = vsub.f32 %v5856, %v6377
    %v6388 = vsub.f32 %v5857, %v6377
    %v6389 = vsub.f32 %v5858, %v6377
    %v6390 = vsub.f32 %v5859, %v6377
    %v6391 = vsub.f32 %v5860, %v6377
    %v6392 = vsub.f32 %v5861, %v6377
    %v6393 = vsub.f32 %v5862, %v6377
    %v6394 = vsub.f32 %v5863, %v6377
    %v6395 = vsub.f32 %v5864, %v6377
    %v6396 = vsub.f32 %v5865, %v6377
    %v6397 = vsub.f32 %v5866, %v6377
    %v6398 = vsub.f32 %v5867, %v6377
    %v6399 = vsub.f32 %v5868, %v6377
    %v6400 = vsub.f32 %v5869, %v6377
    %v6401 = vsub.f32 %v5870, %v6377
    %v6402 = vsub.f32 %v5871, %v6377
    %v6403 = vsub.f32 %v5872, %v6377
    %v6404 = vsub.f32 %v5873, %v6377
    %v6405 = vsub.f32 %v5874, %v6377
    %v6406 = vsub.f32 %v5875, %v6377
    %v6407 = vsub.f32 %v5876, %v6377
    %v6408 = vsub.f32 %v5877, %v6377
    %v6409 = vsub.f32 %v5878, %v6377
    %v6410 = vmul.f32 %v6378, %v6144
    %v6411 = vmul.f32 %v6379, %v6149
    %v6412 = vmul.f32 %v6380, %v6154
    %v6413 = vmul.f32 %v6381, %v6159
    %v6414 = vmul.f32 %v6382, %v6164
    %v6415 = vmul.f32 %v6383, %v6169
    %v6416 = vmul.f32 %v6384, %v6174
    %v6417 = vmul.f32 %v6385, %v6179
    %v6418 = vmul.f32 %v6386, %v6184
    %v6419 = vmul.f32 %v6387, %v6189
    %v6420 = vmul.f32 %v6388, %v6194
    %v6421 = vmul.f32 %v6389, %v6199
    %v6422 = vmul.f32 %v6390, %v6204
    %v6423 = vmul.f32 %v6391, %v6209
    %v6424 = vmul.f32 %v6392, %v6214
    %v6425 = vmul.f32 %v6393, %v6219
    %v6426 = vmul.f32 %v6394, %v6224
    %v6427 = vmul.f32 %v6395, %v6229
    %v6428 = vmul.f32 %v6396, %v6234
    %v6429 = vmul.f32 %v6397, %v6239
    %v6430 = vmul.f32 %v6398, %v6244
    %v6431 = vmul.f32 %v6399, %v6249
    %v6432 = vmul.f32 %v6400, %v6254
    %v6433 = vmul.f32 %v6401, %v6259
    %v6434 = vmul.f32 %v6402, %v6264
    %v6435 = vmul.f32 %v6403, %v6269
    %v6436 = vmul.f32 %v6404, %v6274
    %v6437 = vmul.f32 %v6405, %v6279
    %v6438 = vmul.f32 %v6406, %v6284
    %v6439 = vmul.f32 %v6407, %v6289
    %v6440 = vmul.f32 %v6408, %v6294
    %v6441 = vmul.f32 %v6409, %v6299
    %v6442 = vmul.f32 %v6410, %v6410
    %v6443 = vmul.f32 %v6411, %v6411
    %v6444 = vmul.f32 %v6412, %v6412
    %v6445 = vmul.f32 %v6413, %v6413
    %v6446 = vmul.f32 %v6414, %v6414
    %v6447 = vmul.f32 %v6415, %v6415
    %v6448 = vmul.f32 %v6416, %v6416
    %v6449 = vmul.f32 %v6417, %v6417
    %v6450 = vmul.f32 %v6418, %v6418
    %v6451 = vmul.f32 %v6419, %v6419
    %v6452 = vmul.f32 %v6420, %v6420
    %v6453 = vmul.f32 %v6421, %v6421
    %v6454 = vmul.f32 %v6422, %v6422
    %v6455 = vmul.f32 %v6423, %v6423
    %v6456 = vmul.f32 %v6424, %v6424
    %v6457 = vmul.f32 %v6425, %v6425
    %v6458 = vmul.f32 %v6426, %v6426
    %v6459 = vmul.f32 %v6427, %v6427
    %v6460 = vmul.f32 %v6428, %v6428
    %v6461 = vmul.f32 %v6429, %v6429
    %v6462 = vmul.f32 %v6430, %v6430
    %v6463 = vmul.f32 %v6431, %v6431
    %v6464 = vmul.f32 %v6432, %v6432
    %v6465 = vmul.f32 %v6433, %v6433
    %v6466 = vmul.f32 %v6434, %v6434
    %v6467 = vmul.f32 %v6435, %v6435
    %v6468 = vmul.f32 %v6436, %v6436
    %v6469 = vmul.f32 %v6437, %v6437
    %v6470 = vmul.f32 %v6438, %v6438
    %v6471 = vmul.f32 %v6439, %v6439
    %v6472 = vmul.f32 %v6440, %v6440
    %v6473 = vmul.f32 %v6441, %v6441
    %v6474 = vadd.f32 %v6442, %v6443
    %v6475 = vadd.f32 %v6474, %v6444
    %v6476 = vadd.f32 %v6475, %v6445
    %v6477 = vadd.f32 %v6476, %v6446
    %v6478 = vadd.f32 %v6477, %v6447
    %v6479 = vadd.f32 %v6478, %v6448
    %v6480 = vadd.f32 %v6479, %v6449
    %v6481 = vadd.f32 %v6480, %v6450
    %v6482 = vadd.f32 %v6481, %v6451
    %v6483 = vadd.f32 %v6482, %v6452
    %v6484 = vadd.f32 %v6483, %v6453
    %v6485 = vadd.f32 %v6484, %v6454
    %v6486 = vadd.f32 %v6485, %v6455
    %v6487 = vadd.f32 %v6486, %v6456
    %v6488 = vadd.f32 %v6487, %v6457
    %v6489 = vadd.f32 %v6488, %v6458
    %v6490 = vadd.f32 %v6489, %v6459
    %v6491 = vadd.f32 %v6490, %v6460
    %v6492 = vadd.f32 %v6491, %v6461
    %v6493 = vadd.f32 %v6492, %v6462
    %v6494 = vadd.f32 %v6493, %v6463
    %v6495 = vadd.f32 %v6494, %v6464
    %v6496 = vadd.f32 %v6495, %v6465
    %v6497 = vadd.f32 %v6496, %v6466
    %v6498 = vadd.f32 %v6497, %v6467
    %v6499 = vadd.f32 %v6498, %v6468
    %v6500 = vadd.f32 %v6499, %v6469
    %v6501 = vadd.f32 %v6500, %v6470
    %v6502 = vadd.f32 %v6501, %v6471
    %v6503 = vadd.f32 %v6502, %v6472
    %v6504 = vadd.f32 %v6503, %v6473
    %v6505 = vrot.slane %v6504, 4
    %v6506 = vadd.f32 %v6504, %v6505
    %v6507 = vrot.slane %v6506, 2
    %v6508 = vadd.f32 %v6506, %v6507
    %v6509 = vrot.slane %v6508, 1
    %v6510 = vadd.f32 %v6508, %v6509
    %6511 = vst [vmem:[#allocation6] sm:$0xff] %v6369
    %6512 = vst [vmem:[#allocation8] sm:$0xff] %v6510
    // Predicated region
    $region100: #{tpu_custom_call.1} parent=1 // pred_check
      _
    $region101: #{tpu_custom_call.1} parent=1 // pred_check_branch
      %6514 = sbr.rel (0) target = $region103
    $region102: #{tpu_custom_call.1} parent=1 // pred_region
      %s6516 = ssub.s32 2048, 2048
      %6517 = vsyncadd [#allocation5], %s6516
      %s6518 = sshll.u32 [#allocation4], 4
      %s6519 = int_to_ptr.vmem [resolvable:$true] %s6518
      %6524 = dma.vmem_to_hbm [thread:$0]  %s6519, 2048, %s4, [#allocation5], 64, 64, 4
    $region103: #{tpu_custom_call.1} parent=1 // pred_fallthru
      _
    // Predicated region
    $region104: #{tpu_custom_call.1} parent=1 // pred_check
      _
    $region105: #{tpu_custom_call.1} parent=1 // pred_check_branch
      %6526 = sbr.rel (0) target = $region107
    $region106: #{tpu_custom_call.1} parent=1 // pred_region
      %s6528 = ssub.s32 128, 128
      %6529 = vsyncadd [#allocation7], %s6528
      %s6531 = sshll.u32 [#allocation6], 4
      %s6532 = int_to_ptr.vmem [resolvable:$true] %s6531
      %6534 = dma.vmem_to_hbm [thread:$0]  %s6532, 128, %s5, [#allocation7]
    $region107: #{tpu_custom_call.1} parent=1 // pred_fallthru
      _
    // Predicated region
    $region108: #{tpu_custom_call.1} parent=1 // pred_check
      _
    $region109: #{tpu_custom_call.1} parent=1 // pred_check_branch
      %6536 = sbr.rel (0) target = $region111
    $region110: #{tpu_custom_call.1} parent=1 // pred_region
      %s6538 = ssub.s32 128, 128
      %6539 = vsyncadd [#allocation7], %s6538
      %s6541 = sshll.u32 [#allocation8], 4
      %s6542 = int_to_ptr.vmem [resolvable:$true] %s6541
      %6544 = dma.vmem_to_hbm [thread:$0]  %s6542, 128, %s6, [#allocation7]
    $region111: #{tpu_custom_call.1} parent=1 // pred_fallthru
      _
    // Predicated region
    $region112: #{tpu_custom_call.1} parent=1 // pred_check
      _
    $region113: #{tpu_custom_call.1} parent=1 // pred_check_branch
      %6546 = sbr.rel (0) target = $region115
    $region114: #{tpu_custom_call.1} parent=1 // pred_region
      %6547 = dma.done [#allocation5], 2048
    $region115: #{tpu_custom_call.1} parent=1 // pred_fallthru
      _
    // Predicated region
    $region116: #{tpu_custom_call.1} parent=1 // pred_check
      _
    $region117: #{tpu_custom_call.1} parent=1 // pred_check_branch
      %6549 = sbr.rel (0) target = $region119
    $region118: #{tpu_custom_call.1} parent=1 // pred_region
      %6550 = dma.done [#allocation7], 128
    $region119: #{tpu_custom_call.1} parent=1 // pred_fallthru
      _
    // Predicated region
    $region120: #{tpu_custom_call.1} parent=1 // pred_check
      _
    $region121: #{tpu_custom_call.1} parent=1 // pred_check_branch
      %6552 = sbr.rel (0) target = $region123
    $region122: #{tpu_custom_call.1} parent=1 // pred_region
      %6553 = dma.done [#allocation7], 128
    $region123: #{tpu_custom_call.1} parent=1 // pred_fallthru
      _
    %6554 = vsyncpa [#allocation5], 1
    %6555 = vsyncpa [#allocation7], 1

</llo_original>
